<compile_context>
chip_gen: v5e
topology: v5e:2x2
jax: 0.10.0
libtpu: 0.0.40
codegen_flags: <defaults>
</compile_context>

<pallas_src>
import functools

import numpy as np

import jax
import jax.numpy as jnp
from jax import lax
from jax.experimental import pallas as pl
from jax.experimental.pallas import tpu as pltpu

VOCAB = " abcdefghijklmnopqrstuvwxyz,.'"
N_VOCAB = len(VOCAB)          # 30
VOCAB_PAD = 128               # lane-dense decode output width
OUT_C = 16
HIDDEN = 32
NUM_HEADS = 4
HEAD_DIM = HIDDEN // NUM_HEADS
FFN_DIM = 4 * HIDDEN
NUM_LAYERS = 8
DW_KERNEL = 17
FREQ = 80
LN_EPS = 1e-5
BN_EPS = 1e-5
NEG_BIG = -1e30

# Order of the stacked per-layer weight arrays passed to the fused kernel.
LAYER_KEYS = (
    "ffn1_lng", "ffn1_lnb", "ffn1_w1", "ffn1_b1", "ffn1_w2", "ffn1_b2",
    "attn_lng", "attn_lnb", "wqkv", "bqkv", "wo", "bo",
    "conv_lng", "conv_lnb", "pw1_w", "pw1_b", "dw_w", "dw_b", "pw2_w", "pw2_b",
    "ffn2_lng", "ffn2_lnb", "ffn2_w1", "ffn2_b1", "ffn2_w2", "ffn2_b2",
    "fin_lng", "fin_lnb",
)

_VMEM_SPEC = pl.BlockSpec(memory_space=pltpu.MemorySpace.VMEM)


# ----------------------------------------------------------------------------
# Frontend conv matmul kernel (im2col patches @ weights + bias, ReLU)
# ----------------------------------------------------------------------------
def _matmul_relu_kernel(x_ref, w_ref, b_ref, o_ref):
    y = jnp.dot(x_ref[...], w_ref[...], preferred_element_type=jnp.float32)
    o_ref[...] = jnp.maximum(y + b_ref[...], 0.0)


def pallas_matmul_relu(x, w, b):
    """relu(x @ w + b) as a single full-block Pallas call (no M padding)."""
    M = x.shape[0]
    N = w.shape[1]
    return pl.pallas_call(
        _matmul_relu_kernel,
        out_shape=jax.ShapeDtypeStruct((M, N), jnp.float32),
        in_specs=[_VMEM_SPEC, _VMEM_SPEC, _VMEM_SPEC],
        out_specs=_VMEM_SPEC,
    )(x, w, b.reshape(1, N))


# ----------------------------------------------------------------------------
# Fused kernel: input Linear -> 8 Conformer layers -> decode Linear + softmax
# ----------------------------------------------------------------------------
def _fused_stack_kernel(*refs, B, T):
    assert len(refs) == 7 + len(LAYER_KEYS) + 1
    (feat_ref, mask_ref, shift_ref, lin_w_ref, lin_b_ref,
     dec_w_ref, dec_b_ref) = refs[:7]
    o_ref = refs[-1]
    lw = dict(zip(LAYER_KEYS, refs[7:-1]))

    D, H, Dh, K = HIDDEN, NUM_HEADS, HEAD_DIM, DW_KERNEL
    BT = B * T
    scale = 1.0 / (Dh ** 0.5)
    mask = mask_ref[...]                                  # (BT, BT) additive

    def mm(a, b):
        return jnp.dot(a, b, preferred_element_type=jnp.float32)

    def layer_norm(v, g, b):
        mu = jnp.mean(v, axis=-1, keepdims=True)
        vc = v - mu
        var = jnp.mean(vc * vc, axis=-1, keepdims=True)
        return vc * lax.rsqrt(var + LN_EPS) * g + b

    def sigmoid(v):
        return 1.0 / (1.0 + jnp.exp(-v))

    def silu(v):
        return v * sigmoid(v)

    # input linear projection (Dropout(0.2) = identity at inference)
    x = mm(feat_ref[...], lin_w_ref[...]) + lin_b_ref[...]          # (BT, D)

    def ffn_half_step(v, lng, lnb, w1, b1, w2, b2):
        h = layer_norm(v, lng, lnb)
        h = silu(mm(h, w1) + b1)
        h = mm(h, w2) + b2
        return v + 0.5 * h

    def one_layer(l, v):
        g = lambda name: lw[name][l]                      # (L, ...) -> (...)

        # ---- FFN #1 (half-step residual) ----
        v = ffn_half_step(v, g("ffn1_lng"), g("ffn1_lnb"),
                          g("ffn1_w1"), g("ffn1_b1"),
                          g("ffn1_w2"), g("ffn1_b2"))

        # ---- Multi-head self-attention (fused QKV, per-head W_O block-sum) ----
        h = layer_norm(v, g("attn_lng"), g("attn_lnb"))
        qkv = mm(h, g("wqkv")) + g("bqkv")                # (BT, 3D)
        wo = g("wo")                                      # (D, D)
        attn = jnp.zeros((BT, D), jnp.float32)
        for hh in range(H):
            c = hh * Dh
            qh = qkv[:, c:c + Dh]
            kh = qkv[:, D + c:D + c + Dh]
            vh = qkv[:, 2 * D + c:2 * D + c + Dh]
            s = lax.dot_general(qh, kh, (((1,), (1,)), ((), ())),
                                preferred_element_type=jnp.float32) * scale
            s = s + mask                                  # batch + key padding
            s = s - jnp.max(s, axis=-1, keepdims=True)
            p = jnp.exp(s)
            p = p / jnp.sum(p, axis=-1, keepdims=True)
            attn = attn + mm(mm(p, vh), wo[c:c + Dh, :])
        v = v + attn + g("bo")

        # ---- Conv module: LN -> pointwise+GLU -> depthwise(+BN)+SiLU -> pointwise ----
        h = layer_norm(v, g("conv_lng"), g("conv_lnb"))
        h = mm(h, g("pw1_w")) + g("pw1_b")                # (BT, 2D)
        h = h[:, :D] * sigmoid(h[:, D:])                  # GLU
        dw = g("dw_w")                                    # (K, D), BN folded
        acc = jnp.zeros((BT, D), jnp.float32)
        for kk in range(K):                               # static taps
            acc = acc + mm(shift_ref[kk], h) * dw[kk:kk + 1, :]
        h = silu(acc + g("dw_b"))                         # folded BN -> SiLU
        h = mm(h, g("pw2_w")) + g("pw2_b")
        v = v + h

        # ---- FFN #2 (half-step residual) + final LayerNorm ----
        v = ffn_half_step(v, g("ffn2_lng"), g("ffn2_lnb"),
                          g("ffn2_w1"), g("ffn2_b1"),
                          g("ffn2_w2"), g("ffn2_b2"))
        return layer_norm(v, g("fin_lng"), g("fin_lnb"))

    x = lax.fori_loop(0, NUM_LAYERS, one_layer, x)

    # decode: Dropout(0.5)=identity; Linear padded to 128 lanes; softmax.
    logits = mm(x, dec_w_ref[...]) + dec_b_ref[...]       # pad cols bias -1e30
    logits = logits - jnp.max(logits, axis=-1, keepdims=True)
    e = jnp.exp(logits)
    o_ref[...] = e / jnp.sum(e, axis=-1, keepdims=True)


# ----------------------------------------------------------------------------
# Plain-JAX glue
# ----------------------------------------------------------------------------
def _im2col(x_nhwc, kh, kw, stride):
    B, H, W, C = x_nhwc.shape
    Ho = (H - kh) // stride + 1
    Wo = (W - kw) // stride + 1
    cols = []
    for i in range(kh):
        for j in range(kw):
            cols.append(x_nhwc[:, i:i + stride * (Ho - 1) + 1:stride,
                               j:j + stride * (Wo - 1) + 1:stride, :])
    patches = jnp.stack(cols, axis=3)          # (B, Ho, Wo, kh*kw, C)
    # patch row layout: flattened as (kh, kw, c_in); conv weights use the same.
    return patches.reshape(B, Ho, Wo, kh * kw * C), Ho, Wo


def _dwconv_shift_matrices(B, T, K):
    """K constant (B*T, B*T) matrices: row-shift with zero boundaries, per batch."""
    pad = (K - 1) // 2
    mats = np.zeros((K, B * T, B * T), dtype=np.float32)
    for kk in range(K):
        for b in range(B):
            for t in range(T):
                src = t + kk - pad
                if 0 <= src < T:
                    mats[kk, b * T + t, b * T + src] = 1.0
    return jnp.asarray(mats)


# ----------------------------------------------------------------------------
# Model forward
# ----------------------------------------------------------------------------
def recognizer_forward(params, x, lengths):
    # layout: x is NCHW (B, 1, T_in, 80), matching the PyTorch module.
    B = x.shape[0]
    x_nhwc = jnp.transpose(x, (0, 2, 3, 1))            # (B, T_in, 80, 1)

    # conv1 (3x3, stride 2) + ReLU  -- im2col glue + one Pallas matmul
    p1, T1, F1 = _im2col(x_nhwc, 3, 3, 2)
    h = pallas_matmul_relu(p1.reshape(B * T1 * F1, -1),
                           params["conv1_w"], params["conv1_b"])
    h = h.reshape(B, T1, F1, OUT_C)

    # conv2 (3x3, stride 2) + ReLU
    p2, T2, F2 = _im2col(h, 3, 3, 2)
    h = pallas_matmul_relu(p2.reshape(B * T2 * F2, -1),
                           params["conv2_w"], params["conv2_b"])
    h = h.reshape(B, T2, F2, OUT_C)

    # encode reshape: NCHW permute(0,2,1,3)+flatten == NHWC -> (B,T,C,F) -> (B,T,C*F)
    feat = jnp.transpose(h, (0, 1, 3, 2)).reshape(B * T2, OUT_C * F2)

    T = T2
    BT = B * T
    # Combined attention bias: block-diagonal across batches + key-padding mask.
    rows = jnp.arange(BT)
    bb = rows // T
    tt = rows % T
    same_batch = bb[:, None] == bb[None, :]
    key_ok = tt < lengths[bb]
    mask = jnp.where(same_batch & key_ok[None, :], 0.0, -1e9).astype(jnp.float32)

    shift = _dwconv_shift_matrices(B, T, DW_KERNEL)    # constant (K, BT, BT)

    st = params["stacked"]
    layer_args = [st[k] for k in LAYER_KEYS]
    n_in = 7 + len(layer_args)
    kernel = functools.partial(_fused_stack_kernel, B=B, T=T)
    probs_pad = pl.pallas_call(
        kernel,
        out_shape=jax.ShapeDtypeStruct((BT, VOCAB_PAD), jnp.float32),
        in_specs=[_VMEM_SPEC] * n_in,
        out_specs=_VMEM_SPEC,
    )(feat, mask, shift,
      params["linear_w"], params["linear_b"],
      params["decode_w"], params["decode_b"],
      *layer_args)

    probs = probs_pad[:, :N_VOCAB].reshape(B, T, N_VOCAB)
    return probs, lengths


# ----------------------------------------------------------------------------
# Deterministic parameter init (synthetic; shapes follow the PyTorch module)
# ----------------------------------------------------------------------------
def _dense(key, shape, scale=0.1):
    return scale * jax.random.normal(key, shape, dtype=jnp.float32)


def init_params(key):
    keys = iter(jax.random.split(key, 2048))
    nk = lambda: next(keys)
    D, F, C, K, L = HIDDEN, FFN_DIM, OUT_C, DW_KERNEL, NUM_LAYERS
    F2 = ((FREQ - 1) // 2 - 1) // 2                    # 19
    bn_scale = float(1.0 / np.sqrt(1.0 + BN_EPS))      # eval-mode BN folded in

    def stack(make):
        return jnp.stack([make() for _ in range(L)], axis=0)

    stacked = {
        "ffn1_lng": jnp.ones((L, 1, D), jnp.float32),
        "ffn1_lnb": jnp.zeros((L, 1, D), jnp.float32),
        "ffn1_w1": stack(lambda: _dense(nk(), (D, F))),
        "ffn1_b1": stack(lambda: _dense(nk(), (1, F))),
        "ffn1_w2": stack(lambda: _dense(nk(), (F, D))),
        "ffn1_b2": stack(lambda: _dense(nk(), (1, D))),
        "attn_lng": jnp.ones((L, 1, D), jnp.float32),
        "attn_lnb": jnp.zeros((L, 1, D), jnp.float32),
        "wqkv": stack(lambda: _dense(nk(), (D, 3 * D))),   # [Wq|Wk|Wv]
        "bqkv": stack(lambda: _dense(nk(), (1, 3 * D))),
        "wo": stack(lambda: _dense(nk(), (D, D))),
        "bo": stack(lambda: _dense(nk(), (1, D))),
        "conv_lng": jnp.ones((L, 1, D), jnp.float32),
        "conv_lnb": jnp.zeros((L, 1, D), jnp.float32),
        "pw1_w": stack(lambda: _dense(nk(), (D, 2 * D))),
        "pw1_b": stack(lambda: _dense(nk(), (1, 2 * D))),
        "dw_w": stack(lambda: _dense(nk(), (K, D))) * bn_scale,
        "dw_b": stack(lambda: _dense(nk(), (1, D))) * bn_scale,
        "pw2_w": stack(lambda: _dense(nk(), (D, D))),
        "pw2_b": stack(lambda: _dense(nk(), (1, D))),
        "ffn2_lng": jnp.ones((L, 1, D), jnp.float32),
        "ffn2_lnb": jnp.zeros((L, 1, D), jnp.float32),
        "ffn2_w1": stack(lambda: _dense(nk(), (D, F))),
        "ffn2_b1": stack(lambda: _dense(nk(), (1, F))),
        "ffn2_w2": stack(lambda: _dense(nk(), (F, D))),
        "ffn2_b2": stack(lambda: _dense(nk(), (1, D))),
        "fin_lng": jnp.ones((L, 1, D), jnp.float32),
        "fin_lnb": jnp.zeros((L, 1, D), jnp.float32),
    }

    # decode projection, padded to 128 output lanes (padded logits -> -1e30)
    dec_w = _dense(nk(), (D, N_VOCAB))
    dec_b = _dense(nk(), (N_VOCAB,))
    decode_w = jnp.zeros((D, VOCAB_PAD), jnp.float32).at[:, :N_VOCAB].set(dec_w)
    decode_b = jnp.full((1, VOCAB_PAD), NEG_BIG, jnp.float32).at[0, :N_VOCAB].set(dec_b)

    return {
        # conv weights stored as (kh*kw*c_in, c_out), rows ordered (kh, kw, c_in)
        "conv1_w": _dense(nk(), (9 * 1, C)), "conv1_b": _dense(nk(), (C,)),
        "conv2_w": _dense(nk(), (9 * C, C)), "conv2_b": _dense(nk(), (C,)),
        "linear_w": _dense(nk(), (C * F2, D)), "linear_b": _dense(nk(), (1, D)),
        "decode_w": decode_w, "decode_b": decode_b,
        "stacked": stacked,
    }


if __name__ == "__main__":
    key = jax.random.PRNGKey(0)
    k_x, k_p = jax.random.split(key)

    B = 2
    T_in = 33                              # -> conv time frames: 16 -> 7
    x = jax.random.normal(k_x, (B, 1, T_in, FREQ), dtype=jnp.float32)
    lengths = jnp.array([7, 5], dtype=jnp.int32)   # per-example valid frames

    params = init_params(k_p)
    fwd = jax.jit(recognizer_forward)
    probs, out_lengths = fwd(params, x, lengths)
    jax.block_until_ready((probs, out_lengths))

    assert probs.shape == (B, 7, N_VOCAB), probs.shape
    assert out_lengths.shape == (B,)
    assert bool(jnp.all(jnp.isfinite(probs)))
    assert bool(jnp.allclose(jnp.sum(probs, axis=-1), 1.0, atol=1e-4))
    print("KERNEL_OK")
</pallas_src>

<mosaic_0001>
module attributes {stable_mosaic.version = 11 : i64} {
  func.func @_matmul_relu_kernel(%arg0: memref<1248x9xf32, #tpu.memory_space<vmem>>, %arg1: memref<9x16xf32, #tpu.memory_space<vmem>>, %arg2: memref<1x16xf32, #tpu.memory_space<vmem>>, %arg3: memref<1248x16xf32, #tpu.memory_space<vmem>>) attributes {dimension_semantics = [], scalar_prefetch = 0 : i64, scratch_operands = 0 : i64, tpu.core_type = #tpu.core_type<tc>} {
    %c0 = arith.constant 0 : index
    %c0_0 = arith.constant 0 : index
    %0 = vector.load %arg0[%c0, %c0_0] : memref<1248x9xf32, #tpu.memory_space<vmem>>, vector<1248x9xf32>
    %c0_1 = arith.constant 0 : index
    %c0_2 = arith.constant 0 : index
    %1 = vector.load %arg1[%c0_1, %c0_2] : memref<9x16xf32, #tpu.memory_space<vmem>>, vector<9x16xf32>
    %cst = arith.constant dense<0.000000e+00> : vector<1248x16xf32>
    %2 = tpu.matmul %0, %1, %cst {dimension_numbers = #tpu.dot_dimension_numbers<[1], [0], [0], [1], [0, 0, 1, 1], [], []>} : vector<1248x9xf32>, vector<9x16xf32>, vector<1248x16xf32> -> vector<1248x16xf32>
    %c0_3 = arith.constant 0 : index
    %c0_4 = arith.constant 0 : index
    %3 = vector.load %arg2[%c0_3, %c0_4] : memref<1x16xf32, #tpu.memory_space<vmem>>, vector<1x16xf32>
    %4 = vector.broadcast %3 : vector<1x16xf32> to vector<1248x16xf32>
    %5 = arith.addf %2, %4 : vector<1248x16xf32>
    %cst_5 = arith.constant 0.000000e+00 : f32
    %6 = vector.broadcast %cst_5 : f32 to vector<1248x16xf32>
    %7 = arith.maximumf %5, %6 : vector<1248x16xf32>
    %c0_6 = arith.constant 0 : index
    %c0_7 = arith.constant 0 : index
    %8 = vector.load %arg3[%c0_6, %c0_7] : memref<1248x16xf32, #tpu.memory_space<vmem>>, vector<1248x16xf32>
    tpu.vector_store %arg3[%c0_6, %c0_7], %7 {strides = array<i32>} : memref<1248x16xf32, #tpu.memory_space<vmem>>, vector<1248x16xf32>,
    return
  }
}

module attributes {stable_mosaic.version = 11 : i64} {
  func.func @_matmul_relu_kernel(%arg0: memref<266x144xf32, #tpu.memory_space<vmem>>, %arg1: memref<144x16xf32, #tpu.memory_space<vmem>>, %arg2: memref<1x16xf32, #tpu.memory_space<vmem>>, %arg3: memref<266x16xf32, #tpu.memory_space<vmem>>) attributes {dimension_semantics = [], scalar_prefetch = 0 : i64, scratch_operands = 0 : i64, tpu.core_type = #tpu.core_type<tc>} {
    %c0 = arith.constant 0 : index
    %c0_0 = arith.constant 0 : index
    %0 = vector.load %arg0[%c0, %c0_0] : memref<266x144xf32, #tpu.memory_space<vmem>>, vector<266x144xf32>
    %c0_1 = arith.constant 0 : index
    %c0_2 = arith.constant 0 : index
    %1 = vector.load %arg1[%c0_1, %c0_2] : memref<144x16xf32, #tpu.memory_space<vmem>>, vector<144x16xf32>
    %cst = arith.constant dense<0.000000e+00> : vector<266x16xf32>
    %2 = tpu.matmul %0, %1, %cst {dimension_numbers = #tpu.dot_dimension_numbers<[1], [0], [0], [1], [0, 0, 1, 1], [], []>} : vector<266x144xf32>, vector<144x16xf32>, vector<266x16xf32> -> vector<266x16xf32>
    %c0_3 = arith.constant 0 : index
    %c0_4 = arith.constant 0 : index
    %3 = vector.load %arg2[%c0_3, %c0_4] : memref<1x16xf32, #tpu.memory_space<vmem>>, vector<1x16xf32>
    %4 = vector.broadcast %3 : vector<1x16xf32> to vector<266x16xf32>
    %5 = arith.addf %2, %4 : vector<266x16xf32>
    %cst_5 = arith.constant 0.000000e+00 : f32
    %6 = vector.broadcast %cst_5 : f32 to vector<266x16xf32>
    %7 = arith.maximumf %5, %6 : vector<266x16xf32>
    %c0_6 = arith.constant 0 : index
    %c0_7 = arith.constant 0 : index
    %8 = vector.load %arg3[%c0_6, %c0_7] : memref<266x16xf32, #tpu.memory_space<vmem>>, vector<266x16xf32>
    tpu.vector_store %arg3[%c0_6, %c0_7], %7 {strides = array<i32>} : memref<266x16xf32, #tpu.memory_space<vmem>>, vector<266x16xf32>,
    return
  }
}

module attributes {stable_mosaic.version = 11 : i64} {
  func.func @_fused_stack_kernel(%arg0: memref<14x304xf32, #tpu.memory_space<vmem>>, %arg1: memref<14x14xf32, #tpu.memory_space<vmem>>, %arg2: memref<17x14x14xf32, #tpu.memory_space<vmem>>, %arg3: memref<304x32xf32, #tpu.memory_space<vmem>>, %arg4: memref<1x32xf32, #tpu.memory_space<vmem>>, %arg5: memref<32x128xf32, #tpu.memory_space<vmem>>, %arg6: memref<1x128xf32, #tpu.memory_space<vmem>>, %arg7: memref<8x1x32xf32, #tpu.memory_space<vmem>>, %arg8: memref<8x1x32xf32, #tpu.memory_space<vmem>>, %arg9: memref<8x32x128xf32, #tpu.memory_space<vmem>>, %arg10: memref<8x1x128xf32, #tpu.memory_space<vmem>>, %arg11: memref<8x128x32xf32, #tpu.memory_space<vmem>>, %arg12: memref<8x1x32xf32, #tpu.memory_space<vmem>>, %arg13: memref<8x1x32xf32, #tpu.memory_space<vmem>>, %arg14: memref<8x1x32xf32, #tpu.memory_space<vmem>>, %arg15: memref<8x32x96xf32, #tpu.memory_space<vmem>>, %arg16: memref<8x1x96xf32, #tpu.memory_space<vmem>>, %arg17: memref<8x32x32xf32, #tpu.memory_space<vmem>>, %arg18: memref<8x1x32xf32, #tpu.memory_space<vmem>>, %arg19: memref<8x1x32xf32, #tpu.memory_space<vmem>>, %arg20: memref<8x1x32xf32, #tpu.memory_space<vmem>>, %arg21: memref<8x32x64xf32, #tpu.memory_space<vmem>>, %arg22: memref<8x1x64xf32, #tpu.memory_space<vmem>>, %arg23: memref<8x17x32xf32, #tpu.memory_space<vmem>>, %arg24: memref<8x1x32xf32, #tpu.memory_space<vmem>>, %arg25: memref<8x32x32xf32, #tpu.memory_space<vmem>>, %arg26: memref<8x1x32xf32, #tpu.memory_space<vmem>>, %arg27: memref<8x1x32xf32, #tpu.memory_space<vmem>>, %arg28: memref<8x1x32xf32, #tpu.memory_space<vmem>>, %arg29: memref<8x32x128xf32, #tpu.memory_space<vmem>>, %arg30: memref<8x1x128xf32, #tpu.memory_space<vmem>>, %arg31: memref<8x128x32xf32, #tpu.memory_space<vmem>>, %arg32: memref<8x1x32xf32, #tpu.memory_space<vmem>>, %arg33: memref<8x1x32xf32, #tpu.memory_space<vmem>>, %arg34: memref<8x1x32xf32, #tpu.memory_space<vmem>>, %arg35: memref<14x128xf32, #tpu.memory_space<vmem>>) attributes {dimension_semantics = [], scalar_prefetch = 0 : i64, scratch_operands = 0 : i64, tpu.core_type = #tpu.core_type<tc>} {
    %c0 = arith.constant 0 : index
    %c0_0 = arith.constant 0 : index
    %0 = vector.load %arg1[%c0, %c0_0] : memref<14x14xf32, #tpu.memory_space<vmem>>, vector<14x14xf32>
    %c0_1 = arith.constant 0 : index
    %c0_2 = arith.constant 0 : index
    %1 = vector.load %arg0[%c0_1, %c0_2] : memref<14x304xf32, #tpu.memory_space<vmem>>, vector<14x304xf32>
    %c0_3 = arith.constant 0 : index
    %c0_4 = arith.constant 0 : index
    %2 = vector.load %arg3[%c0_3, %c0_4] : memref<304x32xf32, #tpu.memory_space<vmem>>, vector<304x32xf32>
    %cst = arith.constant dense<0.000000e+00> : vector<14x32xf32>
    %3 = tpu.matmul %1, %2, %cst {dimension_numbers = #tpu.dot_dimension_numbers<[1], [0], [0], [1], [0, 0, 1, 1], [], []>} : vector<14x304xf32>, vector<304x32xf32>, vector<14x32xf32> -> vector<14x32xf32>
    %c0_5 = arith.constant 0 : index
    %c0_6 = arith.constant 0 : index
    %4 = vector.load %arg4[%c0_5, %c0_6] : memref<1x32xf32, #tpu.memory_space<vmem>>, vector<1x32xf32>
    %5 = vector.broadcast %4 : vector<1x32xf32> to vector<14x32xf32>
    %6 = arith.addf %3, %5 : vector<14x32xf32>
    %c0_i32 = arith.constant 0 : i32
    %c8_i32 = arith.constant 8 : i32
    %7 = arith.addi %c0_i32, %c8_i32 : i32
    %c1_i32 = arith.constant 1 : i32
    %8 = scf.for %arg36 = %c0_i32 to %7 step %c1_i32 iter_args(%arg37 = %6) -> (vector<14x32xf32>)  : i32 {
      %24 = arith.index_cast %arg36 : i32 to index
      %c0_17 = arith.constant 0 : index
      %c0_18 = arith.constant 0 : index
      %25 = vector.load %arg7[%24, %c0_17, %c0_18] : memref<8x1x32xf32, #tpu.memory_space<vmem>>, vector<1x1x32xf32>
      %26 = vector.shape_cast %25 : vector<1x1x32xf32> to vector<1x32xf32>
      %27 = arith.index_cast %arg36 : i32 to index
      %c0_19 = arith.constant 0 : index
      %c0_20 = arith.constant 0 : index
      %28 = vector.load %arg8[%27, %c0_19, %c0_20] : memref<8x1x32xf32, #tpu.memory_space<vmem>>, vector<1x1x32xf32>
      %29 = vector.shape_cast %28 : vector<1x1x32xf32> to vector<1x32xf32>
      %30 = arith.index_cast %arg36 : i32 to index
      %c0_21 = arith.constant 0 : index
      %c0_22 = arith.constant 0 : index
      %31 = vector.load %arg9[%30, %c0_21, %c0_22] : memref<8x32x128xf32, #tpu.memory_space<vmem>>, vector<1x32x128xf32>
      %32 = vector.shape_cast %31 : vector<1x32x128xf32> to vector<32x128xf32>
      %33 = arith.index_cast %arg36 : i32 to index
      %c0_23 = arith.constant 0 : index
      %c0_24 = arith.constant 0 : index
      %34 = vector.load %arg10[%33, %c0_23, %c0_24] : memref<8x1x128xf32, #tpu.memory_space<vmem>>, vector<1x1x128xf32>
      %35 = vector.shape_cast %34 : vector<1x1x128xf32> to vector<1x128xf32>
      %36 = arith.index_cast %arg36 : i32 to index
      %c0_25 = arith.constant 0 : index
      %c0_26 = arith.constant 0 : index
      %37 = vector.load %arg11[%36, %c0_25, %c0_26] : memref<8x128x32xf32, #tpu.memory_space<vmem>>, vector<1x128x32xf32>
      %38 = vector.shape_cast %37 : vector<1x128x32xf32> to vector<128x32xf32>
      %39 = arith.index_cast %arg36 : i32 to index
      %c0_27 = arith.constant 0 : index
      %c0_28 = arith.constant 0 : index
      %40 = vector.load %arg12[%39, %c0_27, %c0_28] : memref<8x1x32xf32, #tpu.memory_space<vmem>>, vector<1x1x32xf32>
      %41 = vector.shape_cast %40 : vector<1x1x32xf32> to vector<1x32xf32>
      %cst_29 = arith.constant dense<0.000000e+00> : vector<14xf32>
      %42 = vector.multi_reduction <add>, %arg37, %cst_29 [1] : vector<14x32xf32> to vector<14xf32>
      %43 = vector.shape_cast %42 : vector<14xf32> to vector<14x1xf32>
      %cst_30 = arith.constant 3.200000e+01 : f32
      %44 = vector.broadcast %cst_30 : f32 to vector<14x1xf32>
      %45 = arith.divf %43, %44 : vector<14x1xf32>
      %46 = vector.broadcast %45 : vector<14x1xf32> to vector<14x32xf32>
      %47 = arith.subf %arg37, %46 : vector<14x32xf32>
      %48 = arith.mulf %47, %47 : vector<14x32xf32>
      %cst_31 = arith.constant dense<0.000000e+00> : vector<14xf32>
      %49 = vector.multi_reduction <add>, %48, %cst_31 [1] : vector<14x32xf32> to vector<14xf32>
      %50 = vector.shape_cast %49 : vector<14xf32> to vector<14x1xf32>
      %cst_32 = arith.constant 3.200000e+01 : f32
      %51 = vector.broadcast %cst_32 : f32 to vector<14x1xf32>
      %52 = arith.divf %50, %51 : vector<14x1xf32>
      %cst_33 = arith.constant 9.99999974E-6 : f32
      %53 = vector.broadcast %cst_33 : f32 to vector<14x1xf32>
      %54 = arith.addf %52, %53 : vector<14x1xf32>
      %55 = math.rsqrt %54 : vector<14x1xf32>
      %56 = vector.broadcast %55 : vector<14x1xf32> to vector<14x32xf32>
      %57 = arith.mulf %47, %56 : vector<14x32xf32>
      %58 = vector.broadcast %26 : vector<1x32xf32> to vector<14x32xf32>
      %59 = arith.mulf %57, %58 : vector<14x32xf32>
      %60 = vector.broadcast %29 : vector<1x32xf32> to vector<14x32xf32>
      %61 = arith.addf %59, %60 : vector<14x32xf32>
      %cst_34 = arith.constant dense<0.000000e+00> : vector<14x128xf32>
      %62 = tpu.matmul %61, %32, %cst_34 {dimension_numbers = #tpu.dot_dimension_numbers<[1], [0], [0], [1], [0, 0, 1, 1], [], []>} : vector<14x32xf32>, vector<32x128xf32>, vector<14x128xf32> -> vector<14x128xf32>
      %63 = vector.broadcast %35 : vector<1x128xf32> to vector<14x128xf32>
      %64 = arith.addf %62, %63 : vector<14x128xf32>
      %cst_35 = arith.constant 0.000000e+00 : f32
      %65 = vector.broadcast %cst_35 : f32 to vector<14x128xf32>
      %66 = arith.subf %65, %64 : vector<14x128xf32>
      %67 = math.exp %66 : vector<14x128xf32>
      %cst_36 = arith.constant 1.000000e+00 : f32
      %68 = vector.broadcast %cst_36 : f32 to vector<14x128xf32>
      %69 = arith.addf %68, %67 : vector<14x128xf32>
      %cst_37 = arith.constant 1.000000e+00 : f32
      %70 = vector.broadcast %cst_37 : f32 to vector<14x128xf32>
      %71 = arith.divf %70, %69 : vector<14x128xf32>
      %72 = arith.mulf %64, %71 : vector<14x128xf32>
      %cst_38 = arith.constant dense<0.000000e+00> : vector<14x32xf32>
      %73 = tpu.matmul %72, %38, %cst_38 {dimension_numbers = #tpu.dot_dimension_numbers<[1], [0], [0], [1], [0, 0, 1, 1], [], []>} : vector<14x128xf32>, vector<128x32xf32>, vector<14x32xf32> -> vector<14x32xf32>
      %74 = vector.broadcast %41 : vector<1x32xf32> to vector<14x32xf32>
      %75 = arith.addf %73, %74 : vector<14x32xf32>
      %cst_39 = arith.constant 5.000000e-01 : f32
      %76 = vector.broadcast %cst_39 : f32 to vector<14x32xf32>
      %77 = arith.mulf %76, %75 : vector<14x32xf32>
      %78 = arith.addf %arg37, %77 : vector<14x32xf32>
      %79 = arith.index_cast %arg36 : i32 to index
      %c0_40 = arith.constant 0 : index
      %c0_41 = arith.constant 0 : index
      %80 = vector.load %arg13[%79, %c0_40, %c0_41] : memref<8x1x32xf32, #tpu.memory_space<vmem>>, vector<1x1x32xf32>
      %81 = vector.shape_cast %80 : vector<1x1x32xf32> to vector<1x32xf32>
      %82 = arith.index_cast %arg36 : i32 to index
      %c0_42 = arith.constant 0 : index
      %c0_43 = arith.constant 0 : index
      %83 = vector.load %arg14[%82, %c0_42, %c0_43] : memref<8x1x32xf32, #tpu.memory_space<vmem>>, vector<1x1x32xf32>
      %84 = vector.shape_cast %83 : vector<1x1x32xf32> to vector<1x32xf32>
      %cst_44 = arith.constant dense<0.000000e+00> : vector<14xf32>
      %85 = vector.multi_reduction <add>, %78, %cst_44 [1] : vector<14x32xf32> to vector<14xf32>
      %86 = vector.shape_cast %85 : vector<14xf32> to vector<14x1xf32>
      %cst_45 = arith.constant 3.200000e+01 : f32
      %87 = vector.broadcast %cst_45 : f32 to vector<14x1xf32>
      %88 = arith.divf %86, %87 : vector<14x1xf32>
      %89 = vector.broadcast %88 : vector<14x1xf32> to vector<14x32xf32>
      %90 = arith.subf %78, %89 : vector<14x32xf32>
      %91 = arith.mulf %90, %90 : vector<14x32xf32>
      %cst_46 = arith.constant dense<0.000000e+00> : vector<14xf32>
      %92 = vector.multi_reduction <add>, %91, %cst_46 [1] : vector<14x32xf32> to vector<14xf32>
      %93 = vector.shape_cast %92 : vector<14xf32> to vector<14x1xf32>
      %cst_47 = arith.constant 3.200000e+01 : f32
      %94 = vector.broadcast %cst_47 : f32 to vector<14x1xf32>
      %95 = arith.divf %93, %94 : vector<14x1xf32>
      %cst_48 = arith.constant 9.99999974E-6 : f32
      %96 = vector.broadcast %cst_48 : f32 to vector<14x1xf32>
      %97 = arith.addf %95, %96 : vector<14x1xf32>
      %98 = math.rsqrt %97 : vector<14x1xf32>
      %99 = vector.broadcast %98 : vector<14x1xf32> to vector<14x32xf32>
      %100 = arith.mulf %90, %99 : vector<14x32xf32>
      %101 = vector.broadcast %81 : vector<1x32xf32> to vector<14x32xf32>
      %102 = arith.mulf %100, %101 : vector<14x32xf32>
      %103 = vector.broadcast %84 : vector<1x32xf32> to vector<14x32xf32>
      %104 = arith.addf %102, %103 : vector<14x32xf32>
      %105 = arith.index_cast %arg36 : i32 to index
      %c0_49 = arith.constant 0 : index
      %c0_50 = arith.constant 0 : index
      %106 = vector.load %arg15[%105, %c0_49, %c0_50] : memref<8x32x96xf32, #tpu.memory_space<vmem>>, vector<1x32x96xf32>
      %107 = vector.shape_cast %106 : vector<1x32x96xf32> to vector<32x96xf32>
      %cst_51 = arith.constant dense<0.000000e+00> : vector<14x96xf32>
      %108 = tpu.matmul %104, %107, %cst_51 {dimension_numbers = #tpu.dot_dimension_numbers<[1], [0], [0], [1], [0, 0, 1, 1], [], []>} : vector<14x32xf32>, vector<32x96xf32>, vector<14x96xf32> -> vector<14x96xf32>
      %109 = arith.index_cast %arg36 : i32 to index
      %c0_52 = arith.constant 0 : index
      %c0_53 = arith.constant 0 : index
      %110 = vector.load %arg16[%109, %c0_52, %c0_53] : memref<8x1x96xf32, #tpu.memory_space<vmem>>, vector<1x1x96xf32>
      %111 = vector.shape_cast %110 : vector<1x1x96xf32> to vector<1x96xf32>
      %112 = vector.broadcast %111 : vector<1x96xf32> to vector<14x96xf32>
      %113 = arith.addf %108, %112 : vector<14x96xf32>
      %114 = arith.index_cast %arg36 : i32 to index
      %c0_54 = arith.constant 0 : index
      %c0_55 = arith.constant 0 : index
      %115 = vector.load %arg17[%114, %c0_54, %c0_55] : memref<8x32x32xf32, #tpu.memory_space<vmem>>, vector<1x32x32xf32>
      %116 = vector.shape_cast %115 : vector<1x32x32xf32> to vector<32x32xf32>
      %cst_56 = arith.constant 0.000000e+00 : f32
      %117 = vector.broadcast %cst_56 : f32 to vector<14x32xf32>
      %118 = vector.extract_strided_slice %113 {offsets = [0, 0], sizes = [14, 8], strides = [1, 1]} : vector<14x96xf32> to vector<14x8xf32>
      %119 = vector.extract_strided_slice %113 {offsets = [0, 32], sizes = [14, 8], strides = [1, 1]} : vector<14x96xf32> to vector<14x8xf32>
      %120 = vector.extract_strided_slice %113 {offsets = [0, 64], sizes = [14, 8], strides = [1, 1]} : vector<14x96xf32> to vector<14x8xf32>
      %cst_57 = arith.constant dense<0.000000e+00> : vector<14x14xf32>
      %121 = tpu.matmul %118, %119, %cst_57 {dimension_numbers = #tpu.dot_dimension_numbers<[1], [1], [0], [0], [0, 0, 1, 0], [], []>} : vector<14x8xf32>, vector<14x8xf32>, vector<14x14xf32> -> vector<14x14xf32>
      %cst_58 = arith.constant 0.353553385 : f32
      %122 = vector.broadcast %cst_58 : f32 to vector<14x14xf32>
      %123 = arith.mulf %121, %122 : vector<14x14xf32>
      %124 = arith.addf %123, %0 : vector<14x14xf32>
      %cst_59 = arith.constant dense<0xFF800000> : vector<14xf32>
      %125 = vector.multi_reduction <maximumf>, %124, %cst_59 [1] : vector<14x14xf32> to vector<14xf32>
      %126 = vector.shape_cast %125 : vector<14xf32> to vector<14x1xf32>
      %127 = vector.broadcast %126 : vector<14x1xf32> to vector<14x14xf32>
      %128 = arith.subf %124, %127 : vector<14x14xf32>
      %129 = math.exp %128 : vector<14x14xf32>
      %cst_60 = arith.constant dense<0.000000e+00> : vector<14xf32>
      %130 = vector.multi_reduction <add>, %129, %cst_60 [1] : vector<14x14xf32> to vector<14xf32>
      %131 = vector.shape_cast %130 : vector<14xf32> to vector<14x1xf32>
      %132 = vector.broadcast %131 : vector<14x1xf32> to vector<14x14xf32>
      %133 = arith.divf %129, %132 : vector<14x14xf32>
      %cst_61 = arith.constant dense<0.000000e+00> : vector<14x8xf32>
      %134 = tpu.matmul %133, %120, %cst_61 {dimension_numbers = #tpu.dot_dimension_numbers<[1], [0], [0], [1], [0, 0, 1, 1], [], []>} : vector<14x14xf32>, vector<14x8xf32>, vector<14x8xf32> -> vector<14x8xf32>
      %135 = vector.extract_strided_slice %116 {offsets = [0, 0], sizes = [8, 32], strides = [1, 1]} : vector<32x32xf32> to vector<8x32xf32>
      %cst_62 = arith.constant dense<0.000000e+00> : vector<14x32xf32>
      %136 = tpu.matmul %134, %135, %cst_62 {dimension_numbers = #tpu.dot_dimension_numbers<[1], [0], [0], [1], [0, 0, 1, 1], [], []>} : vector<14x8xf32>, vector<8x32xf32>, vector<14x32xf32> -> vector<14x32xf32>
      %137 = arith.addf %117, %136 : vector<14x32xf32>
      %138 = vector.extract_strided_slice %113 {offsets = [0, 8], sizes = [14, 8], strides = [1, 1]} : vector<14x96xf32> to vector<14x8xf32>
      %139 = vector.extract_strided_slice %113 {offsets = [0, 40], sizes = [14, 8], strides = [1, 1]} : vector<14x96xf32> to vector<14x8xf32>
      %140 = vector.extract_strided_slice %113 {offsets = [0, 72], sizes = [14, 8], strides = [1, 1]} : vector<14x96xf32> to vector<14x8xf32>
      %cst_63 = arith.constant dense<0.000000e+00> : vector<14x14xf32>
      %141 = tpu.matmul %138, %139, %cst_63 {dimension_numbers = #tpu.dot_dimension_numbers<[1], [1], [0], [0], [0, 0, 1, 0], [], []>} : vector<14x8xf32>, vector<14x8xf32>, vector<14x14xf32> -> vector<14x14xf32>
      %cst_64 = arith.constant 0.353553385 : f32
      %142 = vector.broadcast %cst_64 : f32 to vector<14x14xf32>
      %143 = arith.mulf %141, %142 : vector<14x14xf32>
      %144 = arith.addf %143, %0 : vector<14x14xf32>
      %cst_65 = arith.constant dense<0xFF800000> : vector<14xf32>
      %145 = vector.multi_reduction <maximumf>, %144, %cst_65 [1] : vector<14x14xf32> to vector<14xf32>
      %146 = vector.shape_cast %145 : vector<14xf32> to vector<14x1xf32>
      %147 = vector.broadcast %146 : vector<14x1xf32> to vector<14x14xf32>
      %148 = arith.subf %144, %147 : vector<14x14xf32>
      %149 = math.exp %148 : vector<14x14xf32>
      %cst_66 = arith.constant dense<0.000000e+00> : vector<14xf32>
      %150 = vector.multi_reduction <add>, %149, %cst_66 [1] : vector<14x14xf32> to vector<14xf32>
      %151 = vector.shape_cast %150 : vector<14xf32> to vector<14x1xf32>
      %152 = vector.broadcast %151 : vector<14x1xf32> to vector<14x14xf32>
      %153 = arith.divf %149, %152 : vector<14x14xf32>
      %cst_67 = arith.constant dense<0.000000e+00> : vector<14x8xf32>
      %154 = tpu.matmul %153, %140, %cst_67 {dimension_numbers = #tpu.dot_dimension_numbers<[1], [0], [0], [1], [0, 0, 1, 1], [], []>} : vector<14x14xf32>, vector<14x8xf32>, vector<14x8xf32> -> vector<14x8xf32>
      %155 = vector.extract_strided_slice %116 {offsets = [8, 0], sizes = [8, 32], strides = [1, 1]} : vector<32x32xf32> to vector<8x32xf32>
      %cst_68 = arith.constant dense<0.000000e+00> : vector<14x32xf32>
      %156 = tpu.matmul %154, %155, %cst_68 {dimension_numbers = #tpu.dot_dimension_numbers<[1], [0], [0], [1], [0, 0, 1, 1], [], []>} : vector<14x8xf32>, vector<8x32xf32>, vector<14x32xf32> -> vector<14x32xf32>
      %157 = arith.addf %137, %156 : vector<14x32xf32>
      %158 = vector.extract_strided_slice %113 {offsets = [0, 16], sizes = [14, 8], strides = [1, 1]} : vector<14x96xf32> to vector<14x8xf32>
      %159 = vector.extract_strided_slice %113 {offsets = [0, 48], sizes = [14, 8], strides = [1, 1]} : vector<14x96xf32> to vector<14x8xf32>
      %160 = vector.extract_strided_slice %113 {offsets = [0, 80], sizes = [14, 8], strides = [1, 1]} : vector<14x96xf32> to vector<14x8xf32>
      %cst_69 = arith.constant dense<0.000000e+00> : vector<14x14xf32>
      %161 = tpu.matmul %158, %159, %cst_69 {dimension_numbers = #tpu.dot_dimension_numbers<[1], [1], [0], [0], [0, 0, 1, 0], [], []>} : vector<14x8xf32>, vector<14x8xf32>, vector<14x14xf32> -> vector<14x14xf32>
      %cst_70 = arith.constant 0.353553385 : f32
      %162 = vector.broadcast %cst_70 : f32 to vector<14x14xf32>
      %163 = arith.mulf %161, %162 : vector<14x14xf32>
      %164 = arith.addf %163, %0 : vector<14x14xf32>
      %cst_71 = arith.constant dense<0xFF800000> : vector<14xf32>
      %165 = vector.multi_reduction <maximumf>, %164, %cst_71 [1] : vector<14x14xf32> to vector<14xf32>
      %166 = vector.shape_cast %165 : vector<14xf32> to vector<14x1xf32>
      %167 = vector.broadcast %166 : vector<14x1xf32> to vector<14x14xf32>
      %168 = arith.subf %164, %167 : vector<14x14xf32>
      %169 = math.exp %168 : vector<14x14xf32>
      %cst_72 = arith.constant dense<0.000000e+00> : vector<14xf32>
      %170 = vector.multi_reduction <add>, %169, %cst_72 [1] : vector<14x14xf32> to vector<14xf32>
      %171 = vector.shape_cast %170 : vector<14xf32> to vector<14x1xf32>
      %172 = vector.broadcast %171 : vector<14x1xf32> to vector<14x14xf32>
      %173 = arith.divf %169, %172 : vector<14x14xf32>
      %cst_73 = arith.constant dense<0.000000e+00> : vector<14x8xf32>
      %174 = tpu.matmul %173, %160, %cst_73 {dimension_numbers = #tpu.dot_dimension_numbers<[1], [0], [0], [1], [0, 0, 1, 1], [], []>} : vector<14x14xf32>, vector<14x8xf32>, vector<14x8xf32> -> vector<14x8xf32>
      %175 = vector.extract_strided_slice %116 {offsets = [16, 0], sizes = [8, 32], strides = [1, 1]} : vector<32x32xf32> to vector<8x32xf32>
      %cst_74 = arith.constant dense<0.000000e+00> : vector<14x32xf32>
      %176 = tpu.matmul %174, %175, %cst_74 {dimension_numbers = #tpu.dot_dimension_numbers<[1], [0], [0], [1], [0, 0, 1, 1], [], []>} : vector<14x8xf32>, vector<8x32xf32>, vector<14x32xf32> -> vector<14x32xf32>
      %177 = arith.addf %157, %176 : vector<14x32xf32>
      %178 = vector.extract_strided_slice %113 {offsets = [0, 24], sizes = [14, 8], strides = [1, 1]} : vector<14x96xf32> to vector<14x8xf32>
      %179 = vector.extract_strided_slice %113 {offsets = [0, 56], sizes = [14, 8], strides = [1, 1]} : vector<14x96xf32> to vector<14x8xf32>
      %180 = vector.extract_strided_slice %113 {offsets = [0, 88], sizes = [14, 8], strides = [1, 1]} : vector<14x96xf32> to vector<14x8xf32>
      %cst_75 = arith.constant dense<0.000000e+00> : vector<14x14xf32>
      %181 = tpu.matmul %178, %179, %cst_75 {dimension_numbers = #tpu.dot_dimension_numbers<[1], [1], [0], [0], [0, 0, 1, 0], [], []>} : vector<14x8xf32>, vector<14x8xf32>, vector<14x14xf32> -> vector<14x14xf32>
      %cst_76 = arith.constant 0.353553385 : f32
      %182 = vector.broadcast %cst_76 : f32 to vector<14x14xf32>
      %183 = arith.mulf %181, %182 : vector<14x14xf32>
      %184 = arith.addf %183, %0 : vector<14x14xf32>
      %cst_77 = arith.constant dense<0xFF800000> : vector<14xf32>
      %185 = vector.multi_reduction <maximumf>, %184, %cst_77 [1] : vector<14x14xf32> to vector<14xf32>
      %186 = vector.shape_cast %185 : vector<14xf32> to vector<14x1xf32>
      %187 = vector.broadcast %186 : vector<14x1xf32> to vector<14x14xf32>
      %188 = arith.subf %184, %187 : vector<14x14xf32>
      %189 = math.exp %188 : vector<14x14xf32>
      %cst_78 = arith.constant dense<0.000000e+00> : vector<14xf32>
      %190 = vector.multi_reduction <add>, %189, %cst_78 [1] : vector<14x14xf32> to vector<14xf32>
      %191 = vector.shape_cast %190 : vector<14xf32> to vector<14x1xf32>
      %192 = vector.broadcast %191 : vector<14x1xf32> to vector<14x14xf32>
      %193 = arith.divf %189, %192 : vector<14x14xf32>
      %cst_79 = arith.constant dense<0.000000e+00> : vector<14x8xf32>
      %194 = tpu.matmul %193, %180, %cst_79 {dimension_numbers = #tpu.dot_dimension_numbers<[1], [0], [0], [1], [0, 0, 1, 1], [], []>} : vector<14x14xf32>, vector<14x8xf32>, vector<14x8xf32> -> vector<14x8xf32>
      %195 = vector.extract_strided_slice %116 {offsets = [24, 0], sizes = [8, 32], strides = [1, 1]} : vector<32x32xf32> to vector<8x32xf32>
      %cst_80 = arith.constant dense<0.000000e+00> : vector<14x32xf32>
      %196 = tpu.matmul %194, %195, %cst_80 {dimension_numbers = #tpu.dot_dimension_numbers<[1], [0], [0], [1], [0, 0, 1, 1], [], []>} : vector<14x8xf32>, vector<8x32xf32>, vector<14x32xf32> -> vector<14x32xf32>
      %197 = arith.addf %177, %196 : vector<14x32xf32>
      %198 = arith.addf %78, %197 : vector<14x32xf32>
      %199 = arith.index_cast %arg36 : i32 to index
      %c0_81 = arith.constant 0 : index
      %c0_82 = arith.constant 0 : index
      %200 = vector.load %arg18[%199, %c0_81, %c0_82] : memref<8x1x32xf32, #tpu.memory_space<vmem>>, vector<1x1x32xf32>
      %201 = vector.shape_cast %200 : vector<1x1x32xf32> to vector<1x32xf32>
      %202 = vector.broadcast %201 : vector<1x32xf32> to vector<14x32xf32>
      %203 = arith.addf %198, %202 : vector<14x32xf32>
      %204 = arith.index_cast %arg36 : i32 to index
      %c0_83 = arith.constant 0 : index
      %c0_84 = arith.constant 0 : index
      %205 = vector.load %arg19[%204, %c0_83, %c0_84] : memref<8x1x32xf32, #tpu.memory_space<vmem>>, vector<1x1x32xf32>
      %206 = vector.shape_cast %205 : vector<1x1x32xf32> to vector<1x32xf32>
      %207 = arith.index_cast %arg36 : i32 to index
      %c0_85 = arith.constant 0 : index
      %c0_86 = arith.constant 0 : index
      %208 = vector.load %arg20[%207, %c0_85, %c0_86] : memref<8x1x32xf32, #tpu.memory_space<vmem>>, vector<1x1x32xf32>
      %209 = vector.shape_cast %208 : vector<1x1x32xf32> to vector<1x32xf32>
      %cst_87 = arith.constant dense<0.000000e+00> : vector<14xf32>
      %210 = vector.multi_reduction <add>, %203, %cst_87 [1] : vector<14x32xf32> to vector<14xf32>
      %211 = vector.shape_cast %210 : vector<14xf32> to vector<14x1xf32>
      %cst_88 = arith.constant 3.200000e+01 : f32
      %212 = vector.broadcast %cst_88 : f32 to vector<14x1xf32>
      %213 = arith.divf %211, %212 : vector<14x1xf32>
      %214 = vector.broadcast %213 : vector<14x1xf32> to vector<14x32xf32>
      %215 = arith.subf %203, %214 : vector<14x32xf32>
      %216 = arith.mulf %215, %215 : vector<14x32xf32>
      %cst_89 = arith.constant dense<0.000000e+00> : vector<14xf32>
      %217 = vector.multi_reduction <add>, %216, %cst_89 [1] : vector<14x32xf32> to vector<14xf32>
      %218 = vector.shape_cast %217 : vector<14xf32> to vector<14x1xf32>
      %cst_90 = arith.constant 3.200000e+01 : f32
      %219 = vector.broadcast %cst_90 : f32 to vector<14x1xf32>
      %220 = arith.divf %218, %219 : vector<14x1xf32>
      %cst_91 = arith.constant 9.99999974E-6 : f32
      %221 = vector.broadcast %cst_91 : f32 to vector<14x1xf32>
      %222 = arith.addf %220, %221 : vector<14x1xf32>
      %223 = math.rsqrt %222 : vector<14x1xf32>
      %224 = vector.broadcast %223 : vector<14x1xf32> to vector<14x32xf32>
      %225 = arith.mulf %215, %224 : vector<14x32xf32>
      %226 = vector.broadcast %206 : vector<1x32xf32> to vector<14x32xf32>
      %227 = arith.mulf %225, %226 : vector<14x32xf32>
      %228 = vector.broadcast %209 : vector<1x32xf32> to vector<14x32xf32>
      %229 = arith.addf %227, %228 : vector<14x32xf32>
      %230 = arith.index_cast %arg36 : i32 to index
      %c0_92 = arith.constant 0 : index
      %c0_93 = arith.constant 0 : index
      %231 = vector.load %arg21[%230, %c0_92, %c0_93] : memref<8x32x64xf32, #tpu.memory_space<vmem>>, vector<1x32x64xf32>
      %232 = vector.shape_cast %231 : vector<1x32x64xf32> to vector<32x64xf32>
      %cst_94 = arith.constant dense<0.000000e+00> : vector<14x64xf32>
      %233 = tpu.matmul %229, %232, %cst_94 {dimension_numbers = #tpu.dot_dimension_numbers<[1], [0], [0], [1], [0, 0, 1, 1], [], []>} : vector<14x32xf32>, vector<32x64xf32>, vector<14x64xf32> -> vector<14x64xf32>
      %234 = arith.index_cast %arg36 : i32 to index
      %c0_95 = arith.constant 0 : index
      %c0_96 = arith.constant 0 : index
      %235 = vector.load %arg22[%234, %c0_95, %c0_96] : memref<8x1x64xf32, #tpu.memory_space<vmem>>, vector<1x1x64xf32>
      %236 = vector.shape_cast %235 : vector<1x1x64xf32> to vector<1x64xf32>
      %237 = vector.broadcast %236 : vector<1x64xf32> to vector<14x64xf32>
      %238 = arith.addf %233, %237 : vector<14x64xf32>
      %239 = vector.extract_strided_slice %238 {offsets = [0, 0], sizes = [14, 32], strides = [1, 1]} : vector<14x64xf32> to vector<14x32xf32>
      %240 = vector.extract_strided_slice %238 {offsets = [0, 32], sizes = [14, 32], strides = [1, 1]} : vector<14x64xf32> to vector<14x32xf32>
      %cst_97 = arith.constant 0.000000e+00 : f32
      %241 = vector.broadcast %cst_97 : f32 to vector<14x32xf32>
      %242 = arith.subf %241, %240 : vector<14x32xf32>
      %243 = math.exp %242 : vector<14x32xf32>
      %cst_98 = arith.constant 1.000000e+00 : f32
      %244 = vector.broadcast %cst_98 : f32 to vector<14x32xf32>
      %245 = arith.addf %244, %243 : vector<14x32xf32>
      %cst_99 = arith.constant 1.000000e+00 : f32
      %246 = vector.broadcast %cst_99 : f32 to vector<14x32xf32>
      %247 = arith.divf %246, %245 : vector<14x32xf32>
      %248 = arith.mulf %239, %247 : vector<14x32xf32>
      %249 = arith.index_cast %arg36 : i32 to index
      %c0_100 = arith.constant 0 : index
      %c0_101 = arith.constant 0 : index
      %250 = vector.load %arg23[%249, %c0_100, %c0_101] : memref<8x17x32xf32, #tpu.memory_space<vmem>>, vector<1x17x32xf32>
      %251 = vector.shape_cast %250 : vector<1x17x32xf32> to vector<17x32xf32>
      %cst_102 = arith.constant 0.000000e+00 : f32
      %252 = vector.broadcast %cst_102 : f32 to vector<14x32xf32>
      %c0_103 = arith.constant 0 : index
      %c0_104 = arith.constant 0 : index
      %c0_105 = arith.constant 0 : index
      %253 = vector.load %arg2[%c0_103, %c0_104, %c0_105] : memref<17x14x14xf32, #tpu.memory_space<vmem>>, vector<1x14x14xf32>
      %254 = vector.shape_cast %253 : vector<1x14x14xf32> to vector<14x14xf32>
      %cst_106 = arith.constant dense<0.000000e+00> : vector<14x32xf32>
      %255 = tpu.matmul %254, %248, %cst_106 {dimension_numbers = #tpu.dot_dimension_numbers<[1], [0], [0], [1], [0, 0, 1, 1], [], []>} : vector<14x14xf32>, vector<14x32xf32>, vector<14x32xf32> -> vector<14x32xf32>
      %256 = vector.extract_strided_slice %251 {offsets = [0, 0], sizes = [1, 32], strides = [1, 1]} : vector<17x32xf32> to vector<1x32xf32>
      %257 = vector.broadcast %256 : vector<1x32xf32> to vector<14x32xf32>
      %258 = arith.mulf %255, %257 : vector<14x32xf32>
      %259 = arith.addf %252, %258 : vector<14x32xf32>
      %c1 = arith.constant 1 : index
      %c0_107 = arith.constant 0 : index
      %c0_108 = arith.constant 0 : index
      %260 = vector.load %arg2[%c1, %c0_107, %c0_108] : memref<17x14x14xf32, #tpu.memory_space<vmem>>, vector<1x14x14xf32>
      %261 = vector.shape_cast %260 : vector<1x14x14xf32> to vector<14x14xf32>
      %cst_109 = arith.constant dense<0.000000e+00> : vector<14x32xf32>
      %262 = tpu.matmul %261, %248, %cst_109 {dimension_numbers = #tpu.dot_dimension_numbers<[1], [0], [0], [1], [0, 0, 1, 1], [], []>} : vector<14x14xf32>, vector<14x32xf32>, vector<14x32xf32> -> vector<14x32xf32>
      %263 = vector.extract_strided_slice %251 {offsets = [1, 0], sizes = [1, 32], strides = [1, 1]} : vector<17x32xf32> to vector<1x32xf32>
      %264 = vector.broadcast %263 : vector<1x32xf32> to vector<14x32xf32>
      %265 = arith.mulf %262, %264 : vector<14x32xf32>
      %266 = arith.addf %259, %265 : vector<14x32xf32>
      %c2 = arith.constant 2 : index
      %c0_110 = arith.constant 0 : index
      %c0_111 = arith.constant 0 : index
      %267 = vector.load %arg2[%c2, %c0_110, %c0_111] : memref<17x14x14xf32, #tpu.memory_space<vmem>>, vector<1x14x14xf32>
      %268 = vector.shape_cast %267 : vector<1x14x14xf32> to vector<14x14xf32>
      %cst_112 = arith.constant dense<0.000000e+00> : vector<14x32xf32>
      %269 = tpu.matmul %268, %248, %cst_112 {dimension_numbers = #tpu.dot_dimension_numbers<[1], [0], [0], [1], [0, 0, 1, 1], [], []>} : vector<14x14xf32>, vector<14x32xf32>, vector<14x32xf32> -> vector<14x32xf32>
      %270 = vector.extract_strided_slice %251 {offsets = [2, 0], sizes = [1, 32], strides = [1, 1]} : vector<17x32xf32> to vector<1x32xf32>
      %271 = vector.broadcast %270 : vector<1x32xf32> to vector<14x32xf32>
      %272 = arith.mulf %269, %271 : vector<14x32xf32>
      %273 = arith.addf %266, %272 : vector<14x32xf32>
      %c3 = arith.constant 3 : index
      %c0_113 = arith.constant 0 : index
      %c0_114 = arith.constant 0 : index
      %274 = vector.load %arg2[%c3, %c0_113, %c0_114] : memref<17x14x14xf32, #tpu.memory_space<vmem>>, vector<1x14x14xf32>
      %275 = vector.shape_cast %274 : vector<1x14x14xf32> to vector<14x14xf32>
      %cst_115 = arith.constant dense<0.000000e+00> : vector<14x32xf32>
      %276 = tpu.matmul %275, %248, %cst_115 {dimension_numbers = #tpu.dot_dimension_numbers<[1], [0], [0], [1], [0, 0, 1, 1], [], []>} : vector<14x14xf32>, vector<14x32xf32>, vector<14x32xf32> -> vector<14x32xf32>
      %277 = vector.extract_strided_slice %251 {offsets = [3, 0], sizes = [1, 32], strides = [1, 1]} : vector<17x32xf32> to vector<1x32xf32>
      %278 = vector.broadcast %277 : vector<1x32xf32> to vector<14x32xf32>
      %279 = arith.mulf %276, %278 : vector<14x32xf32>
      %280 = arith.addf %273, %279 : vector<14x32xf32>
      %c4 = arith.constant 4 : index
      %c0_116 = arith.constant 0 : index
      %c0_117 = arith.constant 0 : index
      %281 = vector.load %arg2[%c4, %c0_116, %c0_117] : memref<17x14x14xf32, #tpu.memory_space<vmem>>, vector<1x14x14xf32>
      %282 = vector.shape_cast %281 : vector<1x14x14xf32> to vector<14x14xf32>
      %cst_118 = arith.constant dense<0.000000e+00> : vector<14x32xf32>
      %283 = tpu.matmul %282, %248, %cst_118 {dimension_numbers = #tpu.dot_dimension_numbers<[1], [0], [0], [1], [0, 0, 1, 1], [], []>} : vector<14x14xf32>, vector<14x32xf32>, vector<14x32xf32> -> vector<14x32xf32>
      %284 = vector.extract_strided_slice %251 {offsets = [4, 0], sizes = [1, 32], strides = [1, 1]} : vector<17x32xf32> to vector<1x32xf32>
      %285 = vector.broadcast %284 : vector<1x32xf32> to vector<14x32xf32>
      %286 = arith.mulf %283, %285 : vector<14x32xf32>
      %287 = arith.addf %280, %286 : vector<14x32xf32>
      %c5 = arith.constant 5 : index
      %c0_119 = arith.constant 0 : index
      %c0_120 = arith.constant 0 : index
      %288 = vector.load %arg2[%c5, %c0_119, %c0_120] : memref<17x14x14xf32, #tpu.memory_space<vmem>>, vector<1x14x14xf32>
      %289 = vector.shape_cast %288 : vector<1x14x14xf32> to vector<14x14xf32>
      %cst_121 = arith.constant dense<0.000000e+00> : vector<14x32xf32>
      %290 = tpu.matmul %289, %248, %cst_121 {dimension_numbers = #tpu.dot_dimension_numbers<[1], [0], [0], [1], [0, 0, 1, 1], [], []>} : vector<14x14xf32>, vector<14x32xf32>, vector<14x32xf32> -> vector<14x32xf32>
      %291 = vector.extract_strided_slice %251 {offsets = [5, 0], sizes = [1, 32], strides = [1, 1]} : vector<17x32xf32> to vector<1x32xf32>
      %292 = vector.broadcast %291 : vector<1x32xf32> to vector<14x32xf32>
      %293 = arith.mulf %290, %292 : vector<14x32xf32>
      %294 = arith.addf %287, %293 : vector<14x32xf32>
      %c6 = arith.constant 6 : index
      %c0_122 = arith.constant 0 : index
      %c0_123 = arith.constant 0 : index
      %295 = vector.load %arg2[%c6, %c0_122, %c0_123] : memref<17x14x14xf32, #tpu.memory_space<vmem>>, vector<1x14x14xf32>
      %296 = vector.shape_cast %295 : vector<1x14x14xf32> to vector<14x14xf32>
      %cst_124 = arith.constant dense<0.000000e+00> : vector<14x32xf32>
      %297 = tpu.matmul %296, %248, %cst_124 {dimension_numbers = #tpu.dot_dimension_numbers<[1], [0], [0], [1], [0, 0, 1, 1], [], []>} : vector<14x14xf32>, vector<14x32xf32>, vector<14x32xf32> -> vector<14x32xf32>
      %298 = vector.extract_strided_slice %251 {offsets = [6, 0], sizes = [1, 32], strides = [1, 1]} : vector<17x32xf32> to vector<1x32xf32>
      %299 = vector.broadcast %298 : vector<1x32xf32> to vector<14x32xf32>
      %300 = arith.mulf %297, %299 : vector<14x32xf32>
      %301 = arith.addf %294, %300 : vector<14x32xf32>
      %c7 = arith.constant 7 : index
      %c0_125 = arith.constant 0 : index
      %c0_126 = arith.constant 0 : index
      %302 = vector.load %arg2[%c7, %c0_125, %c0_126] : memref<17x14x14xf32, #tpu.memory_space<vmem>>, vector<1x14x14xf32>
      %303 = vector.shape_cast %302 : vector<1x14x14xf32> to vector<14x14xf32>
      %cst_127 = arith.constant dense<0.000000e+00> : vector<14x32xf32>
      %304 = tpu.matmul %303, %248, %cst_127 {dimension_numbers = #tpu.dot_dimension_numbers<[1], [0], [0], [1], [0, 0, 1, 1], [], []>} : vector<14x14xf32>, vector<14x32xf32>, vector<14x32xf32> -> vector<14x32xf32>
      %305 = vector.extract_strided_slice %251 {offsets = [7, 0], sizes = [1, 32], strides = [1, 1]} : vector<17x32xf32> to vector<1x32xf32>
      %306 = vector.broadcast %305 : vector<1x32xf32> to vector<14x32xf32>
      %307 = arith.mulf %304, %306 : vector<14x32xf32>
      %308 = arith.addf %301, %307 : vector<14x32xf32>
      %c8 = arith.constant 8 : index
      %c0_128 = arith.constant 0 : index
      %c0_129 = arith.constant 0 : index
      %309 = vector.load %arg2[%c8, %c0_128, %c0_129] : memref<17x14x14xf32, #tpu.memory_space<vmem>>, vector<1x14x14xf32>
      %310 = vector.shape_cast %309 : vector<1x14x14xf32> to vector<14x14xf32>
      %cst_130 = arith.constant dense<0.000000e+00> : vector<14x32xf32>
      %311 = tpu.matmul %310, %248, %cst_130 {dimension_numbers = #tpu.dot_dimension_numbers<[1], [0], [0], [1], [0, 0, 1, 1], [], []>} : vector<14x14xf32>, vector<14x32xf32>, vector<14x32xf32> -> vector<14x32xf32>
      %312 = vector.extract_strided_slice %251 {offsets = [8, 0], sizes = [1, 32], strides = [1, 1]} : vector<17x32xf32> to vector<1x32xf32>
      %313 = vector.broadcast %312 : vector<1x32xf32> to vector<14x32xf32>
      %314 = arith.mulf %311, %313 : vector<14x32xf32>
      %315 = arith.addf %308, %314 : vector<14x32xf32>
      %c9 = arith.constant 9 : index
      %c0_131 = arith.constant 0 : index
      %c0_132 = arith.constant 0 : index
      %316 = vector.load %arg2[%c9, %c0_131, %c0_132] : memref<17x14x14xf32, #tpu.memory_space<vmem>>, vector<1x14x14xf32>
      %317 = vector.shape_cast %316 : vector<1x14x14xf32> to vector<14x14xf32>
      %cst_133 = arith.constant dense<0.000000e+00> : vector<14x32xf32>
      %318 = tpu.matmul %317, %248, %cst_133 {dimension_numbers = #tpu.dot_dimension_numbers<[1], [0], [0], [1], [0, 0, 1, 1], [], []>} : vector<14x14xf32>, vector<14x32xf32>, vector<14x32xf32> -> vector<14x32xf32>
      %319 = vector.extract_strided_slice %251 {offsets = [9, 0], sizes = [1, 32], strides = [1, 1]} : vector<17x32xf32> to vector<1x32xf32>
      %320 = vector.broadcast %319 : vector<1x32xf32> to vector<14x32xf32>
      %321 = arith.mulf %318, %320 : vector<14x32xf32>
      %322 = arith.addf %315, %321 : vector<14x32xf32>
      %c10 = arith.constant 10 : index
      %c0_134 = arith.constant 0 : index
      %c0_135 = arith.constant 0 : index
      %323 = vector.load %arg2[%c10, %c0_134, %c0_135] : memref<17x14x14xf32, #tpu.memory_space<vmem>>, vector<1x14x14xf32>
      %324 = vector.shape_cast %323 : vector<1x14x14xf32> to vector<14x14xf32>
      %cst_136 = arith.constant dense<0.000000e+00> : vector<14x32xf32>
      %325 = tpu.matmul %324, %248, %cst_136 {dimension_numbers = #tpu.dot_dimension_numbers<[1], [0], [0], [1], [0, 0, 1, 1], [], []>} : vector<14x14xf32>, vector<14x32xf32>, vector<14x32xf32> -> vector<14x32xf32>
      %326 = vector.extract_strided_slice %251 {offsets = [10, 0], sizes = [1, 32], strides = [1, 1]} : vector<17x32xf32> to vector<1x32xf32>
      %327 = vector.broadcast %326 : vector<1x32xf32> to vector<14x32xf32>
      %328 = arith.mulf %325, %327 : vector<14x32xf32>
      %329 = arith.addf %322, %328 : vector<14x32xf32>
      %c11 = arith.constant 11 : index
      %c0_137 = arith.constant 0 : index
      %c0_138 = arith.constant 0 : index
      %330 = vector.load %arg2[%c11, %c0_137, %c0_138] : memref<17x14x14xf32, #tpu.memory_space<vmem>>, vector<1x14x14xf32>
      %331 = vector.shape_cast %330 : vector<1x14x14xf32> to vector<14x14xf32>
      %cst_139 = arith.constant dense<0.000000e+00> : vector<14x32xf32>
      %332 = tpu.matmul %331, %248, %cst_139 {dimension_numbers = #tpu.dot_dimension_numbers<[1], [0], [0], [1], [0, 0, 1, 1], [], []>} : vector<14x14xf32>, vector<14x32xf32>, vector<14x32xf32> -> vector<14x32xf32>
      %333 = vector.extract_strided_slice %251 {offsets = [11, 0], sizes = [1, 32], strides = [1, 1]} : vector<17x32xf32> to vector<1x32xf32>
      %334 = vector.broadcast %333 : vector<1x32xf32> to vector<14x32xf32>
      %335 = arith.mulf %332, %334 : vector<14x32xf32>
      %336 = arith.addf %329, %335 : vector<14x32xf32>
      %c12 = arith.constant 12 : index
      %c0_140 = arith.constant 0 : index
      %c0_141 = arith.constant 0 : index
      %337 = vector.load %arg2[%c12, %c0_140, %c0_141] : memref<17x14x14xf32, #tpu.memory_space<vmem>>, vector<1x14x14xf32>
      %338 = vector.shape_cast %337 : vector<1x14x14xf32> to vector<14x14xf32>
      %cst_142 = arith.constant dense<0.000000e+00> : vector<14x32xf32>
      %339 = tpu.matmul %338, %248, %cst_142 {dimension_numbers = #tpu.dot_dimension_numbers<[1], [0], [0], [1], [0, 0, 1, 1], [], []>} : vector<14x14xf32>, vector<14x32xf32>, vector<14x32xf32> -> vector<14x32xf32>
      %340 = vector.extract_strided_slice %251 {offsets = [12, 0], sizes = [1, 32], strides = [1, 1]} : vector<17x32xf32> to vector<1x32xf32>
      %341 = vector.broadcast %340 : vector<1x32xf32> to vector<14x32xf32>
      %342 = arith.mulf %339, %341 : vector<14x32xf32>
      %343 = arith.addf %336, %342 : vector<14x32xf32>
      %c13 = arith.constant 13 : index
      %c0_143 = arith.constant 0 : index
      %c0_144 = arith.constant 0 : index
      %344 = vector.load %arg2[%c13, %c0_143, %c0_144] : memref<17x14x14xf32, #tpu.memory_space<vmem>>, vector<1x14x14xf32>
      %345 = vector.shape_cast %344 : vector<1x14x14xf32> to vector<14x14xf32>
      %cst_145 = arith.constant dense<0.000000e+00> : vector<14x32xf32>
      %346 = tpu.matmul %345, %248, %cst_145 {dimension_numbers = #tpu.dot_dimension_numbers<[1], [0], [0], [1], [0, 0, 1, 1], [], []>} : vector<14x14xf32>, vector<14x32xf32>, vector<14x32xf32> -> vector<14x32xf32>
      %347 = vector.extract_strided_slice %251 {offsets = [13, 0], sizes = [1, 32], strides = [1, 1]} : vector<17x32xf32> to vector<1x32xf32>
      %348 = vector.broadcast %347 : vector<1x32xf32> to vector<14x32xf32>
      %349 = arith.mulf %346, %348 : vector<14x32xf32>
      %350 = arith.addf %343, %349 : vector<14x32xf32>
      %c14 = arith.constant 14 : index
      %c0_146 = arith.constant 0 : index
      %c0_147 = arith.constant 0 : index
      %351 = vector.load %arg2[%c14, %c0_146, %c0_147] : memref<17x14x14xf32, #tpu.memory_space<vmem>>, vector<1x14x14xf32>
      %352 = vector.shape_cast %351 : vector<1x14x14xf32> to vector<14x14xf32>
      %cst_148 = arith.constant dense<0.000000e+00> : vector<14x32xf32>
      %353 = tpu.matmul %352, %248, %cst_148 {dimension_numbers = #tpu.dot_dimension_numbers<[1], [0], [0], [1], [0, 0, 1, 1], [], []>} : vector<14x14xf32>, vector<14x32xf32>, vector<14x32xf32> -> vector<14x32xf32>
      %354 = vector.extract_strided_slice %251 {offsets = [14, 0], sizes = [1, 32], strides = [1, 1]} : vector<17x32xf32> to vector<1x32xf32>
      %355 = vector.broadcast %354 : vector<1x32xf32> to vector<14x32xf32>
      %356 = arith.mulf %353, %355 : vector<14x32xf32>
      %357 = arith.addf %350, %356 : vector<14x32xf32>
      %c15 = arith.constant 15 : index
      %c0_149 = arith.constant 0 : index
      %c0_150 = arith.constant 0 : index
      %358 = vector.load %arg2[%c15, %c0_149, %c0_150] : memref<17x14x14xf32, #tpu.memory_space<vmem>>, vector<1x14x14xf32>
      %359 = vector.shape_cast %358 : vector<1x14x14xf32> to vector<14x14xf32>
      %cst_151 = arith.constant dense<0.000000e+00> : vector<14x32xf32>
      %360 = tpu.matmul %359, %248, %cst_151 {dimension_numbers = #tpu.dot_dimension_numbers<[1], [0], [0], [1], [0, 0, 1, 1], [], []>} : vector<14x14xf32>, vector<14x32xf32>, vector<14x32xf32> -> vector<14x32xf32>
      %361 = vector.extract_strided_slice %251 {offsets = [15, 0], sizes = [1, 32], strides = [1, 1]} : vector<17x32xf32> to vector<1x32xf32>
      %362 = vector.broadcast %361 : vector<1x32xf32> to vector<14x32xf32>
      %363 = arith.mulf %360, %362 : vector<14x32xf32>
      %364 = arith.addf %357, %363 : vector<14x32xf32>
      %c16 = arith.constant 16 : index
      %c0_152 = arith.constant 0 : index
      %c0_153 = arith.constant 0 : index
      %365 = vector.load %arg2[%c16, %c0_152, %c0_153] : memref<17x14x14xf32, #tpu.memory_space<vmem>>, vector<1x14x14xf32>
      %366 = vector.shape_cast %365 : vector<1x14x14xf32> to vector<14x14xf32>
      %cst_154 = arith.constant dense<0.000000e+00> : vector<14x32xf32>
      %367 = tpu.matmul %366, %248, %cst_154 {dimension_numbers = #tpu.dot_dimension_numbers<[1], [0], [0], [1], [0, 0, 1, 1], [], []>} : vector<14x14xf32>, vector<14x32xf32>, vector<14x32xf32> -> vector<14x32xf32>
      %368 = vector.extract_strided_slice %251 {offsets = [16, 0], sizes = [1, 32], strides = [1, 1]} : vector<17x32xf32> to vector<1x32xf32>
      %369 = vector.broadcast %368 : vector<1x32xf32> to vector<14x32xf32>
      %370 = arith.mulf %367, %369 : vector<14x32xf32>
      %371 = arith.addf %364, %370 : vector<14x32xf32>
      %372 = arith.index_cast %arg36 : i32 to index
      %c0_155 = arith.constant 0 : index
      %c0_156 = arith.constant 0 : index
      %373 = vector.load %arg24[%372, %c0_155, %c0_156] : memref<8x1x32xf32, #tpu.memory_space<vmem>>, vector<1x1x32xf32>
      %374 = vector.shape_cast %373 : vector<1x1x32xf32> to vector<1x32xf32>
      %375 = vector.broadcast %374 : vector<1x32xf32> to vector<14x32xf32>
      %376 = arith.addf %371, %375 : vector<14x32xf32>
      %cst_157 = arith.constant 0.000000e+00 : f32
      %377 = vector.broadcast %cst_157 : f32 to vector<14x32xf32>
      %378 = arith.subf %377, %376 : vector<14x32xf32>
      %379 = math.exp %378 : vector<14x32xf32>
      %cst_158 = arith.constant 1.000000e+00 : f32
      %380 = vector.broadcast %cst_158 : f32 to vector<14x32xf32>
      %381 = arith.addf %380, %379 : vector<14x32xf32>
      %cst_159 = arith.constant 1.000000e+00 : f32
      %382 = vector.broadcast %cst_159 : f32 to vector<14x32xf32>
      %383 = arith.divf %382, %381 : vector<14x32xf32>
      %384 = arith.mulf %376, %383 : vector<14x32xf32>
      %385 = arith.index_cast %arg36 : i32 to index
      %c0_160 = arith.constant 0 : index
      %c0_161 = arith.constant 0 : index
      %386 = vector.load %arg25[%385, %c0_160, %c0_161] : memref<8x32x32xf32, #tpu.memory_space<vmem>>, vector<1x32x32xf32>
      %387 = vector.shape_cast %386 : vector<1x32x32xf32> to vector<32x32xf32>
      %cst_162 = arith.constant dense<0.000000e+00> : vector<14x32xf32>
      %388 = tpu.matmul %384, %387, %cst_162 {dimension_numbers = #tpu.dot_dimension_numbers<[1], [0], [0], [1], [0, 0, 1, 1], [], []>} : vector<14x32xf32>, vector<32x32xf32>, vector<14x32xf32> -> vector<14x32xf32>
      %389 = arith.index_cast %arg36 : i32 to index
      %c0_163 = arith.constant 0 : index
      %c0_164 = arith.constant 0 : index
      %390 = vector.load %arg26[%389, %c0_163, %c0_164] : memref<8x1x32xf32, #tpu.memory_space<vmem>>, vector<1x1x32xf32>
      %391 = vector.shape_cast %390 : vector<1x1x32xf32> to vector<1x32xf32>
      %392 = vector.broadcast %391 : vector<1x32xf32> to vector<14x32xf32>
      %393 = arith.addf %388, %392 : vector<14x32xf32>
      %394 = arith.addf %203, %393 : vector<14x32xf32>
      %395 = arith.index_cast %arg36 : i32 to index
      %c0_165 = arith.constant 0 : index
      %c0_166 = arith.constant 0 : index
      %396 = vector.load %arg27[%395, %c0_165, %c0_166] : memref<8x1x32xf32, #tpu.memory_space<vmem>>, vector<1x1x32xf32>
      %397 = vector.shape_cast %396 : vector<1x1x32xf32> to vector<1x32xf32>
      %398 = arith.index_cast %arg36 : i32 to index
      %c0_167 = arith.constant 0 : index
      %c0_168 = arith.constant 0 : index
      %399 = vector.load %arg28[%398, %c0_167, %c0_168] : memref<8x1x32xf32, #tpu.memory_space<vmem>>, vector<1x1x32xf32>
      %400 = vector.shape_cast %399 : vector<1x1x32xf32> to vector<1x32xf32>
      %401 = arith.index_cast %arg36 : i32 to index
      %c0_169 = arith.constant 0 : index
      %c0_170 = arith.constant 0 : index
      %402 = vector.load %arg29[%401, %c0_169, %c0_170] : memref<8x32x128xf32, #tpu.memory_space<vmem>>, vector<1x32x128xf32>
      %403 = vector.shape_cast %402 : vector<1x32x128xf32> to vector<32x128xf32>
      %404 = arith.index_cast %arg36 : i32 to index
      %c0_171 = arith.constant 0 : index
      %c0_172 = arith.constant 0 : index
      %405 = vector.load %arg30[%404, %c0_171, %c0_172] : memref<8x1x128xf32, #tpu.memory_space<vmem>>, vector<1x1x128xf32>
      %406 = vector.shape_cast %405 : vector<1x1x128xf32> to vector<1x128xf32>
      %407 = arith.index_cast %arg36 : i32 to index
      %c0_173 = arith.constant 0 : index
      %c0_174 = arith.constant 0 : index
      %408 = vector.load %arg31[%407, %c0_173, %c0_174] : memref<8x128x32xf32, #tpu.memory_space<vmem>>, vector<1x128x32xf32>
      %409 = vector.shape_cast %408 : vector<1x128x32xf32> to vector<128x32xf32>
      %410 = arith.index_cast %arg36 : i32 to index
      %c0_175 = arith.constant 0 : index
      %c0_176 = arith.constant 0 : index
      %411 = vector.load %arg32[%410, %c0_175, %c0_176] : memref<8x1x32xf32, #tpu.memory_space<vmem>>, vector<1x1x32xf32>
      %412 = vector.shape_cast %411 : vector<1x1x32xf32> to vector<1x32xf32>
      %cst_177 = arith.constant dense<0.000000e+00> : vector<14xf32>
      %413 = vector.multi_reduction <add>, %394, %cst_177 [1] : vector<14x32xf32> to vector<14xf32>
      %414 = vector.shape_cast %413 : vector<14xf32> to vector<14x1xf32>
      %cst_178 = arith.constant 3.200000e+01 : f32
      %415 = vector.broadcast %cst_178 : f32 to vector<14x1xf32>
      %416 = arith.divf %414, %415 : vector<14x1xf32>
      %417 = vector.broadcast %416 : vector<14x1xf32> to vector<14x32xf32>
      %418 = arith.subf %394, %417 : vector<14x32xf32>
      %419 = arith.mulf %418, %418 : vector<14x32xf32>
      %cst_179 = arith.constant dense<0.000000e+00> : vector<14xf32>
      %420 = vector.multi_reduction <add>, %419, %cst_179 [1] : vector<14x32xf32> to vector<14xf32>
      %421 = vector.shape_cast %420 : vector<14xf32> to vector<14x1xf32>
      %cst_180 = arith.constant 3.200000e+01 : f32
      %422 = vector.broadcast %cst_180 : f32 to vector<14x1xf32>
      %423 = arith.divf %421, %422 : vector<14x1xf32>
      %cst_181 = arith.constant 9.99999974E-6 : f32
      %424 = vector.broadcast %cst_181 : f32 to vector<14x1xf32>
      %425 = arith.addf %423, %424 : vector<14x1xf32>
      %426 = math.rsqrt %425 : vector<14x1xf32>
      %427 = vector.broadcast %426 : vector<14x1xf32> to vector<14x32xf32>
      %428 = arith.mulf %418, %427 : vector<14x32xf32>
      %429 = vector.broadcast %397 : vector<1x32xf32> to vector<14x32xf32>
      %430 = arith.mulf %428, %429 : vector<14x32xf32>
      %431 = vector.broadcast %400 : vector<1x32xf32> to vector<14x32xf32>
      %432 = arith.addf %430, %431 : vector<14x32xf32>
      %cst_182 = arith.constant dense<0.000000e+00> : vector<14x128xf32>
      %433 = tpu.matmul %432, %403, %cst_182 {dimension_numbers = #tpu.dot_dimension_numbers<[1], [0], [0], [1], [0, 0, 1, 1], [], []>} : vector<14x32xf32>, vector<32x128xf32>, vector<14x128xf32> -> vector<14x128xf32>
      %434 = vector.broadcast %406 : vector<1x128xf32> to vector<14x128xf32>
      %435 = arith.addf %433, %434 : vector<14x128xf32>
      %cst_183 = arith.constant 0.000000e+00 : f32
      %436 = vector.broadcast %cst_183 : f32 to vector<14x128xf32>
      %437 = arith.subf %436, %435 : vector<14x128xf32>
      %438 = math.exp %437 : vector<14x128xf32>
      %cst_184 = arith.constant 1.000000e+00 : f32
      %439 = vector.broadcast %cst_184 : f32 to vector<14x128xf32>
      %440 = arith.addf %439, %438 : vector<14x128xf32>
      %cst_185 = arith.constant 1.000000e+00 : f32
      %441 = vector.broadcast %cst_185 : f32 to vector<14x128xf32>
      %442 = arith.divf %441, %440 : vector<14x128xf32>
      %443 = arith.mulf %435, %442 : vector<14x128xf32>
      %cst_186 = arith.constant dense<0.000000e+00> : vector<14x32xf32>
      %444 = tpu.matmul %443, %409, %cst_186 {dimension_numbers = #tpu.dot_dimension_numbers<[1], [0], [0], [1], [0, 0, 1, 1], [], []>} : vector<14x128xf32>, vector<128x32xf32>, vector<14x32xf32> -> vector<14x32xf32>
      %445 = vector.broadcast %412 : vector<1x32xf32> to vector<14x32xf32>
      %446 = arith.addf %444, %445 : vector<14x32xf32>
      %cst_187 = arith.constant 5.000000e-01 : f32
      %447 = vector.broadcast %cst_187 : f32 to vector<14x32xf32>
      %448 = arith.mulf %447, %446 : vector<14x32xf32>
      %449 = arith.addf %394, %448 : vector<14x32xf32>
      %450 = arith.index_cast %arg36 : i32 to index
      %c0_188 = arith.constant 0 : index
      %c0_189 = arith.constant 0 : index
      %451 = vector.load %arg33[%450, %c0_188, %c0_189] : memref<8x1x32xf32, #tpu.memory_space<vmem>>, vector<1x1x32xf32>
      %452 = vector.shape_cast %451 : vector<1x1x32xf32> to vector<1x32xf32>
      %453 = arith.index_cast %arg36 : i32 to index
      %c0_190 = arith.constant 0 : index
      %c0_191 = arith.constant 0 : index
      %454 = vector.load %arg34[%453, %c0_190, %c0_191] : memref<8x1x32xf32, #tpu.memory_space<vmem>>, vector<1x1x32xf32>
      %455 = vector.shape_cast %454 : vector<1x1x32xf32> to vector<1x32xf32>
      %cst_192 = arith.constant dense<0.000000e+00> : vector<14xf32>
      %456 = vector.multi_reduction <add>, %449, %cst_192 [1] : vector<14x32xf32> to vector<14xf32>
      %457 = vector.shape_cast %456 : vector<14xf32> to vector<14x1xf32>
      %cst_193 = arith.constant 3.200000e+01 : f32
      %458 = vector.broadcast %cst_193 : f32 to vector<14x1xf32>
      %459 = arith.divf %457, %458 : vector<14x1xf32>
      %460 = vector.broadcast %459 : vector<14x1xf32> to vector<14x32xf32>
      %461 = arith.subf %449, %460 : vector<14x32xf32>
      %462 = arith.mulf %461, %461 : vector<14x32xf32>
      %cst_194 = arith.constant dense<0.000000e+00> : vector<14xf32>
      %463 = vector.multi_reduction <add>, %462, %cst_194 [1] : vector<14x32xf32> to vector<14xf32>
      %464 = vector.shape_cast %463 : vector<14xf32> to vector<14x1xf32>
      %cst_195 = arith.constant 3.200000e+01 : f32
      %465 = vector.broadcast %cst_195 : f32 to vector<14x1xf32>
      %466 = arith.divf %464, %465 : vector<14x1xf32>
      %cst_196 = arith.constant 9.99999974E-6 : f32
      %467 = vector.broadcast %cst_196 : f32 to vector<14x1xf32>
      %468 = arith.addf %466, %467 : vector<14x1xf32>
      %469 = math.rsqrt %468 : vector<14x1xf32>
      %470 = vector.broadcast %469 : vector<14x1xf32> to vector<14x32xf32>
      %471 = arith.mulf %461, %470 : vector<14x32xf32>
      %472 = vector.broadcast %452 : vector<1x32xf32> to vector<14x32xf32>
      %473 = arith.mulf %471, %472 : vector<14x32xf32>
      %474 = vector.broadcast %455 : vector<1x32xf32> to vector<14x32xf32>
      %475 = arith.addf %473, %474 : vector<14x32xf32>
      scf.yield %475 : vector<14x32xf32>
    }
    %c8_i32_7 = arith.constant 8 : i32
    %c0_8 = arith.constant 0 : index
    %c0_9 = arith.constant 0 : index
    %9 = vector.load %arg5[%c0_8, %c0_9] : memref<32x128xf32, #tpu.memory_space<vmem>>, vector<32x128xf32>
    %cst_10 = arith.constant dense<0.000000e+00> : vector<14x128xf32>
    %10 = tpu.matmul %8, %9, %cst_10 {dimension_numbers = #tpu.dot_dimension_numbers<[1], [0], [0], [1], [0, 0, 1, 1], [], []>} : vector<14x32xf32>, vector<32x128xf32>, vector<14x128xf32> -> vector<14x128xf32>
    %c0_11 = arith.constant 0 : index
    %c0_12 = arith.constant 0 : index
    %11 = vector.load %arg6[%c0_11, %c0_12] : memref<1x128xf32, #tpu.memory_space<vmem>>, vector<1x128xf32>
    %12 = vector.broadcast %11 : vector<1x128xf32> to vector<14x128xf32>
    %13 = arith.addf %10, %12 : vector<14x128xf32>
    %cst_13 = arith.constant dense<0xFF800000> : vector<14xf32>
    %14 = vector.multi_reduction <maximumf>, %13, %cst_13 [1] : vector<14x128xf32> to vector<14xf32>
    %15 = vector.shape_cast %14 : vector<14xf32> to vector<14x1xf32>
    %16 = vector.broadcast %15 : vector<14x1xf32> to vector<14x128xf32>
    %17 = arith.subf %13, %16 : vector<14x128xf32>
    %18 = math.exp %17 : vector<14x128xf32>
    %cst_14 = arith.constant dense<0.000000e+00> : vector<14xf32>
    %19 = vector.multi_reduction <add>, %18, %cst_14 [1] : vector<14x128xf32> to vector<14xf32>
    %20 = vector.shape_cast %19 : vector<14xf32> to vector<14x1xf32>
    %21 = vector.broadcast %20 : vector<14x1xf32> to vector<14x128xf32>
    %22 = arith.divf %18, %21 : vector<14x128xf32>
    %c0_15 = arith.constant 0 : index
    %c0_16 = arith.constant 0 : index
    %23 = vector.load %arg35[%c0_15, %c0_16] : memref<14x128xf32, #tpu.memory_space<vmem>>, vector<14x128xf32>
    tpu.vector_store %arg35[%c0_15, %c0_16], %22 {strides = array<i32>} : memref<14x128xf32, #tpu.memory_space<vmem>>, vector<14x128xf32>,
    return
  }
}

</mosaic_0001>

<llo_original>
// kernel: recognizer_forward.3
$region0: #{recognizer_forward.3}
  #allocation0 [shape = 'u32[]', space=smem, size = 0x4, offset = 0x4, fixed_abs, tag = 'smem constant byte address 0x4 - core index']
  #allocation1 [shape = 'u32[72,128]{1,0:T(1,128)}', space=vmem, size = 0x9000, scoped, tag = 'internal scratch']
  %s0 = inlined_call_operand.vmem [shape: f32[1248,9], index: 0, kind: input, shape index: {}]
  %s1 = inlined_call_operand.vmem [shape: f32[9,16], index: 1, kind: input, shape index: {}]
  %s2 = inlined_call_operand.vmem [shape: f32[1,16], index: 2, kind: input, shape index: {}]
  %s3 = inlined_call_operand.vmem [shape: f32[1248,16], index: 3, kind: output, shape index: {}]
  %s4 = sld [smem:[#allocation0]]
  $region22: #{recognizer_forward.3} parent=0
    _
  %s6 = ssub.s32 1, %s4
  %s7 = scalar_select 0, %s6, %s4
  // Predicated region
  $region2: #{recognizer_forward.3} parent=0 // pred_check
    _
  $region3: #{recognizer_forward.3} parent=0 // pred_check_branch
    %9 = sbr.rel (0) target = $region5
  $region4: #{recognizer_forward.3} parent=0 // pred_region
    _
  $region5: #{recognizer_forward.3} parent=0 // pred_fallthru
    _
  // Predicated region
  $region6: #{recognizer_forward.3} parent=0 // pred_check
    _
  $region7: #{recognizer_forward.3} parent=0 // pred_check_branch
    %11 = sbr.rel (0) target = $region9
  $region8: #{recognizer_forward.3} parent=0 // pred_region
    _
  $region9: #{recognizer_forward.3} parent=0 // pred_fallthru
    _
  // Predicated region
  $region10: #{recognizer_forward.3} parent=0 // pred_check
    _
  $region11: #{recognizer_forward.3} parent=0 // pred_check_branch
    %13 = sbr.rel (0) target = $region13
  $region12: #{recognizer_forward.3} parent=0 // pred_region
    _
  $region13: #{recognizer_forward.3} parent=0 // pred_fallthru
    _
  %v14 = vld [vmem:[%s0] sm:$0xff]
  %v15 = vld [vmem:[%s0 + $0x8] sm:$0xff]
  %v16 = vld [vmem:[%s0 + $0x10] sm:$0xff]
  %v17 = vld [vmem:[%s0 + $0x18] sm:$0xff]
  %v18 = vld [vmem:[%s0 + $0x20] sm:$0xff]
  %v19 = vld [vmem:[%s0 + $0x28] sm:$0xff]
  %v20 = vld [vmem:[%s0 + $0x30] sm:$0xff]
  %v21 = vld [vmem:[%s0 + $0x38] sm:$0xff]
  %v22 = vld [vmem:[%s0 + $0x40] sm:$0xff]
  %v23 = vld [vmem:[%s0 + $0x48] sm:$0xff]
  %v24 = vld [vmem:[%s0 + $0x50] sm:$0xff]
  %v25 = vld [vmem:[%s0 + $0x58] sm:$0xff]
  %v26 = vld [vmem:[%s0 + $0x60] sm:$0xff]
  %v27 = vld [vmem:[%s0 + $0x68] sm:$0xff]
  %v28 = vld [vmem:[%s0 + $0x70] sm:$0xff]
  %v29 = vld [vmem:[%s0 + $0x78] sm:$0xff]
  %v30 = vld [vmem:[%s0 + $0x80] sm:$0xff]
  %v31 = vld [vmem:[%s0 + $0x88] sm:$0xff]
  %v32 = vld [vmem:[%s0 + $0x90] sm:$0xff]
  %v33 = vld [vmem:[%s0 + $0x98] sm:$0xff]
  %v34 = vld [vmem:[%s0 + $0xa0] sm:$0xff]
  %v35 = vld [vmem:[%s0 + $0xa8] sm:$0xff]
  %v36 = vld [vmem:[%s0 + $0xb0] sm:$0xff]
  %v37 = vld [vmem:[%s0 + $0xb8] sm:$0xff]
  %v38 = vld [vmem:[%s0 + $0xc0] sm:$0xff]
  %v39 = vld [vmem:[%s0 + $0xc8] sm:$0xff]
  %v40 = vld [vmem:[%s0 + $0xd0] sm:$0xff]
  %v41 = vld [vmem:[%s0 + $0xd8] sm:$0xff]
  %v42 = vld [vmem:[%s0 + $0xe0] sm:$0xff]
  %v43 = vld [vmem:[%s0 + $0xe8] sm:$0xff]
  %v44 = vld [vmem:[%s0 + $0xf0] sm:$0xff]
  %v45 = vld [vmem:[%s0 + $0xf8] sm:$0xff]
  %v46 = vld [vmem:[%s0 + $0x100] sm:$0xff]
  %v47 = vld [vmem:[%s0 + $0x108] sm:$0xff]
  %v48 = vld [vmem:[%s0 + $0x110] sm:$0xff]
  %v49 = vld [vmem:[%s0 + $0x118] sm:$0xff]
  %v50 = vld [vmem:[%s0 + $0x120] sm:$0xff]
  %v51 = vld [vmem:[%s0 + $0x128] sm:$0xff]
  %v52 = vld [vmem:[%s0 + $0x130] sm:$0xff]
  %v53 = vld [vmem:[%s0 + $0x138] sm:$0xff]
  %v54 = vld [vmem:[%s0 + $0x140] sm:$0xff]
  %v55 = vld [vmem:[%s0 + $0x148] sm:$0xff]
  %v56 = vld [vmem:[%s0 + $0x150] sm:$0xff]
  %v57 = vld [vmem:[%s0 + $0x158] sm:$0xff]
  %v58 = vld [vmem:[%s0 + $0x160] sm:$0xff]
  %v59 = vld [vmem:[%s0 + $0x168] sm:$0xff]
  %v60 = vld [vmem:[%s0 + $0x170] sm:$0xff]
  %v61 = vld [vmem:[%s0 + $0x178] sm:$0xff]
  %v62 = vld [vmem:[%s0 + $0x180] sm:$0xff]
  %v63 = vld [vmem:[%s0 + $0x188] sm:$0xff]
  %v64 = vld [vmem:[%s0 + $0x190] sm:$0xff]
  %v65 = vld [vmem:[%s0 + $0x198] sm:$0xff]
  %v66 = vld [vmem:[%s0 + $0x1a0] sm:$0xff]
  %v67 = vld [vmem:[%s0 + $0x1a8] sm:$0xff]
  %v68 = vld [vmem:[%s0 + $0x1b0] sm:$0xff]
  %v69 = vld [vmem:[%s0 + $0x1b8] sm:$0xff]
  %v70 = vld [vmem:[%s0 + $0x1c0] sm:$0xff]
  %v71 = vld [vmem:[%s0 + $0x1c8] sm:$0xff]
  %v72 = vld [vmem:[%s0 + $0x1d0] sm:$0xff]
  %v73 = vld [vmem:[%s0 + $0x1d8] sm:$0xff]
  %v74 = vld [vmem:[%s0 + $0x1e0] sm:$0xff]
  %v75 = vld [vmem:[%s0 + $0x1e8] sm:$0xff]
  %v76 = vld [vmem:[%s0 + $0x1f0] sm:$0xff]
  %v77 = vld [vmem:[%s0 + $0x1f8] sm:$0xff]
  %v78 = vld [vmem:[%s0 + $0x200] sm:$0xff]
  %v79 = vld [vmem:[%s0 + $0x208] sm:$0xff]
  %v80 = vld [vmem:[%s0 + $0x210] sm:$0xff]
  %v81 = vld [vmem:[%s0 + $0x218] sm:$0xff]
  %v82 = vld [vmem:[%s0 + $0x220] sm:$0xff]
  %v83 = vld [vmem:[%s0 + $0x228] sm:$0xff]
  %v84 = vld [vmem:[%s0 + $0x230] sm:$0xff]
  %v85 = vld [vmem:[%s0 + $0x238] sm:$0xff]
  %v86 = vld [vmem:[%s0 + $0x240] sm:$0xff]
  %v87 = vld [vmem:[%s0 + $0x248] sm:$0xff]
  %v88 = vld [vmem:[%s0 + $0x250] sm:$0xff]
  %v89 = vld [vmem:[%s0 + $0x258] sm:$0xff]
  %v90 = vld [vmem:[%s0 + $0x260] sm:$0xff]
  %v91 = vld [vmem:[%s0 + $0x268] sm:$0xff]
  %v92 = vld [vmem:[%s0 + $0x270] sm:$0xff]
  %v93 = vld [vmem:[%s0 + $0x278] sm:$0xff]
  %v94 = vld [vmem:[%s0 + $0x280] sm:$0xff]
  %v95 = vld [vmem:[%s0 + $0x288] sm:$0xff]
  %v96 = vld [vmem:[%s0 + $0x290] sm:$0xff]
  %v97 = vld [vmem:[%s0 + $0x298] sm:$0xff]
  %v98 = vld [vmem:[%s0 + $0x2a0] sm:$0xff]
  %v99 = vld [vmem:[%s0 + $0x2a8] sm:$0xff]
  %v100 = vld [vmem:[%s0 + $0x2b0] sm:$0xff]
  %v101 = vld [vmem:[%s0 + $0x2b8] sm:$0xff]
  %v102 = vld [vmem:[%s0 + $0x2c0] sm:$0xff]
  %v103 = vld [vmem:[%s0 + $0x2c8] sm:$0xff]
  %v104 = vld [vmem:[%s0 + $0x2d0] sm:$0xff]
  %v105 = vld [vmem:[%s0 + $0x2d8] sm:$0xff]
  %v106 = vld [vmem:[%s0 + $0x2e0] sm:$0xff]
  %v107 = vld [vmem:[%s0 + $0x2e8] sm:$0xff]
  %v108 = vld [vmem:[%s0 + $0x2f0] sm:$0xff]
  %v109 = vld [vmem:[%s0 + $0x2f8] sm:$0xff]
  %v110 = vld [vmem:[%s0 + $0x300] sm:$0xff]
  %v111 = vld [vmem:[%s0 + $0x308] sm:$0xff]
  %v112 = vld [vmem:[%s0 + $0x310] sm:$0xff]
  %v113 = vld [vmem:[%s0 + $0x318] sm:$0xff]
  %v114 = vld [vmem:[%s0 + $0x320] sm:$0xff]
  %v115 = vld [vmem:[%s0 + $0x328] sm:$0xff]
  %v116 = vld [vmem:[%s0 + $0x330] sm:$0xff]
  %v117 = vld [vmem:[%s0 + $0x338] sm:$0xff]
  %v118 = vld [vmem:[%s0 + $0x340] sm:$0xff]
  %v119 = vld [vmem:[%s0 + $0x348] sm:$0xff]
  %v120 = vld [vmem:[%s0 + $0x350] sm:$0xff]
  %v121 = vld [vmem:[%s0 + $0x358] sm:$0xff]
  %v122 = vld [vmem:[%s0 + $0x360] sm:$0xff]
  %v123 = vld [vmem:[%s0 + $0x368] sm:$0xff]
  %v124 = vld [vmem:[%s0 + $0x370] sm:$0xff]
  %v125 = vld [vmem:[%s0 + $0x378] sm:$0xff]
  %v126 = vld [vmem:[%s0 + $0x380] sm:$0xff]
  %v127 = vld [vmem:[%s0 + $0x388] sm:$0xff]
  %v128 = vld [vmem:[%s0 + $0x390] sm:$0xff]
  %v129 = vld [vmem:[%s0 + $0x398] sm:$0xff]
  %v130 = vld [vmem:[%s0 + $0x3a0] sm:$0xff]
  %v131 = vld [vmem:[%s0 + $0x3a8] sm:$0xff]
  %v132 = vld [vmem:[%s0 + $0x3b0] sm:$0xff]
  %v133 = vld [vmem:[%s0 + $0x3b8] sm:$0xff]
  %v134 = vld [vmem:[%s0 + $0x3c0] sm:$0xff]
  %v135 = vld [vmem:[%s0 + $0x3c8] sm:$0xff]
  %v136 = vld [vmem:[%s0 + $0x3d0] sm:$0xff]
  %v137 = vld [vmem:[%s0 + $0x3d8] sm:$0xff]
  %v138 = vld [vmem:[%s0 + $0x3e0] sm:$0xff]
  %v139 = vld [vmem:[%s0 + $0x3e8] sm:$0xff]
  %v140 = vld [vmem:[%s0 + $0x3f0] sm:$0xff]
  %v141 = vld [vmem:[%s0 + $0x3f8] sm:$0xff]
  %v142 = vld [vmem:[%s0 + $0x400] sm:$0xff]
  %v143 = vld [vmem:[%s0 + $0x408] sm:$0xff]
  %v144 = vld [vmem:[%s0 + $0x410] sm:$0xff]
  %v145 = vld [vmem:[%s0 + $0x418] sm:$0xff]
  %v146 = vld [vmem:[%s0 + $0x420] sm:$0xff]
  %v147 = vld [vmem:[%s0 + $0x428] sm:$0xff]
  %v148 = vld [vmem:[%s0 + $0x430] sm:$0xff]
  %v149 = vld [vmem:[%s0 + $0x438] sm:$0xff]
  %v150 = vld [vmem:[%s0 + $0x440] sm:$0xff]
  %v151 = vld [vmem:[%s0 + $0x448] sm:$0xff]
  %v152 = vld [vmem:[%s0 + $0x450] sm:$0xff]
  %v153 = vld [vmem:[%s0 + $0x458] sm:$0xff]
  %v154 = vld [vmem:[%s0 + $0x460] sm:$0xff]
  %v155 = vld [vmem:[%s0 + $0x468] sm:$0xff]
  %v156 = vld [vmem:[%s0 + $0x470] sm:$0xff]
  %v157 = vld [vmem:[%s0 + $0x478] sm:$0xff]
  %v158 = vld [vmem:[%s0 + $0x480] sm:$0xff]
  %v159 = vld [vmem:[%s0 + $0x488] sm:$0xff]
  %v160 = vld [vmem:[%s0 + $0x490] sm:$0xff]
  %v161 = vld [vmem:[%s0 + $0x498] sm:$0xff]
  %v162 = vld [vmem:[%s0 + $0x4a0] sm:$0xff]
  %v163 = vld [vmem:[%s0 + $0x4a8] sm:$0xff]
  %v164 = vld [vmem:[%s0 + $0x4b0] sm:$0xff]
  %v165 = vld [vmem:[%s0 + $0x4b8] sm:$0xff]
  %v166 = vld [vmem:[%s0 + $0x4c0] sm:$0xff]
  %v167 = vld [vmem:[%s0 + $0x4c8] sm:$0xff]
  %v168 = vld [vmem:[%s0 + $0x4d0] sm:$0xff]
  %v169 = vld [vmem:[%s0 + $0x4d8] sm:$0xff]
  %v170 = vld [vmem:[%s1] sm:$0xff]
  %v171 = vld [vmem:[%s1 + $0x8] sm:$0x1]
  %v172 = vld [vmem:[%s2] sm:$0x1]
  %v174 = vperm.slane %v172, 0
  %vm176 = vcmask 72704
  %v178 = vsel %vm176, %v14, 0
  %v181 = vsel %vm176, %v15, 0
  %v184 = vsel %vm176, %v16, 0
  %v187 = vsel %vm176, %v17, 0
  %v190 = vsel %vm176, %v18, 0
  %v193 = vsel %vm176, %v19, 0
  %v196 = vsel %vm176, %v20, 0
  %v199 = vsel %vm176, %v21, 0
  %v202 = vsel %vm176, %v22, 0
  %v205 = vsel %vm176, %v23, 0
  %v208 = vsel %vm176, %v24, 0
  %v211 = vsel %vm176, %v25, 0
  %v214 = vsel %vm176, %v26, 0
  %v217 = vsel %vm176, %v27, 0
  %v220 = vsel %vm176, %v28, 0
  %v223 = vsel %vm176, %v29, 0
  %v226 = vsel %vm176, %v30, 0
  %v229 = vsel %vm176, %v31, 0
  %v232 = vsel %vm176, %v32, 0
  %v235 = vsel %vm176, %v33, 0
  %v238 = vsel %vm176, %v34, 0
  %v241 = vsel %vm176, %v35, 0
  %v244 = vsel %vm176, %v36, 0
  %v247 = vsel %vm176, %v37, 0
  %v250 = vsel %vm176, %v38, 0
  %v253 = vsel %vm176, %v39, 0
  %v256 = vsel %vm176, %v40, 0
  %v259 = vsel %vm176, %v41, 0
  %v262 = vsel %vm176, %v42, 0
  %v265 = vsel %vm176, %v43, 0
  %v268 = vsel %vm176, %v44, 0
  %v271 = vsel %vm176, %v45, 0
  %v274 = vsel %vm176, %v46, 0
  %v277 = vsel %vm176, %v47, 0
  %v280 = vsel %vm176, %v48, 0
  %v283 = vsel %vm176, %v49, 0
  %v286 = vsel %vm176, %v50, 0
  %v289 = vsel %vm176, %v51, 0
  %v292 = vsel %vm176, %v52, 0
  %v295 = vsel %vm176, %v53, 0
  %v298 = vsel %vm176, %v54, 0
  %v301 = vsel %vm176, %v55, 0
  %v304 = vsel %vm176, %v56, 0
  %v307 = vsel %vm176, %v57, 0
  %v310 = vsel %vm176, %v58, 0
  %v313 = vsel %vm176, %v59, 0
  %v316 = vsel %vm176, %v60, 0
  %v319 = vsel %vm176, %v61, 0
  %v322 = vsel %vm176, %v62, 0
  %v325 = vsel %vm176, %v63, 0
  %v328 = vsel %vm176, %v64, 0
  %v331 = vsel %vm176, %v65, 0
  %v334 = vsel %vm176, %v66, 0
  %v337 = vsel %vm176, %v67, 0
  %v340 = vsel %vm176, %v68, 0
  %v343 = vsel %vm176, %v69, 0
  %v346 = vsel %vm176, %v70, 0
  %v349 = vsel %vm176, %v71, 0
  %v352 = vsel %vm176, %v72, 0
  %v355 = vsel %vm176, %v73, 0
  %v358 = vsel %vm176, %v74, 0
  %v361 = vsel %vm176, %v75, 0
  %v364 = vsel %vm176, %v76, 0
  %v367 = vsel %vm176, %v77, 0
  %v370 = vsel %vm176, %v78, 0
  %v373 = vsel %vm176, %v79, 0
  %v376 = vsel %vm176, %v80, 0
  %v379 = vsel %vm176, %v81, 0
  %v382 = vsel %vm176, %v82, 0
  %v385 = vsel %vm176, %v83, 0
  %v388 = vsel %vm176, %v84, 0
  %v391 = vsel %vm176, %v85, 0
  %v394 = vsel %vm176, %v86, 0
  %v397 = vsel %vm176, %v87, 0
  %v400 = vsel %vm176, %v88, 0
  %v403 = vsel %vm176, %v89, 0
  %v406 = vsel %vm176, %v90, 0
  %v409 = vsel %vm176, %v91, 0
  %v412 = vsel %vm176, %v92, 0
  %v415 = vsel %vm176, %v93, 0
  %v418 = vsel %vm176, %v94, 0
  %v421 = vsel %vm176, %v95, 0
  %v424 = vsel %vm176, %v96, 0
  %v427 = vsel %vm176, %v97, 0
  %v430 = vsel %vm176, %v98, 0
  %v433 = vsel %vm176, %v99, 0
  %v436 = vsel %vm176, %v100, 0
  %v439 = vsel %vm176, %v101, 0
  %v442 = vsel %vm176, %v102, 0
  %v445 = vsel %vm176, %v103, 0
  %v448 = vsel %vm176, %v104, 0
  %v451 = vsel %vm176, %v105, 0
  %v454 = vsel %vm176, %v106, 0
  %v457 = vsel %vm176, %v107, 0
  %v460 = vsel %vm176, %v108, 0
  %v463 = vsel %vm176, %v109, 0
  %v466 = vsel %vm176, %v110, 0
  %v469 = vsel %vm176, %v111, 0
  %v472 = vsel %vm176, %v112, 0
  %v475 = vsel %vm176, %v113, 0
  %v478 = vsel %vm176, %v114, 0
  %v481 = vsel %vm176, %v115, 0
  %v484 = vsel %vm176, %v116, 0
  %v487 = vsel %vm176, %v117, 0
  %v490 = vsel %vm176, %v118, 0
  %v493 = vsel %vm176, %v119, 0
  %v496 = vsel %vm176, %v120, 0
  %v499 = vsel %vm176, %v121, 0
  %v502 = vsel %vm176, %v122, 0
  %v505 = vsel %vm176, %v123, 0
  %v508 = vsel %vm176, %v124, 0
  %v511 = vsel %vm176, %v125, 0
  %v514 = vsel %vm176, %v126, 0
  %v517 = vsel %vm176, %v127, 0
  %v520 = vsel %vm176, %v128, 0
  %v523 = vsel %vm176, %v129, 0
  %v526 = vsel %vm176, %v130, 0
  %v529 = vsel %vm176, %v131, 0
  %v532 = vsel %vm176, %v132, 0
  %v535 = vsel %vm176, %v133, 0
  %v538 = vsel %vm176, %v134, 0
  %v541 = vsel %vm176, %v135, 0
  %v544 = vsel %vm176, %v136, 0
  %v547 = vsel %vm176, %v137, 0
  %v550 = vsel %vm176, %v138, 0
  %v553 = vsel %vm176, %v139, 0
  %v556 = vsel %vm176, %v140, 0
  %v559 = vsel %vm176, %v141, 0
  %v562 = vsel %vm176, %v142, 0
  %v565 = vsel %vm176, %v143, 0
  %v568 = vsel %vm176, %v144, 0
  %v571 = vsel %vm176, %v145, 0
  %v574 = vsel %vm176, %v146, 0
  %v577 = vsel %vm176, %v147, 0
  %v580 = vsel %vm176, %v148, 0
  %v583 = vsel %vm176, %v149, 0
  %v586 = vsel %vm176, %v150, 0
  %v589 = vsel %vm176, %v151, 0
  %v592 = vsel %vm176, %v152, 0
  %v595 = vsel %vm176, %v153, 0
  %v598 = vsel %vm176, %v154, 0
  %v601 = vsel %vm176, %v155, 0
  %v604 = vsel %vm176, %v156, 0
  %v607 = vsel %vm176, %v157, 0
  %v610 = vsel %vm176, %v158, 0
  %v613 = vsel %vm176, %v159, 0
  %v616 = vsel %vm176, %v160, 0
  %v619 = vsel %vm176, %v161, 0
  %v622 = vsel %vm176, %v162, 0
  %v625 = vsel %vm176, %v163, 0
  %v628 = vsel %vm176, %v164, 0
  %v631 = vsel %vm176, %v165, 0
  %v634 = vsel %vm176, %v166, 0
  %v637 = vsel %vm176, %v167, 0
  %v640 = vsel %vm176, %v168, 0
  %v643 = vsel %vm176, %v169, 0
  %vm645 = vcmask 1040384
  %v647 = vsel %vm645, %v171, 0
  %649 = vmatpush.msra.mxu0 0.0
  %650 = vmatpush.msra.mxu0 0.0
  %651 = vmatpush.msra.mxu0 0.0
  %652 = vmatpush.msra.mxu0 0.0
  %653 = vmatpush.msra.mxu0 0.0
  %654 = vmatpush.msra.mxu0 0.0
  %655 = vmatpush.msra.mxu0 0.0
  %656 = vmatpush.msra.mxu0 0.0
  %657 = vmatpush.msra.mxu0 0.0
  %658 = vmatpush.msra.mxu0 0.0
  %659 = vmatpush.msra.mxu0 0.0
  %660 = vmatpush.msra.mxu0 0.0
  %661 = vmatpush.msra.mxu0 0.0
  %662 = vmatpush.msra.mxu0 0.0
  %663 = vmatpush.msra.mxu0 %v647
  %664 = vmatpush.msra.mxu0 %v170
  %665 = vmatmul.f32.gmra.mxu0 %v178
  %v666 = vpop.f32.mrf.mxu0
  %v667 = vadd.f32 %v174, %v666
  %668 = vmatmul.f32.gmra.mxu0 %v181
  %v669 = vpop.f32.mrf.mxu0
  %v670 = vadd.f32 %v174, %v669
  %671 = vmatmul.f32.gmra.mxu0 %v184
  %v672 = vpop.f32.mrf.mxu0
  %v673 = vadd.f32 %v174, %v672
  %674 = vmatmul.f32.gmra.mxu0 %v187
  %v675 = vpop.f32.mrf.mxu0
  %v676 = vadd.f32 %v174, %v675
  %677 = vmatmul.f32.gmra.mxu0 %v190
  %v678 = vpop.f32.mrf.mxu0
  %v679 = vadd.f32 %v174, %v678
  %680 = vmatmul.f32.gmra.mxu0 %v193
  %v681 = vpop.f32.mrf.mxu0
  %v682 = vadd.f32 %v174, %v681
  %683 = vmatmul.f32.gmra.mxu0 %v196
  %v684 = vpop.f32.mrf.mxu0
  %v685 = vadd.f32 %v174, %v684
  %686 = vmatmul.f32.gmra.mxu0 %v199
  %v687 = vpop.f32.mrf.mxu0
  %v688 = vadd.f32 %v174, %v687
  %689 = vmatmul.f32.gmra.mxu0 %v202
  %v690 = vpop.f32.mrf.mxu0
  %v691 = vadd.f32 %v174, %v690
  %692 = vmatmul.f32.gmra.mxu0 %v205
  %v693 = vpop.f32.mrf.mxu0
  %v694 = vadd.f32 %v174, %v693
  %695 = vmatmul.f32.gmra.mxu0 %v208
  %v696 = vpop.f32.mrf.mxu0
  %v697 = vadd.f32 %v174, %v696
  %698 = vmatmul.f32.gmra.mxu0 %v211
  %v699 = vpop.f32.mrf.mxu0
  %v700 = vadd.f32 %v174, %v699
  %701 = vmatmul.f32.gmra.mxu0 %v214
  %v702 = vpop.f32.mrf.mxu0
  %v703 = vadd.f32 %v174, %v702
  %704 = vmatmul.f32.gmra.mxu0 %v217
  %v705 = vpop.f32.mrf.mxu0
  %v706 = vadd.f32 %v174, %v705
  %707 = vmatmul.f32.gmra.mxu0 %v220
  %v708 = vpop.f32.mrf.mxu0
  %v709 = vadd.f32 %v174, %v708
  %710 = vmatmul.f32.gmra.mxu0 %v223
  %v711 = vpop.f32.mrf.mxu0
  %v712 = vadd.f32 %v174, %v711
  %713 = vmatmul.f32.gmra.mxu0 %v226
  %v714 = vpop.f32.mrf.mxu0
  %v715 = vadd.f32 %v174, %v714
  %716 = vmatmul.f32.gmra.mxu0 %v229
  %v717 = vpop.f32.mrf.mxu0
  %v718 = vadd.f32 %v174, %v717
  %719 = vmatmul.f32.gmra.mxu0 %v232
  %v720 = vpop.f32.mrf.mxu0
  %v721 = vadd.f32 %v174, %v720
  %722 = vmatmul.f32.gmra.mxu0 %v235
  %v723 = vpop.f32.mrf.mxu0
  %v724 = vadd.f32 %v174, %v723
  %725 = vmatmul.f32.gmra.mxu0 %v238
  %v726 = vpop.f32.mrf.mxu0
  %v727 = vadd.f32 %v174, %v726
  %728 = vmatmul.f32.gmra.mxu0 %v241
  %v729 = vpop.f32.mrf.mxu0
  %v730 = vadd.f32 %v174, %v729
  %731 = vmatmul.f32.gmra.mxu0 %v244
  %v732 = vpop.f32.mrf.mxu0
  %v733 = vadd.f32 %v174, %v732
  %734 = vmatmul.f32.gmra.mxu0 %v247
  %v735 = vpop.f32.mrf.mxu0
  %v736 = vadd.f32 %v174, %v735
  %737 = vmatmul.f32.gmra.mxu0 %v250
  %v738 = vpop.f32.mrf.mxu0
  %v739 = vadd.f32 %v174, %v738
  %740 = vmatmul.f32.gmra.mxu0 %v253
  %v741 = vpop.f32.mrf.mxu0
  %v742 = vadd.f32 %v174, %v741
  %743 = vmatmul.f32.gmra.mxu0 %v256
  %v744 = vpop.f32.mrf.mxu0
  %v745 = vadd.f32 %v174, %v744
  %746 = vmatmul.f32.gmra.mxu0 %v259
  %v747 = vpop.f32.mrf.mxu0
  %v748 = vadd.f32 %v174, %v747
  %749 = vmatmul.f32.gmra.mxu0 %v262
  %v750 = vpop.f32.mrf.mxu0
  %v751 = vadd.f32 %v174, %v750
  %752 = vmatmul.f32.gmra.mxu0 %v265
  %v753 = vpop.f32.mrf.mxu0
  %v754 = vadd.f32 %v174, %v753
  %755 = vmatmul.f32.gmra.mxu0 %v268
  %v756 = vpop.f32.mrf.mxu0
  %v757 = vadd.f32 %v174, %v756
  %758 = vmatmul.f32.gmra.mxu0 %v271
  %v759 = vpop.f32.mrf.mxu0
  %v760 = vadd.f32 %v174, %v759
  %761 = vmatmul.f32.gmra.mxu0 %v274
  %v762 = vpop.f32.mrf.mxu0
  %v763 = vadd.f32 %v174, %v762
  %764 = vmatmul.f32.gmra.mxu0 %v277
  %v765 = vpop.f32.mrf.mxu0
  %v766 = vadd.f32 %v174, %v765
  %767 = vmatmul.f32.gmra.mxu0 %v280
  %v768 = vpop.f32.mrf.mxu0
  %v769 = vadd.f32 %v174, %v768
  %770 = vmatmul.f32.gmra.mxu0 %v283
  %v771 = vpop.f32.mrf.mxu0
  %v772 = vadd.f32 %v174, %v771
  %773 = vmatmul.f32.gmra.mxu0 %v286
  %v774 = vpop.f32.mrf.mxu0
  %v775 = vadd.f32 %v174, %v774
  %776 = vmatmul.f32.gmra.mxu0 %v289
  %v777 = vpop.f32.mrf.mxu0
  %v778 = vadd.f32 %v174, %v777
  %779 = vmatmul.f32.gmra.mxu0 %v292
  %v780 = vpop.f32.mrf.mxu0
  %v781 = vadd.f32 %v174, %v780
  %782 = vmatmul.f32.gmra.mxu0 %v295
  %v783 = vpop.f32.mrf.mxu0
  %v784 = vadd.f32 %v174, %v783
  %785 = vmatmul.f32.gmra.mxu0 %v298
  %v786 = vpop.f32.mrf.mxu0
  %v787 = vadd.f32 %v174, %v786
  %788 = vmatmul.f32.gmra.mxu0 %v301
  %v789 = vpop.f32.mrf.mxu0
  %v790 = vadd.f32 %v174, %v789
  %791 = vmatmul.f32.gmra.mxu0 %v304
  %v792 = vpop.f32.mrf.mxu0
  %v793 = vadd.f32 %v174, %v792
  %794 = vmatmul.f32.gmra.mxu0 %v307
  %v795 = vpop.f32.mrf.mxu0
  %v796 = vadd.f32 %v174, %v795
  %797 = vmatmul.f32.gmra.mxu0 %v310
  %v798 = vpop.f32.mrf.mxu0
  %v799 = vadd.f32 %v174, %v798
  %800 = vmatmul.f32.gmra.mxu0 %v313
  %v801 = vpop.f32.mrf.mxu0
  %v802 = vadd.f32 %v174, %v801
  %803 = vmatmul.f32.gmra.mxu0 %v316
  %v804 = vpop.f32.mrf.mxu0
  %v805 = vadd.f32 %v174, %v804
  %806 = vmatmul.f32.gmra.mxu0 %v319
  %v807 = vpop.f32.mrf.mxu0
  %v808 = vadd.f32 %v174, %v807
  %809 = vmatmul.f32.gmra.mxu0 %v322
  %v810 = vpop.f32.mrf.mxu0
  %v811 = vadd.f32 %v174, %v810
  %812 = vmatmul.f32.gmra.mxu0 %v325
  %v813 = vpop.f32.mrf.mxu0
  %v814 = vadd.f32 %v174, %v813
  %815 = vmatmul.f32.gmra.mxu0 %v328
  %v816 = vpop.f32.mrf.mxu0
  %v817 = vadd.f32 %v174, %v816
  %818 = vmatmul.f32.gmra.mxu0 %v331
  %v819 = vpop.f32.mrf.mxu0
  %v820 = vadd.f32 %v174, %v819
  %821 = vmatmul.f32.gmra.mxu0 %v334
  %v822 = vpop.f32.mrf.mxu0
  %v823 = vadd.f32 %v174, %v822
  %824 = vmatmul.f32.gmra.mxu0 %v337
  %v825 = vpop.f32.mrf.mxu0
  %v826 = vadd.f32 %v174, %v825
  %827 = vmatmul.f32.gmra.mxu0 %v340
  %v828 = vpop.f32.mrf.mxu0
  %v829 = vadd.f32 %v174, %v828
  %830 = vmatmul.f32.gmra.mxu0 %v343
  %v831 = vpop.f32.mrf.mxu0
  %v832 = vadd.f32 %v174, %v831
  %833 = vmatmul.f32.gmra.mxu0 %v346
  %v834 = vpop.f32.mrf.mxu0
  %v835 = vadd.f32 %v174, %v834
  %836 = vmatmul.f32.gmra.mxu0 %v349
  %v837 = vpop.f32.mrf.mxu0
  %v838 = vadd.f32 %v174, %v837
  %839 = vmatmul.f32.gmra.mxu0 %v352
  %v840 = vpop.f32.mrf.mxu0
  %v841 = vadd.f32 %v174, %v840
  %842 = vmatmul.f32.gmra.mxu0 %v355
  %v843 = vpop.f32.mrf.mxu0
  %v844 = vadd.f32 %v174, %v843
  %845 = vmatmul.f32.gmra.mxu0 %v358
  %v846 = vpop.f32.mrf.mxu0
  %v847 = vadd.f32 %v174, %v846
  %848 = vmatmul.f32.gmra.mxu0 %v361
  %v849 = vpop.f32.mrf.mxu0
  %v850 = vadd.f32 %v174, %v849
  %851 = vmatmul.f32.gmra.mxu0 %v364
  %v852 = vpop.f32.mrf.mxu0
  %v853 = vadd.f32 %v174, %v852
  %854 = vmatmul.f32.gmra.mxu0 %v367
  %v855 = vpop.f32.mrf.mxu0
  %v856 = vadd.f32 %v174, %v855
  %857 = vmatmul.f32.gmra.mxu0 %v370
  %v858 = vpop.f32.mrf.mxu0
  %v859 = vadd.f32 %v174, %v858
  %860 = vmatmul.f32.gmra.mxu0 %v373
  %v861 = vpop.f32.mrf.mxu0
  %v862 = vadd.f32 %v174, %v861
  %863 = vmatmul.f32.gmra.mxu0 %v376
  %v864 = vpop.f32.mrf.mxu0
  %v865 = vadd.f32 %v174, %v864
  %866 = vmatmul.f32.gmra.mxu0 %v379
  %v867 = vpop.f32.mrf.mxu0
  %v868 = vadd.f32 %v174, %v867
  %869 = vmatmul.f32.gmra.mxu0 %v382
  %v870 = vpop.f32.mrf.mxu0
  %v871 = vadd.f32 %v174, %v870
  %872 = vmatmul.f32.gmra.mxu0 %v385
  %v873 = vpop.f32.mrf.mxu0
  %v874 = vadd.f32 %v174, %v873
  %875 = vmatmul.f32.gmra.mxu0 %v388
  %v876 = vpop.f32.mrf.mxu0
  %v877 = vadd.f32 %v174, %v876
  %878 = vmatmul.f32.gmra.mxu0 %v391
  %v879 = vpop.f32.mrf.mxu0
  %v880 = vadd.f32 %v174, %v879
  %881 = vmatmul.f32.gmra.mxu0 %v394
  %v882 = vpop.f32.mrf.mxu0
  %v883 = vadd.f32 %v174, %v882
  %884 = vmatmul.f32.gmra.mxu0 %v397
  %v885 = vpop.f32.mrf.mxu0
  %v886 = vadd.f32 %v174, %v885
  %887 = vmatmul.f32.gmra.mxu0 %v400
  %v888 = vpop.f32.mrf.mxu0
  %v889 = vadd.f32 %v174, %v888
  %890 = vmatmul.f32.gmra.mxu0 %v403
  %v891 = vpop.f32.mrf.mxu0
  %v892 = vadd.f32 %v174, %v891
  %893 = vmatmul.f32.gmra.mxu0 %v406
  %v894 = vpop.f32.mrf.mxu0
  %v895 = vadd.f32 %v174, %v894
  %896 = vmatmul.f32.gmra.mxu0 %v409
  %v897 = vpop.f32.mrf.mxu0
  %v898 = vadd.f32 %v174, %v897
  %899 = vmatmul.f32.gmra.mxu0 %v412
  %v900 = vpop.f32.mrf.mxu0
  %v901 = vadd.f32 %v174, %v900
  %902 = vmatmul.f32.gmra.mxu0 %v415
  %v903 = vpop.f32.mrf.mxu0
  %v904 = vadd.f32 %v174, %v903
  %905 = vmatmul.f32.gmra.mxu0 %v418
  %v906 = vpop.f32.mrf.mxu0
  %v907 = vadd.f32 %v174, %v906
  %908 = vmatmul.f32.gmra.mxu0 %v421
  %v909 = vpop.f32.mrf.mxu0
  %v910 = vadd.f32 %v174, %v909
  %911 = vmatmul.f32.gmra.mxu0 %v424
  %v912 = vpop.f32.mrf.mxu0
  %v913 = vadd.f32 %v174, %v912
  %914 = vmatmul.f32.gmra.mxu0 %v427
  %v915 = vpop.f32.mrf.mxu0
  %v916 = vadd.f32 %v174, %v915
  %917 = vmatmul.f32.gmra.mxu0 %v430
  %v918 = vpop.f32.mrf.mxu0
  %v919 = vadd.f32 %v174, %v918
  %920 = vmatmul.f32.gmra.mxu0 %v433
  %v921 = vpop.f32.mrf.mxu0
  %v922 = vadd.f32 %v174, %v921
  %923 = vmatmul.f32.gmra.mxu0 %v436
  %v924 = vpop.f32.mrf.mxu0
  %v925 = vadd.f32 %v174, %v924
  %926 = vmatmul.f32.gmra.mxu0 %v439
  %v927 = vpop.f32.mrf.mxu0
  %v928 = vadd.f32 %v174, %v927
  %929 = vmatmul.f32.gmra.mxu0 %v442
  %v930 = vpop.f32.mrf.mxu0
  %v931 = vadd.f32 %v174, %v930
  %932 = vmatmul.f32.gmra.mxu0 %v445
  %v933 = vpop.f32.mrf.mxu0
  %v934 = vadd.f32 %v174, %v933
  %935 = vmatmul.f32.gmra.mxu0 %v448
  %v936 = vpop.f32.mrf.mxu0
  %v937 = vadd.f32 %v174, %v936
  %938 = vmatmul.f32.gmra.mxu0 %v451
  %v939 = vpop.f32.mrf.mxu0
  %v940 = vadd.f32 %v174, %v939
  %941 = vmatmul.f32.gmra.mxu0 %v454
  %v942 = vpop.f32.mrf.mxu0
  %v943 = vadd.f32 %v174, %v942
  %944 = vmatmul.f32.gmra.mxu0 %v457
  %v945 = vpop.f32.mrf.mxu0
  %v946 = vadd.f32 %v174, %v945
  %947 = vmatmul.f32.gmra.mxu0 %v460
  %v948 = vpop.f32.mrf.mxu0
  %v949 = vadd.f32 %v174, %v948
  %950 = vmatmul.f32.gmra.mxu0 %v463
  %v951 = vpop.f32.mrf.mxu0
  %v952 = vadd.f32 %v174, %v951
  %953 = vmatmul.f32.gmra.mxu0 %v466
  %v954 = vpop.f32.mrf.mxu0
  %v955 = vadd.f32 %v174, %v954
  %956 = vmatmul.f32.gmra.mxu0 %v469
  %v957 = vpop.f32.mrf.mxu0
  %v958 = vadd.f32 %v174, %v957
  %959 = vmatmul.f32.gmra.mxu0 %v472
  %v960 = vpop.f32.mrf.mxu0
  %v961 = vadd.f32 %v174, %v960
  %962 = vmatmul.f32.gmra.mxu0 %v475
  %v963 = vpop.f32.mrf.mxu0
  %v964 = vadd.f32 %v174, %v963
  %965 = vmatmul.f32.gmra.mxu0 %v478
  %v966 = vpop.f32.mrf.mxu0
  %v967 = vadd.f32 %v174, %v966
  %968 = vmatmul.f32.gmra.mxu0 %v481
  %v969 = vpop.f32.mrf.mxu0
  %v970 = vadd.f32 %v174, %v969
  %971 = vmatmul.f32.gmra.mxu0 %v484
  %v972 = vpop.f32.mrf.mxu0
  %v973 = vadd.f32 %v174, %v972
  %974 = vmatmul.f32.gmra.mxu0 %v487
  %v975 = vpop.f32.mrf.mxu0
  %v976 = vadd.f32 %v174, %v975
  %977 = vmatmul.f32.gmra.mxu0 %v490
  %v978 = vpop.f32.mrf.mxu0
  %v979 = vadd.f32 %v174, %v978
  %980 = vmatmul.f32.gmra.mxu0 %v493
  %v981 = vpop.f32.mrf.mxu0
  %v982 = vadd.f32 %v174, %v981
  %983 = vmatmul.f32.gmra.mxu0 %v496
  %v984 = vpop.f32.mrf.mxu0
  %v985 = vadd.f32 %v174, %v984
  %986 = vmatmul.f32.gmra.mxu0 %v499
  %v987 = vpop.f32.mrf.mxu0
  %v988 = vadd.f32 %v174, %v987
  %989 = vmatmul.f32.gmra.mxu0 %v502
  %v990 = vpop.f32.mrf.mxu0
  %v991 = vadd.f32 %v174, %v990
  %992 = vmatmul.f32.gmra.mxu0 %v505
  %v993 = vpop.f32.mrf.mxu0
  %v994 = vadd.f32 %v174, %v993
  %995 = vmatmul.f32.gmra.mxu0 %v508
  %v996 = vpop.f32.mrf.mxu0
  %v997 = vadd.f32 %v174, %v996
  %998 = vmatmul.f32.gmra.mxu0 %v511
  %v999 = vpop.f32.mrf.mxu0
  %v1000 = vadd.f32 %v174, %v999
  %1001 = vmatmul.f32.gmra.mxu0 %v514
  %v1002 = vpop.f32.mrf.mxu0
  %v1003 = vadd.f32 %v174, %v1002
  %1004 = vmatmul.f32.gmra.mxu0 %v517
  %v1005 = vpop.f32.mrf.mxu0
  %v1006 = vadd.f32 %v174, %v1005
  %1007 = vmatmul.f32.gmra.mxu0 %v520
  %v1008 = vpop.f32.mrf.mxu0
  %v1009 = vadd.f32 %v174, %v1008
  %1010 = vmatmul.f32.gmra.mxu0 %v523
  %v1011 = vpop.f32.mrf.mxu0
  %v1012 = vadd.f32 %v174, %v1011
  %1013 = vmatmul.f32.gmra.mxu0 %v526
  %v1014 = vpop.f32.mrf.mxu0
  %v1015 = vadd.f32 %v174, %v1014
  %1016 = vmatmul.f32.gmra.mxu0 %v529
  %v1017 = vpop.f32.mrf.mxu0
  %v1018 = vadd.f32 %v174, %v1017
  %1019 = vmatmul.f32.gmra.mxu0 %v532
  %v1020 = vpop.f32.mrf.mxu0
  %v1021 = vadd.f32 %v174, %v1020
  %1022 = vmatmul.f32.gmra.mxu0 %v535
  %v1023 = vpop.f32.mrf.mxu0
  %v1024 = vadd.f32 %v174, %v1023
  %1025 = vmatmul.f32.gmra.mxu0 %v538
  %v1026 = vpop.f32.mrf.mxu0
  %v1027 = vadd.f32 %v174, %v1026
  %1028 = vmatmul.f32.gmra.mxu0 %v541
  %v1029 = vpop.f32.mrf.mxu0
  %v1030 = vadd.f32 %v174, %v1029
  %1031 = vmatmul.f32.gmra.mxu0 %v544
  %v1032 = vpop.f32.mrf.mxu0
  %v1033 = vadd.f32 %v174, %v1032
  %1034 = vmatmul.f32.gmra.mxu0 %v547
  %v1035 = vpop.f32.mrf.mxu0
  %v1036 = vadd.f32 %v174, %v1035
  %1037 = vmatmul.f32.gmra.mxu0 %v550
  %v1038 = vpop.f32.mrf.mxu0
  %v1039 = vadd.f32 %v174, %v1038
  %1040 = vmatmul.f32.gmra.mxu0 %v553
  %v1041 = vpop.f32.mrf.mxu0
  %v1042 = vadd.f32 %v174, %v1041
  %1043 = vmatmul.f32.gmra.mxu0 %v556
  %v1044 = vpop.f32.mrf.mxu0
  %v1045 = vadd.f32 %v174, %v1044
  %1046 = vmatmul.f32.gmra.mxu0 %v559
  %v1047 = vpop.f32.mrf.mxu0
  %v1048 = vadd.f32 %v174, %v1047
  %1049 = vmatmul.f32.gmra.mxu0 %v562
  %v1050 = vpop.f32.mrf.mxu0
  %v1051 = vadd.f32 %v174, %v1050
  %1052 = vmatmul.f32.gmra.mxu0 %v565
  %v1053 = vpop.f32.mrf.mxu0
  %v1054 = vadd.f32 %v174, %v1053
  %1055 = vmatmul.f32.gmra.mxu0 %v568
  %v1056 = vpop.f32.mrf.mxu0
  %v1057 = vadd.f32 %v174, %v1056
  %1058 = vmatmul.f32.gmra.mxu0 %v571
  %v1059 = vpop.f32.mrf.mxu0
  %v1060 = vadd.f32 %v174, %v1059
  %1061 = vmatmul.f32.gmra.mxu0 %v574
  %v1062 = vpop.f32.mrf.mxu0
  %v1063 = vadd.f32 %v174, %v1062
  %1064 = vmatmul.f32.gmra.mxu0 %v577
  %v1065 = vpop.f32.mrf.mxu0
  %v1066 = vadd.f32 %v174, %v1065
  %1067 = vmatmul.f32.gmra.mxu0 %v580
  %v1068 = vpop.f32.mrf.mxu0
  %v1069 = vadd.f32 %v174, %v1068
  %1070 = vmatmul.f32.gmra.mxu0 %v583
  %v1071 = vpop.f32.mrf.mxu0
  %v1072 = vadd.f32 %v174, %v1071
  %1073 = vmatmul.f32.gmra.mxu0 %v586
  %v1074 = vpop.f32.mrf.mxu0
  %v1075 = vadd.f32 %v174, %v1074
  %1076 = vmatmul.f32.gmra.mxu0 %v589
  %v1077 = vpop.f32.mrf.mxu0
  %v1078 = vadd.f32 %v174, %v1077
  %1079 = vmatmul.f32.gmra.mxu0 %v592
  %v1080 = vpop.f32.mrf.mxu0
  %v1081 = vadd.f32 %v174, %v1080
  %1082 = vmatmul.f32.gmra.mxu0 %v595
  %v1083 = vpop.f32.mrf.mxu0
  %v1084 = vadd.f32 %v174, %v1083
  %1085 = vmatmul.f32.gmra.mxu0 %v598
  %v1086 = vpop.f32.mrf.mxu0
  %v1087 = vadd.f32 %v174, %v1086
  %1088 = vmatmul.f32.gmra.mxu0 %v601
  %v1089 = vpop.f32.mrf.mxu0
  %v1090 = vadd.f32 %v174, %v1089
  %1091 = vmatmul.f32.gmra.mxu0 %v604
  %v1092 = vpop.f32.mrf.mxu0
  %v1093 = vadd.f32 %v174, %v1092
  %1094 = vmatmul.f32.gmra.mxu0 %v607
  %v1095 = vpop.f32.mrf.mxu0
  %v1096 = vadd.f32 %v174, %v1095
  %1097 = vmatmul.f32.gmra.mxu0 %v610
  %v1098 = vpop.f32.mrf.mxu0
  %v1099 = vadd.f32 %v174, %v1098
  %1100 = vmatmul.f32.gmra.mxu0 %v613
  %v1101 = vpop.f32.mrf.mxu0
  %v1102 = vadd.f32 %v174, %v1101
  %1103 = vmatmul.f32.gmra.mxu0 %v616
  %v1104 = vpop.f32.mrf.mxu0
  %v1105 = vadd.f32 %v174, %v1104
  %1106 = vmatmul.f32.gmra.mxu0 %v619
  %v1107 = vpop.f32.mrf.mxu0
  %v1108 = vadd.f32 %v174, %v1107
  %1109 = vmatmul.f32.gmra.mxu0 %v622
  %v1110 = vpop.f32.mrf.mxu0
  %v1111 = vadd.f32 %v174, %v1110
  %1112 = vmatmul.f32.gmra.mxu0 %v625
  %v1113 = vpop.f32.mrf.mxu0
  %v1114 = vadd.f32 %v174, %v1113
  %1115 = vmatmul.f32.gmra.mxu0 %v628
  %v1116 = vpop.f32.mrf.mxu0
  %v1117 = vadd.f32 %v174, %v1116
  %1118 = vmatmul.f32.gmra.mxu0 %v631
  %v1119 = vpop.f32.mrf.mxu0
  %v1120 = vadd.f32 %v174, %v1119
  %1121 = vmatmul.f32.gmra.mxu0 %v634
  %v1122 = vpop.f32.mrf.mxu0
  %v1123 = vadd.f32 %v174, %v1122
  %1124 = vmatmul.f32.gmra.mxu0 %v637
  %v1125 = vpop.f32.mrf.mxu0
  %v1126 = vadd.f32 %v174, %v1125
  %1127 = vmatmul.f32.gmra.mxu0 %v640
  %v1128 = vpop.f32.mrf.mxu0
  %v1129 = vadd.f32 %v174, %v1128
  %1130 = vmatmul.f32.gmra.mxu0 %v643
  %v1131 = vpop.f32.mrf.mxu0
  %v1132 = vadd.f32 %v174, %v1131
  %1133 = vdwg.mxu0
  %v1134 = vmax.f32 %v667, 0.0
  %v1135 = vmax.f32 %v670, 0.0
  %v1136 = vmax.f32 %v673, 0.0
  %v1137 = vmax.f32 %v676, 0.0
  %v1138 = vmax.f32 %v679, 0.0
  %v1139 = vmax.f32 %v682, 0.0
  %v1140 = vmax.f32 %v685, 0.0
  %v1141 = vmax.f32 %v688, 0.0
  %v1142 = vmax.f32 %v691, 0.0
  %v1143 = vmax.f32 %v694, 0.0
  %v1144 = vmax.f32 %v697, 0.0
  %v1145 = vmax.f32 %v700, 0.0
  %v1146 = vmax.f32 %v703, 0.0
  %v1147 = vmax.f32 %v706, 0.0
  %v1148 = vmax.f32 %v709, 0.0
  %v1149 = vmax.f32 %v712, 0.0
  %v1150 = vmax.f32 %v715, 0.0
  %v1151 = vmax.f32 %v718, 0.0
  %v1152 = vmax.f32 %v721, 0.0
  %v1153 = vmax.f32 %v724, 0.0
  %v1154 = vmax.f32 %v727, 0.0
  %v1155 = vmax.f32 %v730, 0.0
  %v1156 = vmax.f32 %v733, 0.0
  %v1157 = vmax.f32 %v736, 0.0
  %v1158 = vmax.f32 %v739, 0.0
  %v1159 = vmax.f32 %v742, 0.0
  %v1160 = vmax.f32 %v745, 0.0
  %v1161 = vmax.f32 %v748, 0.0
  %v1162 = vmax.f32 %v751, 0.0
  %v1163 = vmax.f32 %v754, 0.0
  %v1164 = vmax.f32 %v757, 0.0
  %v1165 = vmax.f32 %v760, 0.0
  %v1166 = vmax.f32 %v763, 0.0
  %v1167 = vmax.f32 %v766, 0.0
  %v1168 = vmax.f32 %v769, 0.0
  %v1169 = vmax.f32 %v772, 0.0
  %v1170 = vmax.f32 %v775, 0.0
  %v1171 = vmax.f32 %v778, 0.0
  %v1172 = vmax.f32 %v781, 0.0
  %v1173 = vmax.f32 %v784, 0.0
  %v1174 = vmax.f32 %v787, 0.0
  %v1175 = vmax.f32 %v790, 0.0
  %v1176 = vmax.f32 %v793, 0.0
  %v1177 = vmax.f32 %v796, 0.0
  %v1178 = vmax.f32 %v799, 0.0
  %v1179 = vmax.f32 %v802, 0.0
  %v1180 = vmax.f32 %v805, 0.0
  %v1181 = vmax.f32 %v808, 0.0
  %v1182 = vmax.f32 %v811, 0.0
  %v1183 = vmax.f32 %v814, 0.0
  %v1184 = vmax.f32 %v817, 0.0
  %v1185 = vmax.f32 %v820, 0.0
  %v1186 = vmax.f32 %v823, 0.0
  %v1187 = vmax.f32 %v826, 0.0
  %v1188 = vmax.f32 %v829, 0.0
  %v1189 = vmax.f32 %v832, 0.0
  %v1190 = vmax.f32 %v835, 0.0
  %v1191 = vmax.f32 %v838, 0.0
  %v1192 = vmax.f32 %v841, 0.0
  %v1193 = vmax.f32 %v844, 0.0
  %v1194 = vmax.f32 %v847, 0.0
  %v1195 = vmax.f32 %v850, 0.0
  %v1196 = vmax.f32 %v853, 0.0
  %v1197 = vmax.f32 %v856, 0.0
  %v1198 = vmax.f32 %v859, 0.0
  %v1199 = vmax.f32 %v862, 0.0
  %v1200 = vmax.f32 %v865, 0.0
  %v1201 = vmax.f32 %v868, 0.0
  %v1202 = vmax.f32 %v871, 0.0
  %v1203 = vmax.f32 %v874, 0.0
  %v1204 = vmax.f32 %v877, 0.0
  %v1205 = vmax.f32 %v880, 0.0
  %v1206 = vmax.f32 %v883, 0.0
  %v1207 = vmax.f32 %v886, 0.0
  %v1208 = vmax.f32 %v889, 0.0
  %v1209 = vmax.f32 %v892, 0.0
  %v1210 = vmax.f32 %v895, 0.0
  %v1211 = vmax.f32 %v898, 0.0
  %v1212 = vmax.f32 %v901, 0.0
  %v1213 = vmax.f32 %v904, 0.0
  %v1214 = vmax.f32 %v907, 0.0
  %v1215 = vmax.f32 %v910, 0.0
  %v1216 = vmax.f32 %v913, 0.0
  %v1217 = vmax.f32 %v916, 0.0
  %v1218 = vmax.f32 %v919, 0.0
  %v1219 = vmax.f32 %v922, 0.0
  %v1220 = vmax.f32 %v925, 0.0
  %v1221 = vmax.f32 %v928, 0.0
  %v1222 = vmax.f32 %v931, 0.0
  %v1223 = vmax.f32 %v934, 0.0
  %v1224 = vmax.f32 %v937, 0.0
  %v1225 = vmax.f32 %v940, 0.0
  %v1226 = vmax.f32 %v943, 0.0
  %v1227 = vmax.f32 %v946, 0.0
  %v1228 = vmax.f32 %v949, 0.0
  %v1229 = vmax.f32 %v952, 0.0
  %v1230 = vmax.f32 %v955, 0.0
  %v1231 = vmax.f32 %v958, 0.0
  %v1232 = vmax.f32 %v961, 0.0
  %v1233 = vmax.f32 %v964, 0.0
  %v1234 = vmax.f32 %v967, 0.0
  %v1235 = vmax.f32 %v970, 0.0
  %v1236 = vmax.f32 %v973, 0.0
  %v1237 = vmax.f32 %v976, 0.0
  %v1238 = vmax.f32 %v979, 0.0
  %v1239 = vmax.f32 %v982, 0.0
  %v1240 = vmax.f32 %v985, 0.0
  %v1241 = vmax.f32 %v988, 0.0
  %v1242 = vmax.f32 %v991, 0.0
  %v1243 = vmax.f32 %v994, 0.0
  %v1244 = vmax.f32 %v997, 0.0
  %v1245 = vmax.f32 %v1000, 0.0
  %v1246 = vmax.f32 %v1003, 0.0
  %v1247 = vmax.f32 %v1006, 0.0
  %v1248 = vmax.f32 %v1009, 0.0
  %v1249 = vmax.f32 %v1012, 0.0
  %v1250 = vmax.f32 %v1015, 0.0
  %v1251 = vmax.f32 %v1018, 0.0
  %v1252 = vmax.f32 %v1021, 0.0
  %v1253 = vmax.f32 %v1024, 0.0
  %v1254 = vmax.f32 %v1027, 0.0
  %v1255 = vmax.f32 %v1030, 0.0
  %v1256 = vmax.f32 %v1033, 0.0
  %v1257 = vmax.f32 %v1036, 0.0
  %v1258 = vmax.f32 %v1039, 0.0
  %v1259 = vmax.f32 %v1042, 0.0
  %v1260 = vmax.f32 %v1045, 0.0
  %v1261 = vmax.f32 %v1048, 0.0
  %v1262 = vmax.f32 %v1051, 0.0
  %v1263 = vmax.f32 %v1054, 0.0
  %v1264 = vmax.f32 %v1057, 0.0
  %v1265 = vmax.f32 %v1060, 0.0
  %v1266 = vmax.f32 %v1063, 0.0
  %v1267 = vmax.f32 %v1066, 0.0
  %v1268 = vmax.f32 %v1069, 0.0
  %v1269 = vmax.f32 %v1072, 0.0
  %v1270 = vmax.f32 %v1075, 0.0
  %v1271 = vmax.f32 %v1078, 0.0
  %v1272 = vmax.f32 %v1081, 0.0
  %v1273 = vmax.f32 %v1084, 0.0
  %v1274 = vmax.f32 %v1087, 0.0
  %v1275 = vmax.f32 %v1090, 0.0
  %v1276 = vmax.f32 %v1093, 0.0
  %v1277 = vmax.f32 %v1096, 0.0
  %v1278 = vmax.f32 %v1099, 0.0
  %v1279 = vmax.f32 %v1102, 0.0
  %v1280 = vmax.f32 %v1105, 0.0
  %v1281 = vmax.f32 %v1108, 0.0
  %v1282 = vmax.f32 %v1111, 0.0
  %v1283 = vmax.f32 %v1114, 0.0
  %v1284 = vmax.f32 %v1117, 0.0
  %v1285 = vmax.f32 %v1120, 0.0
  %v1286 = vmax.f32 %v1123, 0.0
  %v1287 = vmax.f32 %v1126, 0.0
  %v1288 = vmax.f32 %v1129, 0.0
  %v1289 = vmax.f32 %v1132, 0.0
  %vm1290 = vcmask 130048
  %1291 = vst.msk [vmem:[%s3] sm:$0xff] %vm1290, %v1134
  %1292 = vst.msk [vmem:[%s3 + $0x8] sm:$0xff] %vm1290, %v1135
  %1293 = vst.msk [vmem:[%s3 + $0x10] sm:$0xff] %vm1290, %v1136
  %1294 = vst.msk [vmem:[%s3 + $0x18] sm:$0xff] %vm1290, %v1137
  %1295 = vst.msk [vmem:[%s3 + $0x20] sm:$0xff] %vm1290, %v1138
  %1296 = vst.msk [vmem:[%s3 + $0x28] sm:$0xff] %vm1290, %v1139
  %1297 = vst.msk [vmem:[%s3 + $0x30] sm:$0xff] %vm1290, %v1140
  %1298 = vst.msk [vmem:[%s3 + $0x38] sm:$0xff] %vm1290, %v1141
  %1299 = vst.msk [vmem:[%s3 + $0x40] sm:$0xff] %vm1290, %v1142
  %1300 = vst.msk [vmem:[%s3 + $0x48] sm:$0xff] %vm1290, %v1143
  %1301 = vst.msk [vmem:[%s3 + $0x50] sm:$0xff] %vm1290, %v1144
  %1302 = vst.msk [vmem:[%s3 + $0x58] sm:$0xff] %vm1290, %v1145
  %1303 = vst.msk [vmem:[%s3 + $0x60] sm:$0xff] %vm1290, %v1146
  %1304 = vst.msk [vmem:[%s3 + $0x68] sm:$0xff] %vm1290, %v1147
  %1305 = vst.msk [vmem:[%s3 + $0x70] sm:$0xff] %vm1290, %v1148
  %1306 = vst.msk [vmem:[%s3 + $0x78] sm:$0xff] %vm1290, %v1149
  %1307 = vst.msk [vmem:[%s3 + $0x80] sm:$0xff] %vm1290, %v1150
  %1308 = vst.msk [vmem:[%s3 + $0x88] sm:$0xff] %vm1290, %v1151
  %1309 = vst.msk [vmem:[%s3 + $0x90] sm:$0xff] %vm1290, %v1152
  %1310 = vst.msk [vmem:[%s3 + $0x98] sm:$0xff] %vm1290, %v1153
  %1311 = vst.msk [vmem:[%s3 + $0xa0] sm:$0xff] %vm1290, %v1154
  %1312 = vst.msk [vmem:[%s3 + $0xa8] sm:$0xff] %vm1290, %v1155
  %1313 = vst.msk [vmem:[%s3 + $0xb0] sm:$0xff] %vm1290, %v1156
  %1314 = vst.msk [vmem:[%s3 + $0xb8] sm:$0xff] %vm1290, %v1157
  %1315 = vst.msk [vmem:[%s3 + $0xc0] sm:$0xff] %vm1290, %v1158
  %1316 = vst.msk [vmem:[%s3 + $0xc8] sm:$0xff] %vm1290, %v1159
  %1317 = vst.msk [vmem:[%s3 + $0xd0] sm:$0xff] %vm1290, %v1160
  %1318 = vst.msk [vmem:[%s3 + $0xd8] sm:$0xff] %vm1290, %v1161
  %1319 = vst.msk [vmem:[%s3 + $0xe0] sm:$0xff] %vm1290, %v1162
  %1320 = vst.msk [vmem:[%s3 + $0xe8] sm:$0xff] %vm1290, %v1163
  %1321 = vst.msk [vmem:[%s3 + $0xf0] sm:$0xff] %vm1290, %v1164
  %1322 = vst.msk [vmem:[%s3 + $0xf8] sm:$0xff] %vm1290, %v1165
  %1323 = vst.msk [vmem:[%s3 + $0x100] sm:$0xff] %vm1290, %v1166
  %1324 = vst.msk [vmem:[%s3 + $0x108] sm:$0xff] %vm1290, %v1167
  %1325 = vst.msk [vmem:[%s3 + $0x110] sm:$0xff] %vm1290, %v1168
  %1326 = vst.msk [vmem:[%s3 + $0x118] sm:$0xff] %vm1290, %v1169
  %1327 = vst.msk [vmem:[%s3 + $0x120] sm:$0xff] %vm1290, %v1170
  %1328 = vst.msk [vmem:[%s3 + $0x128] sm:$0xff] %vm1290, %v1171
  %1329 = vst.msk [vmem:[%s3 + $0x130] sm:$0xff] %vm1290, %v1172
  %1330 = vst.msk [vmem:[%s3 + $0x138] sm:$0xff] %vm1290, %v1173
  %1331 = vst.msk [vmem:[%s3 + $0x140] sm:$0xff] %vm1290, %v1174
  %1332 = vst.msk [vmem:[%s3 + $0x148] sm:$0xff] %vm1290, %v1175
  %1333 = vst.msk [vmem:[%s3 + $0x150] sm:$0xff] %vm1290, %v1176
  %1334 = vst.msk [vmem:[%s3 + $0x158] sm:$0xff] %vm1290, %v1177
  %1335 = vst.msk [vmem:[%s3 + $0x160] sm:$0xff] %vm1290, %v1178
  %1336 = vst.msk [vmem:[%s3 + $0x168] sm:$0xff] %vm1290, %v1179
  %1337 = vst.msk [vmem:[%s3 + $0x170] sm:$0xff] %vm1290, %v1180
  %1338 = vst.msk [vmem:[%s3 + $0x178] sm:$0xff] %vm1290, %v1181
  %1339 = vst.msk [vmem:[%s3 + $0x180] sm:$0xff] %vm1290, %v1182
  %1340 = vst.msk [vmem:[%s3 + $0x188] sm:$0xff] %vm1290, %v1183
  %1341 = vst.msk [vmem:[%s3 + $0x190] sm:$0xff] %vm1290, %v1184
  %1342 = vst.msk [vmem:[%s3 + $0x198] sm:$0xff] %vm1290, %v1185
  %1343 = vst.msk [vmem:[%s3 + $0x1a0] sm:$0xff] %vm1290, %v1186
  %1344 = vst.msk [vmem:[%s3 + $0x1a8] sm:$0xff] %vm1290, %v1187
  %1345 = vst.msk [vmem:[%s3 + $0x1b0] sm:$0xff] %vm1290, %v1188
  %1346 = vst.msk [vmem:[%s3 + $0x1b8] sm:$0xff] %vm1290, %v1189
  %1347 = vst.msk [vmem:[%s3 + $0x1c0] sm:$0xff] %vm1290, %v1190
  %1348 = vst.msk [vmem:[%s3 + $0x1c8] sm:$0xff] %vm1290, %v1191
  %1349 = vst.msk [vmem:[%s3 + $0x1d0] sm:$0xff] %vm1290, %v1192
  %1350 = vst.msk [vmem:[%s3 + $0x1d8] sm:$0xff] %vm1290, %v1193
  %1351 = vst.msk [vmem:[%s3 + $0x1e0] sm:$0xff] %vm1290, %v1194
  %1352 = vst.msk [vmem:[%s3 + $0x1e8] sm:$0xff] %vm1290, %v1195
  %1353 = vst.msk [vmem:[%s3 + $0x1f0] sm:$0xff] %vm1290, %v1196
  %1354 = vst.msk [vmem:[%s3 + $0x1f8] sm:$0xff] %vm1290, %v1197
  %1355 = vst.msk [vmem:[%s3 + $0x200] sm:$0xff] %vm1290, %v1198
  %1356 = vst.msk [vmem:[%s3 + $0x208] sm:$0xff] %vm1290, %v1199
  %1357 = vst.msk [vmem:[%s3 + $0x210] sm:$0xff] %vm1290, %v1200
  %1358 = vst.msk [vmem:[%s3 + $0x218] sm:$0xff] %vm1290, %v1201
  %1359 = vst.msk [vmem:[%s3 + $0x220] sm:$0xff] %vm1290, %v1202
  %1360 = vst.msk [vmem:[%s3 + $0x228] sm:$0xff] %vm1290, %v1203
  %1361 = vst.msk [vmem:[%s3 + $0x230] sm:$0xff] %vm1290, %v1204
  %1362 = vst.msk [vmem:[%s3 + $0x238] sm:$0xff] %vm1290, %v1205
  %1363 = vst.msk [vmem:[%s3 + $0x240] sm:$0xff] %vm1290, %v1206
  %1364 = vst.msk [vmem:[%s3 + $0x248] sm:$0xff] %vm1290, %v1207
  %1365 = vst.msk [vmem:[%s3 + $0x250] sm:$0xff] %vm1290, %v1208
  %1366 = vst.msk [vmem:[%s3 + $0x258] sm:$0xff] %vm1290, %v1209
  %1367 = vst.msk [vmem:[%s3 + $0x260] sm:$0xff] %vm1290, %v1210
  %1368 = vst.msk [vmem:[%s3 + $0x268] sm:$0xff] %vm1290, %v1211
  %1369 = vst.msk [vmem:[%s3 + $0x270] sm:$0xff] %vm1290, %v1212
  %1370 = vst.msk [vmem:[%s3 + $0x278] sm:$0xff] %vm1290, %v1213
  %1371 = vst.msk [vmem:[%s3 + $0x280] sm:$0xff] %vm1290, %v1214
  %1372 = vst.msk [vmem:[%s3 + $0x288] sm:$0xff] %vm1290, %v1215
  %1373 = vst.msk [vmem:[%s3 + $0x290] sm:$0xff] %vm1290, %v1216
  %1374 = vst.msk [vmem:[%s3 + $0x298] sm:$0xff] %vm1290, %v1217
  %1375 = vst.msk [vmem:[%s3 + $0x2a0] sm:$0xff] %vm1290, %v1218
  %1376 = vst.msk [vmem:[%s3 + $0x2a8] sm:$0xff] %vm1290, %v1219
  %1377 = vst.msk [vmem:[%s3 + $0x2b0] sm:$0xff] %vm1290, %v1220
  %1378 = vst.msk [vmem:[%s3 + $0x2b8] sm:$0xff] %vm1290, %v1221
  %1379 = vst.msk [vmem:[%s3 + $0x2c0] sm:$0xff] %vm1290, %v1222
  %1380 = vst.msk [vmem:[%s3 + $0x2c8] sm:$0xff] %vm1290, %v1223
  %1381 = vst.msk [vmem:[%s3 + $0x2d0] sm:$0xff] %vm1290, %v1224
  %1382 = vst.msk [vmem:[%s3 + $0x2d8] sm:$0xff] %vm1290, %v1225
  %1383 = vst.msk [vmem:[%s3 + $0x2e0] sm:$0xff] %vm1290, %v1226
  %1384 = vst.msk [vmem:[%s3 + $0x2e8] sm:$0xff] %vm1290, %v1227
  %1385 = vst.msk [vmem:[%s3 + $0x2f0] sm:$0xff] %vm1290, %v1228
  %1386 = vst.msk [vmem:[%s3 + $0x2f8] sm:$0xff] %vm1290, %v1229
  %1387 = vst.msk [vmem:[%s3 + $0x300] sm:$0xff] %vm1290, %v1230
  %1388 = vst.msk [vmem:[%s3 + $0x308] sm:$0xff] %vm1290, %v1231
  %1389 = vst.msk [vmem:[%s3 + $0x310] sm:$0xff] %vm1290, %v1232
  %1390 = vst.msk [vmem:[%s3 + $0x318] sm:$0xff] %vm1290, %v1233
  %1391 = vst.msk [vmem:[%s3 + $0x320] sm:$0xff] %vm1290, %v1234
  %1392 = vst.msk [vmem:[%s3 + $0x328] sm:$0xff] %vm1290, %v1235
  %1393 = vst.msk [vmem:[%s3 + $0x330] sm:$0xff] %vm1290, %v1236
  %1394 = vst.msk [vmem:[%s3 + $0x338] sm:$0xff] %vm1290, %v1237
  %1395 = vst.msk [vmem:[%s3 + $0x340] sm:$0xff] %vm1290, %v1238
  %1396 = vst.msk [vmem:[%s3 + $0x348] sm:$0xff] %vm1290, %v1239
  %1397 = vst.msk [vmem:[%s3 + $0x350] sm:$0xff] %vm1290, %v1240
  %1398 = vst.msk [vmem:[%s3 + $0x358] sm:$0xff] %vm1290, %v1241
  %1399 = vst.msk [vmem:[%s3 + $0x360] sm:$0xff] %vm1290, %v1242
  %1400 = vst.msk [vmem:[%s3 + $0x368] sm:$0xff] %vm1290, %v1243
  %1401 = vst.msk [vmem:[%s3 + $0x370] sm:$0xff] %vm1290, %v1244
  %1402 = vst.msk [vmem:[%s3 + $0x378] sm:$0xff] %vm1290, %v1245
  %1403 = vst.msk [vmem:[%s3 + $0x380] sm:$0xff] %vm1290, %v1246
  %1404 = vst.msk [vmem:[%s3 + $0x388] sm:$0xff] %vm1290, %v1247
  %1405 = vst.msk [vmem:[%s3 + $0x390] sm:$0xff] %vm1290, %v1248
  %1406 = vst.msk [vmem:[%s3 + $0x398] sm:$0xff] %vm1290, %v1249
  %1407 = vst.msk [vmem:[%s3 + $0x3a0] sm:$0xff] %vm1290, %v1250
  %1408 = vst.msk [vmem:[%s3 + $0x3a8] sm:$0xff] %vm1290, %v1251
  %1409 = vst.msk [vmem:[%s3 + $0x3b0] sm:$0xff] %vm1290, %v1252
  %1410 = vst.msk [vmem:[%s3 + $0x3b8] sm:$0xff] %vm1290, %v1253
  %1411 = vst.msk [vmem:[%s3 + $0x3c0] sm:$0xff] %vm1290, %v1254
  %1412 = vst.msk [vmem:[%s3 + $0x3c8] sm:$0xff] %vm1290, %v1255
  %1413 = vst.msk [vmem:[%s3 + $0x3d0] sm:$0xff] %vm1290, %v1256
  %1414 = vst.msk [vmem:[%s3 + $0x3d8] sm:$0xff] %vm1290, %v1257
  %1415 = vst.msk [vmem:[%s3 + $0x3e0] sm:$0xff] %vm1290, %v1258
  %1416 = vst.msk [vmem:[%s3 + $0x3e8] sm:$0xff] %vm1290, %v1259
  %1417 = vst.msk [vmem:[%s3 + $0x3f0] sm:$0xff] %vm1290, %v1260
  %1418 = vst.msk [vmem:[%s3 + $0x3f8] sm:$0xff] %vm1290, %v1261
  %1419 = vst.msk [vmem:[%s3 + $0x400] sm:$0xff] %vm1290, %v1262
  %1420 = vst.msk [vmem:[%s3 + $0x408] sm:$0xff] %vm1290, %v1263
  %1421 = vst.msk [vmem:[%s3 + $0x410] sm:$0xff] %vm1290, %v1264
  %1422 = vst.msk [vmem:[%s3 + $0x418] sm:$0xff] %vm1290, %v1265
  %1423 = vst.msk [vmem:[%s3 + $0x420] sm:$0xff] %vm1290, %v1266
  %1424 = vst.msk [vmem:[%s3 + $0x428] sm:$0xff] %vm1290, %v1267
  %1425 = vst.msk [vmem:[%s3 + $0x430] sm:$0xff] %vm1290, %v1268
  %1426 = vst.msk [vmem:[%s3 + $0x438] sm:$0xff] %vm1290, %v1269
  %1427 = vst.msk [vmem:[%s3 + $0x440] sm:$0xff] %vm1290, %v1270
  %1428 = vst.msk [vmem:[%s3 + $0x448] sm:$0xff] %vm1290, %v1271
  %1429 = vst.msk [vmem:[%s3 + $0x450] sm:$0xff] %vm1290, %v1272
  %1430 = vst.msk [vmem:[%s3 + $0x458] sm:$0xff] %vm1290, %v1273
  %1431 = vst.msk [vmem:[%s3 + $0x460] sm:$0xff] %vm1290, %v1274
  %1432 = vst.msk [vmem:[%s3 + $0x468] sm:$0xff] %vm1290, %v1275
  %1433 = vst.msk [vmem:[%s3 + $0x470] sm:$0xff] %vm1290, %v1276
  %1434 = vst.msk [vmem:[%s3 + $0x478] sm:$0xff] %vm1290, %v1277
  %1435 = vst.msk [vmem:[%s3 + $0x480] sm:$0xff] %vm1290, %v1278
  %1436 = vst.msk [vmem:[%s3 + $0x488] sm:$0xff] %vm1290, %v1279
  %1437 = vst.msk [vmem:[%s3 + $0x490] sm:$0xff] %vm1290, %v1280
  %1438 = vst.msk [vmem:[%s3 + $0x498] sm:$0xff] %vm1290, %v1281
  %1439 = vst.msk [vmem:[%s3 + $0x4a0] sm:$0xff] %vm1290, %v1282
  %1440 = vst.msk [vmem:[%s3 + $0x4a8] sm:$0xff] %vm1290, %v1283
  %1441 = vst.msk [vmem:[%s3 + $0x4b0] sm:$0xff] %vm1290, %v1284
  %1442 = vst.msk [vmem:[%s3 + $0x4b8] sm:$0xff] %vm1290, %v1285
  %1443 = vst.msk [vmem:[%s3 + $0x4c0] sm:$0xff] %vm1290, %v1286
  %1444 = vst.msk [vmem:[%s3 + $0x4c8] sm:$0xff] %vm1290, %v1287
  %1445 = vst.msk [vmem:[%s3 + $0x4d0] sm:$0xff] %vm1290, %v1288
  %1446 = vst.msk [vmem:[%s3 + $0x4d8] sm:$0xff] %vm1290, %v1289
  // Predicated region
  $region14: #{recognizer_forward.3} parent=0 // pred_check
    _
  $region15: #{recognizer_forward.3} parent=0 // pred_check_branch
    %1448 = sbr.rel (0) target = $region17
  $region16: #{recognizer_forward.3} parent=0 // pred_region
    _
  $region17: #{recognizer_forward.3} parent=0 // pred_fallthru
    _
  // Predicated region
  $region18: #{recognizer_forward.3} parent=0 // pred_check
    _
  $region19: #{recognizer_forward.3} parent=0 // pred_check_branch
    %1450 = sbr.rel (0) target = $region21
  $region20: #{recognizer_forward.3} parent=0 // pred_region
    _
  $region21: #{recognizer_forward.3} parent=0 // pred_fallthru
    _

// kernel: recognizer_forward.4
$region0: #{recognizer_forward.4}
  #allocation0 [shape = 'u32[]', space=smem, size = 0x4, offset = 0x4, fixed_abs, tag = 'smem constant byte address 0x4 - core index']
  #allocation1 [shape = 'u32[72,128]{1,0:T(1,128)}', space=vmem, size = 0x9000, scoped, tag = 'internal scratch']
  %s0 = inlined_call_operand.vmem [shape: f32[266,144], index: 0, kind: input, shape index: {}]
  %s1 = inlined_call_operand.vmem [shape: f32[144,16], index: 1, kind: input, shape index: {}]
  %s2 = inlined_call_operand.vmem [shape: f32[1,16], index: 2, kind: input, shape index: {}]
  %s3 = inlined_call_operand.vmem [shape: f32[266,16], index: 3, kind: output, shape index: {}]
  %s4 = sld [smem:[#allocation0]]
  $region22: #{recognizer_forward.4} parent=0
    _
  %s6 = ssub.s32 1, %s4
  %s7 = scalar_select 0, %s6, %s4
  // Predicated region
  $region2: #{recognizer_forward.4} parent=0 // pred_check
    _
  $region3: #{recognizer_forward.4} parent=0 // pred_check_branch
    %9 = sbr.rel (0) target = $region5
  $region4: #{recognizer_forward.4} parent=0 // pred_region
    _
  $region5: #{recognizer_forward.4} parent=0 // pred_fallthru
    _
  // Predicated region
  $region6: #{recognizer_forward.4} parent=0 // pred_check
    _
  $region7: #{recognizer_forward.4} parent=0 // pred_check_branch
    %11 = sbr.rel (0) target = $region9
  $region8: #{recognizer_forward.4} parent=0 // pred_region
    _
  $region9: #{recognizer_forward.4} parent=0 // pred_fallthru
    _
  // Predicated region
  $region10: #{recognizer_forward.4} parent=0 // pred_check
    _
  $region11: #{recognizer_forward.4} parent=0 // pred_check_branch
    %13 = sbr.rel (0) target = $region13
  $region12: #{recognizer_forward.4} parent=0 // pred_region
    _
  $region13: #{recognizer_forward.4} parent=0 // pred_fallthru
    _
  %v14 = vld [vmem:[%s0] sm:$0xff]
  %v15 = vld [vmem:[%s0 + $0x8] sm:$0xff]
  %v16 = vld [vmem:[%s0 + $0x10] sm:$0xff]
  %v17 = vld [vmem:[%s0 + $0x18] sm:$0xff]
  %v18 = vld [vmem:[%s0 + $0x20] sm:$0xff]
  %v19 = vld [vmem:[%s0 + $0x28] sm:$0xff]
  %v20 = vld [vmem:[%s0 + $0x30] sm:$0xff]
  %v21 = vld [vmem:[%s0 + $0x38] sm:$0xff]
  %v22 = vld [vmem:[%s0 + $0x40] sm:$0xff]
  %v23 = vld [vmem:[%s0 + $0x48] sm:$0xff]
  %v24 = vld [vmem:[%s0 + $0x50] sm:$0xff]
  %v25 = vld [vmem:[%s0 + $0x58] sm:$0xff]
  %v26 = vld [vmem:[%s0 + $0x60] sm:$0xff]
  %v27 = vld [vmem:[%s0 + $0x68] sm:$0xff]
  %v28 = vld [vmem:[%s0 + $0x70] sm:$0xff]
  %v29 = vld [vmem:[%s0 + $0x78] sm:$0xff]
  %v30 = vld [vmem:[%s0 + $0x80] sm:$0xff]
  %v31 = vld [vmem:[%s0 + $0x88] sm:$0xff]
  %v32 = vld [vmem:[%s0 + $0x90] sm:$0xff]
  %v33 = vld [vmem:[%s0 + $0x98] sm:$0xff]
  %v34 = vld [vmem:[%s0 + $0xa0] sm:$0xff]
  %v35 = vld [vmem:[%s0 + $0xa8] sm:$0xff]
  %v36 = vld [vmem:[%s0 + $0xb0] sm:$0xff]
  %v37 = vld [vmem:[%s0 + $0xb8] sm:$0xff]
  %v38 = vld [vmem:[%s0 + $0xc0] sm:$0xff]
  %v39 = vld [vmem:[%s0 + $0xc8] sm:$0xff]
  %v40 = vld [vmem:[%s0 + $0xd0] sm:$0xff]
  %v41 = vld [vmem:[%s0 + $0xd8] sm:$0xff]
  %v42 = vld [vmem:[%s0 + $0xe0] sm:$0xff]
  %v43 = vld [vmem:[%s0 + $0xe8] sm:$0xff]
  %v44 = vld [vmem:[%s0 + $0xf0] sm:$0xff]
  %v45 = vld [vmem:[%s0 + $0xf8] sm:$0xff]
  %v46 = vld [vmem:[%s0 + $0x100] sm:$0xff]
  %v47 = vld [vmem:[%s0 + $0x108] sm:$0xff]
  %v48 = vld [vmem:[%s0 + $0x110] sm:$0xff]
  %v49 = vld [vmem:[%s0 + $0x118] sm:$0xff]
  %v50 = vld [vmem:[%s0 + $0x120] sm:$0xff]
  %v51 = vld [vmem:[%s0 + $0x128] sm:$0xff]
  %v52 = vld [vmem:[%s0 + $0x130] sm:$0xff]
  %v53 = vld [vmem:[%s0 + $0x138] sm:$0xff]
  %v54 = vld [vmem:[%s0 + $0x140] sm:$0xff]
  %v55 = vld [vmem:[%s0 + $0x148] sm:$0xff]
  %v56 = vld [vmem:[%s0 + $0x150] sm:$0xff]
  %v57 = vld [vmem:[%s0 + $0x158] sm:$0xff]
  %v58 = vld [vmem:[%s0 + $0x160] sm:$0xff]
  %v59 = vld [vmem:[%s0 + $0x168] sm:$0xff]
  %v60 = vld [vmem:[%s0 + $0x170] sm:$0xff]
  %v61 = vld [vmem:[%s0 + $0x178] sm:$0xff]
  %v62 = vld [vmem:[%s0 + $0x180] sm:$0xff]
  %v63 = vld [vmem:[%s0 + $0x188] sm:$0xff]
  %v64 = vld [vmem:[%s0 + $0x190] sm:$0xff]
  %v65 = vld [vmem:[%s0 + $0x198] sm:$0xff]
  %v66 = vld [vmem:[%s0 + $0x1a0] sm:$0xff]
  %v67 = vld [vmem:[%s0 + $0x1a8] sm:$0xff]
  %v68 = vld [vmem:[%s0 + $0x1b0] sm:$0xff]
  %v69 = vld [vmem:[%s0 + $0x1b8] sm:$0xff]
  %v70 = vld [vmem:[%s0 + $0x1c0] sm:$0xff]
  %v71 = vld [vmem:[%s0 + $0x1c8] sm:$0xff]
  %v72 = vld [vmem:[%s0 + $0x1d0] sm:$0xff]
  %v73 = vld [vmem:[%s0 + $0x1d8] sm:$0xff]
  %v74 = vld [vmem:[%s0 + $0x1e0] sm:$0xff]
  %v75 = vld [vmem:[%s0 + $0x1e8] sm:$0xff]
  %v76 = vld [vmem:[%s0 + $0x1f0] sm:$0xff]
  %v77 = vld [vmem:[%s0 + $0x1f8] sm:$0xff]
  %v78 = vld [vmem:[%s0 + $0x200] sm:$0xff]
  %v79 = vld [vmem:[%s0 + $0x208] sm:$0xff]
  %v80 = vld [vmem:[%s0 + $0x210] sm:$0x3]
  %v81 = vld [vmem:[%s0 + $0x218] sm:$0x3]
  %v82 = vld [vmem:[%s1] sm:$0xff]
  %v83 = vld [vmem:[%s1 + $0x8] sm:$0xff]
  %v84 = vld [vmem:[%s1 + $0x10] sm:$0xff]
  %v85 = vld [vmem:[%s1 + $0x18] sm:$0xff]
  %v86 = vld [vmem:[%s1 + $0x20] sm:$0xff]
  %v87 = vld [vmem:[%s1 + $0x28] sm:$0xff]
  %v88 = vld [vmem:[%s1 + $0x30] sm:$0xff]
  %v89 = vld [vmem:[%s1 + $0x38] sm:$0xff]
  %v90 = vld [vmem:[%s1 + $0x40] sm:$0xff]
  %v91 = vld [vmem:[%s1 + $0x48] sm:$0xff]
  %v92 = vld [vmem:[%s1 + $0x50] sm:$0xff]
  %v93 = vld [vmem:[%s1 + $0x58] sm:$0xff]
  %v94 = vld [vmem:[%s1 + $0x60] sm:$0xff]
  %v95 = vld [vmem:[%s1 + $0x68] sm:$0xff]
  %v96 = vld [vmem:[%s1 + $0x70] sm:$0xff]
  %v97 = vld [vmem:[%s1 + $0x78] sm:$0xff]
  %v98 = vld [vmem:[%s1 + $0x80] sm:$0xff]
  %v99 = vld [vmem:[%s1 + $0x88] sm:$0xff]
  %v100 = vld [vmem:[%s2] sm:$0x1]
  %v102 = vperm.slane %v100, 0
  %vm104 = vcmask 130048
  %v106 = vsel %vm104, %v15, 0
  %v109 = vsel %vm104, %v17, 0
  %v112 = vsel %vm104, %v19, 0
  %v115 = vsel %vm104, %v21, 0
  %v118 = vsel %vm104, %v23, 0
  %v121 = vsel %vm104, %v25, 0
  %v124 = vsel %vm104, %v27, 0
  %v127 = vsel %vm104, %v29, 0
  %v130 = vsel %vm104, %v31, 0
  %v133 = vsel %vm104, %v33, 0
  %v136 = vsel %vm104, %v35, 0
  %v139 = vsel %vm104, %v37, 0
  %v142 = vsel %vm104, %v39, 0
  %v145 = vsel %vm104, %v41, 0
  %v148 = vsel %vm104, %v43, 0
  %v151 = vsel %vm104, %v45, 0
  %v154 = vsel %vm104, %v47, 0
  %v157 = vsel %vm104, %v49, 0
  %v160 = vsel %vm104, %v51, 0
  %v163 = vsel %vm104, %v53, 0
  %v166 = vsel %vm104, %v55, 0
  %v169 = vsel %vm104, %v57, 0
  %v172 = vsel %vm104, %v59, 0
  %v175 = vsel %vm104, %v61, 0
  %v178 = vsel %vm104, %v63, 0
  %v181 = vsel %vm104, %v65, 0
  %v184 = vsel %vm104, %v67, 0
  %v187 = vsel %vm104, %v69, 0
  %v190 = vsel %vm104, %v71, 0
  %v193 = vsel %vm104, %v73, 0
  %v196 = vsel %vm104, %v75, 0
  %v199 = vsel %vm104, %v77, 0
  %v202 = vsel %vm104, %v79, 0
  %v205 = vsel %vm104, %v81, 0
  %207 = vmatpush.msra.mxu0 %v97
  %208 = vmatpush.msra.mxu0 %v96
  %209 = vmatpush.msra.mxu0 %v95
  %210 = vmatpush.msra.mxu0 %v94
  %211 = vmatpush.msra.mxu0 %v93
  %212 = vmatpush.msra.mxu0 %v92
  %213 = vmatpush.msra.mxu0 %v91
  %214 = vmatpush.msra.mxu0 %v90
  %215 = vmatpush.msra.mxu0 %v89
  %216 = vmatpush.msra.mxu0 %v88
  %217 = vmatpush.msra.mxu0 %v87
  %218 = vmatpush.msra.mxu0 %v86
  %219 = vmatpush.msra.mxu0 %v85
  %220 = vmatpush.msra.mxu0 %v84
  %221 = vmatpush.msra.mxu0 %v83
  %222 = vmatpush.msra.mxu0 %v82
  %223 = vmatmul.f32.gmra.mxu0 %v14
  %v224 = vpop.f32.mrf.mxu0
  %v225 = vadd.f32 %v102, %v224
  %226 = vmatmul.f32.gmra.mxu0 %v16
  %v227 = vpop.f32.mrf.mxu0
  %v228 = vadd.f32 %v102, %v227
  %229 = vmatmul.f32.gmra.mxu0 %v18
  %v230 = vpop.f32.mrf.mxu0
  %v231 = vadd.f32 %v102, %v230
  %232 = vmatmul.f32.gmra.mxu0 %v20
  %v233 = vpop.f32.mrf.mxu0
  %v234 = vadd.f32 %v102, %v233
  %235 = vmatmul.f32.gmra.mxu0 %v22
  %v236 = vpop.f32.mrf.mxu0
  %v237 = vadd.f32 %v102, %v236
  %238 = vmatmul.f32.gmra.mxu0 %v24
  %v239 = vpop.f32.mrf.mxu0
  %v240 = vadd.f32 %v102, %v239
  %241 = vmatmul.f32.gmra.mxu0 %v26
  %v242 = vpop.f32.mrf.mxu0
  %v243 = vadd.f32 %v102, %v242
  %244 = vmatmul.f32.gmra.mxu0 %v28
  %v245 = vpop.f32.mrf.mxu0
  %v246 = vadd.f32 %v102, %v245
  %247 = vmatmul.f32.gmra.mxu0 %v30
  %v248 = vpop.f32.mrf.mxu0
  %v249 = vadd.f32 %v102, %v248
  %250 = vmatmul.f32.gmra.mxu0 %v32
  %v251 = vpop.f32.mrf.mxu0
  %v252 = vadd.f32 %v102, %v251
  %253 = vmatmul.f32.gmra.mxu0 %v34
  %v254 = vpop.f32.mrf.mxu0
  %v255 = vadd.f32 %v102, %v254
  %256 = vmatmul.f32.gmra.mxu0 %v36
  %v257 = vpop.f32.mrf.mxu0
  %v258 = vadd.f32 %v102, %v257
  %259 = vmatmul.f32.gmra.mxu0 %v38
  %v260 = vpop.f32.mrf.mxu0
  %v261 = vadd.f32 %v102, %v260
  %262 = vmatmul.f32.gmra.mxu0 %v40
  %v263 = vpop.f32.mrf.mxu0
  %v264 = vadd.f32 %v102, %v263
  %265 = vmatmul.f32.gmra.mxu0 %v42
  %v266 = vpop.f32.mrf.mxu0
  %v267 = vadd.f32 %v102, %v266
  %268 = vmatmul.f32.gmra.mxu0 %v44
  %v269 = vpop.f32.mrf.mxu0
  %v270 = vadd.f32 %v102, %v269
  %271 = vmatmul.f32.gmra.mxu0 %v46
  %v272 = vpop.f32.mrf.mxu0
  %v273 = vadd.f32 %v102, %v272
  %274 = vmatmul.f32.gmra.mxu0 %v48
  %v275 = vpop.f32.mrf.mxu0
  %v276 = vadd.f32 %v102, %v275
  %277 = vmatmul.f32.gmra.mxu0 %v50
  %v278 = vpop.f32.mrf.mxu0
  %v279 = vadd.f32 %v102, %v278
  %280 = vmatmul.f32.gmra.mxu0 %v52
  %v281 = vpop.f32.mrf.mxu0
  %v282 = vadd.f32 %v102, %v281
  %283 = vmatmul.f32.gmra.mxu0 %v54
  %v284 = vpop.f32.mrf.mxu0
  %v285 = vadd.f32 %v102, %v284
  %286 = vmatmul.f32.gmra.mxu0 %v56
  %v287 = vpop.f32.mrf.mxu0
  %v288 = vadd.f32 %v102, %v287
  %289 = vmatmul.f32.gmra.mxu0 %v58
  %v290 = vpop.f32.mrf.mxu0
  %v291 = vadd.f32 %v102, %v290
  %292 = vmatmul.f32.gmra.mxu0 %v60
  %v293 = vpop.f32.mrf.mxu0
  %v294 = vadd.f32 %v102, %v293
  %295 = vmatmul.f32.gmra.mxu0 %v62
  %v296 = vpop.f32.mrf.mxu0
  %v297 = vadd.f32 %v102, %v296
  %298 = vmatmul.f32.gmra.mxu0 %v64
  %v299 = vpop.f32.mrf.mxu0
  %v300 = vadd.f32 %v102, %v299
  %301 = vmatmul.f32.gmra.mxu0 %v66
  %v302 = vpop.f32.mrf.mxu0
  %v303 = vadd.f32 %v102, %v302
  %304 = vmatmul.f32.gmra.mxu0 %v68
  %v305 = vpop.f32.mrf.mxu0
  %v306 = vadd.f32 %v102, %v305
  %307 = vmatmul.f32.gmra.mxu0 %v70
  %v308 = vpop.f32.mrf.mxu0
  %v309 = vadd.f32 %v102, %v308
  %310 = vmatmul.f32.gmra.mxu0 %v72
  %v311 = vpop.f32.mrf.mxu0
  %v312 = vadd.f32 %v102, %v311
  %313 = vmatmul.f32.gmra.mxu0 %v74
  %v314 = vpop.f32.mrf.mxu0
  %v315 = vadd.f32 %v102, %v314
  %316 = vmatmul.f32.gmra.mxu0 %v76
  %v317 = vpop.f32.mrf.mxu0
  %v318 = vadd.f32 %v102, %v317
  %319 = vmatmul.f32.gmra.mxu0 %v78
  %v320 = vpop.f32.mrf.mxu0
  %v321 = vadd.f32 %v102, %v320
  %322 = vmatmul.f32.gmra.mxu0 %v80
  %v323 = vpop.f32.mrf.mxu0
  %v324 = vadd.f32 %v102, %v323
  %325 = vdwg.mxu0
  %326 = vmatpush.msra.mxu0 0.0
  %327 = vmatpush.msra.mxu0 0.0
  %328 = vmatpush.msra.mxu0 0.0
  %329 = vmatpush.msra.mxu0 0.0
  %330 = vmatpush.msra.mxu0 0.0
  %331 = vmatpush.msra.mxu0 0.0
  %332 = vmatpush.msra.mxu0 0.0
  %333 = vmatpush.msra.mxu0 0.0
  %334 = vmatpush.msra.mxu0 0.0
  %335 = vmatpush.msra.mxu0 0.0
  %336 = vmatpush.msra.mxu0 0.0
  %337 = vmatpush.msra.mxu0 0.0
  %338 = vmatpush.msra.mxu0 0.0
  %339 = vmatpush.msra.mxu0 0.0
  %340 = vmatpush.msra.mxu0 %v99
  %341 = vmatpush.msra.mxu0 %v98
  %342 = vmatmul.f32.gmra.mxu0 %v106
  %v343 = vpop.f32.mrf.mxu0
  %v344 = vadd.f32 %v225, %v343
  %345 = vmatmul.f32.gmra.mxu0 %v109
  %v346 = vpop.f32.mrf.mxu0
  %v347 = vadd.f32 %v228, %v346
  %348 = vmatmul.f32.gmra.mxu0 %v112
  %v349 = vpop.f32.mrf.mxu0
  %v350 = vadd.f32 %v231, %v349
  %351 = vmatmul.f32.gmra.mxu0 %v115
  %v352 = vpop.f32.mrf.mxu0
  %v353 = vadd.f32 %v234, %v352
  %354 = vmatmul.f32.gmra.mxu0 %v118
  %v355 = vpop.f32.mrf.mxu0
  %v356 = vadd.f32 %v237, %v355
  %357 = vmatmul.f32.gmra.mxu0 %v121
  %v358 = vpop.f32.mrf.mxu0
  %v359 = vadd.f32 %v240, %v358
  %360 = vmatmul.f32.gmra.mxu0 %v124
  %v361 = vpop.f32.mrf.mxu0
  %v362 = vadd.f32 %v243, %v361
  %363 = vmatmul.f32.gmra.mxu0 %v127
  %v364 = vpop.f32.mrf.mxu0
  %v365 = vadd.f32 %v246, %v364
  %366 = vmatmul.f32.gmra.mxu0 %v130
  %v367 = vpop.f32.mrf.mxu0
  %v368 = vadd.f32 %v249, %v367
  %369 = vmatmul.f32.gmra.mxu0 %v133
  %v370 = vpop.f32.mrf.mxu0
  %v371 = vadd.f32 %v252, %v370
  %372 = vmatmul.f32.gmra.mxu0 %v136
  %v373 = vpop.f32.mrf.mxu0
  %v374 = vadd.f32 %v255, %v373
  %375 = vmatmul.f32.gmra.mxu0 %v139
  %v376 = vpop.f32.mrf.mxu0
  %v377 = vadd.f32 %v258, %v376
  %378 = vmatmul.f32.gmra.mxu0 %v142
  %v379 = vpop.f32.mrf.mxu0
  %v380 = vadd.f32 %v261, %v379
  %381 = vmatmul.f32.gmra.mxu0 %v145
  %v382 = vpop.f32.mrf.mxu0
  %v383 = vadd.f32 %v264, %v382
  %384 = vmatmul.f32.gmra.mxu0 %v148
  %v385 = vpop.f32.mrf.mxu0
  %v386 = vadd.f32 %v267, %v385
  %387 = vmatmul.f32.gmra.mxu0 %v151
  %v388 = vpop.f32.mrf.mxu0
  %v389 = vadd.f32 %v270, %v388
  %390 = vmatmul.f32.gmra.mxu0 %v154
  %v391 = vpop.f32.mrf.mxu0
  %v392 = vadd.f32 %v273, %v391
  %393 = vmatmul.f32.gmra.mxu0 %v157
  %v394 = vpop.f32.mrf.mxu0
  %v395 = vadd.f32 %v276, %v394
  %396 = vmatmul.f32.gmra.mxu0 %v160
  %v397 = vpop.f32.mrf.mxu0
  %v398 = vadd.f32 %v279, %v397
  %399 = vmatmul.f32.gmra.mxu0 %v163
  %v400 = vpop.f32.mrf.mxu0
  %v401 = vadd.f32 %v282, %v400
  %402 = vmatmul.f32.gmra.mxu0 %v166
  %v403 = vpop.f32.mrf.mxu0
  %v404 = vadd.f32 %v285, %v403
  %405 = vmatmul.f32.gmra.mxu0 %v169
  %v406 = vpop.f32.mrf.mxu0
  %v407 = vadd.f32 %v288, %v406
  %408 = vmatmul.f32.gmra.mxu0 %v172
  %v409 = vpop.f32.mrf.mxu0
  %v410 = vadd.f32 %v291, %v409
  %411 = vmatmul.f32.gmra.mxu0 %v175
  %v412 = vpop.f32.mrf.mxu0
  %v413 = vadd.f32 %v294, %v412
  %414 = vmatmul.f32.gmra.mxu0 %v178
  %v415 = vpop.f32.mrf.mxu0
  %v416 = vadd.f32 %v297, %v415
  %417 = vmatmul.f32.gmra.mxu0 %v181
  %v418 = vpop.f32.mrf.mxu0
  %v419 = vadd.f32 %v300, %v418
  %420 = vmatmul.f32.gmra.mxu0 %v184
  %v421 = vpop.f32.mrf.mxu0
  %v422 = vadd.f32 %v303, %v421
  %423 = vmatmul.f32.gmra.mxu0 %v187
  %v424 = vpop.f32.mrf.mxu0
  %v425 = vadd.f32 %v306, %v424
  %426 = vmatmul.f32.gmra.mxu0 %v190
  %v427 = vpop.f32.mrf.mxu0
  %v428 = vadd.f32 %v309, %v427
  %429 = vmatmul.f32.gmra.mxu0 %v193
  %v430 = vpop.f32.mrf.mxu0
  %v431 = vadd.f32 %v312, %v430
  %432 = vmatmul.f32.gmra.mxu0 %v196
  %v433 = vpop.f32.mrf.mxu0
  %v434 = vadd.f32 %v315, %v433
  %435 = vmatmul.f32.gmra.mxu0 %v199
  %v436 = vpop.f32.mrf.mxu0
  %v437 = vadd.f32 %v318, %v436
  %438 = vmatmul.f32.gmra.mxu0 %v202
  %v439 = vpop.f32.mrf.mxu0
  %v440 = vadd.f32 %v321, %v439
  %441 = vmatmul.f32.gmra.mxu0 %v205
  %v442 = vpop.f32.mrf.mxu0
  %v443 = vadd.f32 %v324, %v442
  %444 = vdwg.mxu0
  %v445 = vmax.f32 %v344, 0.0
  %v446 = vmax.f32 %v347, 0.0
  %v447 = vmax.f32 %v350, 0.0
  %v448 = vmax.f32 %v353, 0.0
  %v449 = vmax.f32 %v356, 0.0
  %v450 = vmax.f32 %v359, 0.0
  %v451 = vmax.f32 %v362, 0.0
  %v452 = vmax.f32 %v365, 0.0
  %v453 = vmax.f32 %v368, 0.0
  %v454 = vmax.f32 %v371, 0.0
  %v455 = vmax.f32 %v374, 0.0
  %v456 = vmax.f32 %v377, 0.0
  %v457 = vmax.f32 %v380, 0.0
  %v458 = vmax.f32 %v383, 0.0
  %v459 = vmax.f32 %v386, 0.0
  %v460 = vmax.f32 %v389, 0.0
  %v461 = vmax.f32 %v392, 0.0
  %v462 = vmax.f32 %v395, 0.0
  %v463 = vmax.f32 %v398, 0.0
  %v464 = vmax.f32 %v401, 0.0
  %v465 = vmax.f32 %v404, 0.0
  %v466 = vmax.f32 %v407, 0.0
  %v467 = vmax.f32 %v410, 0.0
  %v468 = vmax.f32 %v413, 0.0
  %v469 = vmax.f32 %v416, 0.0
  %v470 = vmax.f32 %v419, 0.0
  %v471 = vmax.f32 %v422, 0.0
  %v472 = vmax.f32 %v425, 0.0
  %v473 = vmax.f32 %v428, 0.0
  %v474 = vmax.f32 %v431, 0.0
  %v475 = vmax.f32 %v434, 0.0
  %v476 = vmax.f32 %v437, 0.0
  %v477 = vmax.f32 %v440, 0.0
  %v478 = vmax.f32 %v443, 0.0
  %479 = vst.msk [vmem:[%s3] sm:$0xff] %vm104, %v445
  %480 = vst.msk [vmem:[%s3 + $0x8] sm:$0xff] %vm104, %v446
  %481 = vst.msk [vmem:[%s3 + $0x10] sm:$0xff] %vm104, %v447
  %482 = vst.msk [vmem:[%s3 + $0x18] sm:$0xff] %vm104, %v448
  %483 = vst.msk [vmem:[%s3 + $0x20] sm:$0xff] %vm104, %v449
  %484 = vst.msk [vmem:[%s3 + $0x28] sm:$0xff] %vm104, %v450
  %485 = vst.msk [vmem:[%s3 + $0x30] sm:$0xff] %vm104, %v451
  %486 = vst.msk [vmem:[%s3 + $0x38] sm:$0xff] %vm104, %v452
  %487 = vst.msk [vmem:[%s3 + $0x40] sm:$0xff] %vm104, %v453
  %488 = vst.msk [vmem:[%s3 + $0x48] sm:$0xff] %vm104, %v454
  %489 = vst.msk [vmem:[%s3 + $0x50] sm:$0xff] %vm104, %v455
  %490 = vst.msk [vmem:[%s3 + $0x58] sm:$0xff] %vm104, %v456
  %491 = vst.msk [vmem:[%s3 + $0x60] sm:$0xff] %vm104, %v457
  %492 = vst.msk [vmem:[%s3 + $0x68] sm:$0xff] %vm104, %v458
  %493 = vst.msk [vmem:[%s3 + $0x70] sm:$0xff] %vm104, %v459
  %494 = vst.msk [vmem:[%s3 + $0x78] sm:$0xff] %vm104, %v460
  %495 = vst.msk [vmem:[%s3 + $0x80] sm:$0xff] %vm104, %v461
  %496 = vst.msk [vmem:[%s3 + $0x88] sm:$0xff] %vm104, %v462
  %497 = vst.msk [vmem:[%s3 + $0x90] sm:$0xff] %vm104, %v463
  %498 = vst.msk [vmem:[%s3 + $0x98] sm:$0xff] %vm104, %v464
  %499 = vst.msk [vmem:[%s3 + $0xa0] sm:$0xff] %vm104, %v465
  %500 = vst.msk [vmem:[%s3 + $0xa8] sm:$0xff] %vm104, %v466
  %501 = vst.msk [vmem:[%s3 + $0xb0] sm:$0xff] %vm104, %v467
  %502 = vst.msk [vmem:[%s3 + $0xb8] sm:$0xff] %vm104, %v468
  %503 = vst.msk [vmem:[%s3 + $0xc0] sm:$0xff] %vm104, %v469
  %504 = vst.msk [vmem:[%s3 + $0xc8] sm:$0xff] %vm104, %v470
  %505 = vst.msk [vmem:[%s3 + $0xd0] sm:$0xff] %vm104, %v471
  %506 = vst.msk [vmem:[%s3 + $0xd8] sm:$0xff] %vm104, %v472
  %507 = vst.msk [vmem:[%s3 + $0xe0] sm:$0xff] %vm104, %v473
  %508 = vst.msk [vmem:[%s3 + $0xe8] sm:$0xff] %vm104, %v474
  %509 = vst.msk [vmem:[%s3 + $0xf0] sm:$0xff] %vm104, %v475
  %510 = vst.msk [vmem:[%s3 + $0xf8] sm:$0xff] %vm104, %v476
  %511 = vst.msk [vmem:[%s3 + $0x100] sm:$0xff] %vm104, %v477
  %vm512 = vcmask 123904
  %513 = vst.msk [vmem:[%s3 + $0x108] sm:$0x3] %vm512, %v478
  // Predicated region
  $region14: #{recognizer_forward.4} parent=0 // pred_check
    _
  $region15: #{recognizer_forward.4} parent=0 // pred_check_branch
    %515 = sbr.rel (0) target = $region17
  $region16: #{recognizer_forward.4} parent=0 // pred_region
    _
  $region17: #{recognizer_forward.4} parent=0 // pred_fallthru
    _
  // Predicated region
  $region18: #{recognizer_forward.4} parent=0 // pred_check
    _
  $region19: #{recognizer_forward.4} parent=0 // pred_check_branch
    %517 = sbr.rel (0) target = $region21
  $region20: #{recognizer_forward.4} parent=0 // pred_region
    _
  $region21: #{recognizer_forward.4} parent=0 // pred_fallthru
    _

// kernel: recognizer_forward.5
$region0: #{recognizer_forward.5}
  #allocation0 [shape = 'u32[]', space=smem, size = 0x4, offset = 0x4, fixed_abs, tag = 'smem constant byte address 0x4 - core index']
  #allocation1 [shape = 'u32[72,128]{1,0:T(1,128)}', space=vmem, size = 0x9000, scoped, tag = 'internal scratch']
  %s0 = inlined_call_operand.smem [shape: u32[36], index: -1, kind: input, shape index: {}]
  %s1 = sld [smem:[%s0]]
  %s2 = scalar_lea.smem %s0, 1
  %s3 = sld [smem:[%s2]]
  %s4 = scalar_lea.smem %s0, 2
  %s5 = sld [smem:[%s4]]
  %s6 = scalar_lea.smem %s0, 3
  %s7 = sld [smem:[%s6]]
  %s8 = scalar_lea.smem %s0, 4
  %s9 = sld [smem:[%s8]]
  %s10 = scalar_lea.smem %s0, 5
  %s11 = sld [smem:[%s10]]
  %s12 = scalar_lea.smem %s0, 6
  %s13 = sld [smem:[%s12]]
  %s14 = scalar_lea.smem %s0, 7
  %s15 = sld [smem:[%s14]]
  %s16 = scalar_lea.smem %s0, 8
  %s17 = sld [smem:[%s16]]
  %s18 = scalar_lea.smem %s0, 9
  %s19 = sld [smem:[%s18]]
  %s20 = scalar_lea.smem %s0, 10
  %s21 = sld [smem:[%s20]]
  %s22 = scalar_lea.smem %s0, 11
  %s23 = sld [smem:[%s22]]
  %s24 = scalar_lea.smem %s0, 12
  %s25 = sld [smem:[%s24]]
  %s26 = scalar_lea.smem %s0, 13
  %s27 = sld [smem:[%s26]]
  %s28 = scalar_lea.smem %s0, 14
  %s29 = sld [smem:[%s28]]
  %s30 = scalar_lea.smem %s0, 15
  %s31 = sld [smem:[%s30]]
  %s32 = scalar_lea.smem %s0, 16
  %s33 = sld [smem:[%s32]]
  %s34 = scalar_lea.smem %s0, 17
  %s35 = sld [smem:[%s34]]
  %s36 = scalar_lea.smem %s0, 18
  %s37 = sld [smem:[%s36]]
  %s38 = scalar_lea.smem %s0, 19
  %s39 = sld [smem:[%s38]]
  %s40 = scalar_lea.smem %s0, 20
  %s41 = sld [smem:[%s40]]
  %s42 = scalar_lea.smem %s0, 21
  %s43 = sld [smem:[%s42]]
  %s44 = scalar_lea.smem %s0, 22
  %s45 = sld [smem:[%s44]]
  %s46 = scalar_lea.smem %s0, 23
  %s47 = sld [smem:[%s46]]
  %s48 = scalar_lea.smem %s0, 24
  %s49 = sld [smem:[%s48]]
  %s50 = scalar_lea.smem %s0, 25
  %s51 = sld [smem:[%s50]]
  %s52 = scalar_lea.smem %s0, 26
  %s53 = sld [smem:[%s52]]
  %s54 = scalar_lea.smem %s0, 27
  %s55 = sld [smem:[%s54]]
  %s56 = scalar_lea.smem %s0, 28
  %s57 = sld [smem:[%s56]]
  %s58 = scalar_lea.smem %s0, 29
  %s59 = sld [smem:[%s58]]
  %s60 = scalar_lea.smem %s0, 30
  %s61 = sld [smem:[%s60]]
  %s62 = scalar_lea.smem %s0, 31
  %s63 = sld [smem:[%s62]]
  %s64 = scalar_lea.smem %s0, 32
  %s65 = sld [smem:[%s64]]
  %s66 = scalar_lea.smem %s0, 33
  %s67 = sld [smem:[%s66]]
  %s68 = scalar_lea.smem %s0, 34
  %s69 = sld [smem:[%s68]]
  %s70 = scalar_lea.smem %s0, 35
  %s71 = sld [smem:[%s70]]
  %s72 = sld [smem:[#allocation0]]
  $region157: #{recognizer_forward.5} parent=0
    _
  %s74 = ssub.s32 1, %s72
  %s75 = scalar_select 0, %s74, %s72
  // Predicated region
  $region2: #{recognizer_forward.5} parent=0 // pred_check
    _
  $region3: #{recognizer_forward.5} parent=0 // pred_check_branch
    %77 = sbr.rel (0) target = $region5
  $region4: #{recognizer_forward.5} parent=0 // pred_region
    _
  $region5: #{recognizer_forward.5} parent=0 // pred_fallthru
    _
  // Predicated region
  $region6: #{recognizer_forward.5} parent=0 // pred_check
    _
  $region7: #{recognizer_forward.5} parent=0 // pred_check_branch
    %79 = sbr.rel (0) target = $region9
  $region8: #{recognizer_forward.5} parent=0 // pred_region
    _
  $region9: #{recognizer_forward.5} parent=0 // pred_fallthru
    _
  // Predicated region
  $region10: #{recognizer_forward.5} parent=0 // pred_check
    _
  $region11: #{recognizer_forward.5} parent=0 // pred_check_branch
    %81 = sbr.rel (0) target = $region13
  $region12: #{recognizer_forward.5} parent=0 // pred_region
    _
  $region13: #{recognizer_forward.5} parent=0 // pred_fallthru
    _
  // Predicated region
  $region14: #{recognizer_forward.5} parent=0 // pred_check
    _
  $region15: #{recognizer_forward.5} parent=0 // pred_check_branch
    %83 = sbr.rel (0) target = $region17
  $region16: #{recognizer_forward.5} parent=0 // pred_region
    _
  $region17: #{recognizer_forward.5} parent=0 // pred_fallthru
    _
  // Predicated region
  $region18: #{recognizer_forward.5} parent=0 // pred_check
    _
  $region19: #{recognizer_forward.5} parent=0 // pred_check_branch
    %85 = sbr.rel (0) target = $region21
  $region20: #{recognizer_forward.5} parent=0 // pred_region
    _
  $region21: #{recognizer_forward.5} parent=0 // pred_fallthru
    _
  // Predicated region
  $region22: #{recognizer_forward.5} parent=0 // pred_check
    _
  $region23: #{recognizer_forward.5} parent=0 // pred_check_branch
    %87 = sbr.rel (0) target = $region25
  $region24: #{recognizer_forward.5} parent=0 // pred_region
    _
  $region25: #{recognizer_forward.5} parent=0 // pred_fallthru
    _
  // Predicated region
  $region26: #{recognizer_forward.5} parent=0 // pred_check
    _
  $region27: #{recognizer_forward.5} parent=0 // pred_check_branch
    %89 = sbr.rel (0) target = $region29
  $region28: #{recognizer_forward.5} parent=0 // pred_region
    _
  $region29: #{recognizer_forward.5} parent=0 // pred_fallthru
    _
  // Predicated region
  $region30: #{recognizer_forward.5} parent=0 // pred_check
    _
  $region31: #{recognizer_forward.5} parent=0 // pred_check_branch
    %91 = sbr.rel (0) target = $region33
  $region32: #{recognizer_forward.5} parent=0 // pred_region
    _
  $region33: #{recognizer_forward.5} parent=0 // pred_fallthru
    _
  // Predicated region
  $region34: #{recognizer_forward.5} parent=0 // pred_check
    _
  $region35: #{recognizer_forward.5} parent=0 // pred_check_branch
    %93 = sbr.rel (0) target = $region37
  $region36: #{recognizer_forward.5} parent=0 // pred_region
    _
  $region37: #{recognizer_forward.5} parent=0 // pred_fallthru
    _
  // Predicated region
  $region38: #{recognizer_forward.5} parent=0 // pred_check
    _
  $region39: #{recognizer_forward.5} parent=0 // pred_check_branch
    %95 = sbr.rel (0) target = $region41
  $region40: #{recognizer_forward.5} parent=0 // pred_region
    _
  $region41: #{recognizer_forward.5} parent=0 // pred_fallthru
    _
  // Predicated region
  $region42: #{recognizer_forward.5} parent=0 // pred_check
    _
  $region43: #{recognizer_forward.5} parent=0 // pred_check_branch
    %97 = sbr.rel (0) target = $region45
  $region44: #{recognizer_forward.5} parent=0 // pred_region
    _
  $region45: #{recognizer_forward.5} parent=0 // pred_fallthru
    _
  // Predicated region
  $region46: #{recognizer_forward.5} parent=0 // pred_check
    _
  $region47: #{recognizer_forward.5} parent=0 // pred_check_branch
    %99 = sbr.rel (0) target = $region49
  $region48: #{recognizer_forward.5} parent=0 // pred_region
    _
  $region49: #{recognizer_forward.5} parent=0 // pred_fallthru
    _
  // Predicated region
  $region50: #{recognizer_forward.5} parent=0 // pred_check
    _
  $region51: #{recognizer_forward.5} parent=0 // pred_check_branch
    %101 = sbr.rel (0) target = $region53
  $region52: #{recognizer_forward.5} parent=0 // pred_region
    _
  $region53: #{recognizer_forward.5} parent=0 // pred_fallthru
    _
  // Predicated region
  $region54: #{recognizer_forward.5} parent=0 // pred_check
    _
  $region55: #{recognizer_forward.5} parent=0 // pred_check_branch
    %103 = sbr.rel (0) target = $region57
  $region56: #{recognizer_forward.5} parent=0 // pred_region
    _
  $region57: #{recognizer_forward.5} parent=0 // pred_fallthru
    _
  // Predicated region
  $region58: #{recognizer_forward.5} parent=0 // pred_check
    _
  $region59: #{recognizer_forward.5} parent=0 // pred_check_branch
    %105 = sbr.rel (0) target = $region61
  $region60: #{recognizer_forward.5} parent=0 // pred_region
    _
  $region61: #{recognizer_forward.5} parent=0 // pred_fallthru
    _
  // Predicated region
  $region62: #{recognizer_forward.5} parent=0 // pred_check
    _
  $region63: #{recognizer_forward.5} parent=0 // pred_check_branch
    %107 = sbr.rel (0) target = $region65
  $region64: #{recognizer_forward.5} parent=0 // pred_region
    _
  $region65: #{recognizer_forward.5} parent=0 // pred_fallthru
    _
  // Predicated region
  $region66: #{recognizer_forward.5} parent=0 // pred_check
    _
  $region67: #{recognizer_forward.5} parent=0 // pred_check_branch
    %109 = sbr.rel (0) target = $region69
  $region68: #{recognizer_forward.5} parent=0 // pred_region
    _
  $region69: #{recognizer_forward.5} parent=0 // pred_fallthru
    _
  // Predicated region
  $region70: #{recognizer_forward.5} parent=0 // pred_check
    _
  $region71: #{recognizer_forward.5} parent=0 // pred_check_branch
    %111 = sbr.rel (0) target = $region73
  $region72: #{recognizer_forward.5} parent=0 // pred_region
    _
  $region73: #{recognizer_forward.5} parent=0 // pred_fallthru
    _
  // Predicated region
  $region74: #{recognizer_forward.5} parent=0 // pred_check
    _
  $region75: #{recognizer_forward.5} parent=0 // pred_check_branch
    %113 = sbr.rel (0) target = $region77
  $region76: #{recognizer_forward.5} parent=0 // pred_region
    _
  $region77: #{recognizer_forward.5} parent=0 // pred_fallthru
    _
  // Predicated region
  $region78: #{recognizer_forward.5} parent=0 // pred_check
    _
  $region79: #{recognizer_forward.5} parent=0 // pred_check_branch
    %115 = sbr.rel (0) target = $region81
  $region80: #{recognizer_forward.5} parent=0 // pred_region
    _
  $region81: #{recognizer_forward.5} parent=0 // pred_fallthru
    _
  // Predicated region
  $region82: #{recognizer_forward.5} parent=0 // pred_check
    _
  $region83: #{recognizer_forward.5} parent=0 // pred_check_branch
    %117 = sbr.rel (0) target = $region85
  $region84: #{recognizer_forward.5} parent=0 // pred_region
    _
  $region85: #{recognizer_forward.5} parent=0 // pred_fallthru
    _
  // Predicated region
  $region86: #{recognizer_forward.5} parent=0 // pred_check
    _
  $region87: #{recognizer_forward.5} parent=0 // pred_check_branch
    %119 = sbr.rel (0) target = $region89
  $region88: #{recognizer_forward.5} parent=0 // pred_region
    _
  $region89: #{recognizer_forward.5} parent=0 // pred_fallthru
    _
  // Predicated region
  $region90: #{recognizer_forward.5} parent=0 // pred_check
    _
  $region91: #{recognizer_forward.5} parent=0 // pred_check_branch
    %121 = sbr.rel (0) target = $region93
  $region92: #{recognizer_forward.5} parent=0 // pred_region
    _
  $region93: #{recognizer_forward.5} parent=0 // pred_fallthru
    _
  // Predicated region
  $region94: #{recognizer_forward.5} parent=0 // pred_check
    _
  $region95: #{recognizer_forward.5} parent=0 // pred_check_branch
    %123 = sbr.rel (0) target = $region97
  $region96: #{recognizer_forward.5} parent=0 // pred_region
    _
  $region97: #{recognizer_forward.5} parent=0 // pred_fallthru
    _
  // Predicated region
  $region98: #{recognizer_forward.5} parent=0 // pred_check
    _
  $region99: #{recognizer_forward.5} parent=0 // pred_check_branch
    %125 = sbr.rel (0) target = $region101
  $region100: #{recognizer_forward.5} parent=0 // pred_region
    _
  $region101: #{recognizer_forward.5} parent=0 // pred_fallthru
    _
  // Predicated region
  $region102: #{recognizer_forward.5} parent=0 // pred_check
    _
  $region103: #{recognizer_forward.5} parent=0 // pred_check_branch
    %127 = sbr.rel (0) target = $region105
  $region104: #{recognizer_forward.5} parent=0 // pred_region
    _
  $region105: #{recognizer_forward.5} parent=0 // pred_fallthru
    _
  // Predicated region
  $region106: #{recognizer_forward.5} parent=0 // pred_check
    _
  $region107: #{recognizer_forward.5} parent=0 // pred_check_branch
    %129 = sbr.rel (0) target = $region109
  $region108: #{recognizer_forward.5} parent=0 // pred_region
    _
  $region109: #{recognizer_forward.5} parent=0 // pred_fallthru
    _
  // Predicated region
  $region110: #{recognizer_forward.5} parent=0 // pred_check
    _
  $region111: #{recognizer_forward.5} parent=0 // pred_check_branch
    %131 = sbr.rel (0) target = $region113
  $region112: #{recognizer_forward.5} parent=0 // pred_region
    _
  $region113: #{recognizer_forward.5} parent=0 // pred_fallthru
    _
  // Predicated region
  $region114: #{recognizer_forward.5} parent=0 // pred_check
    _
  $region115: #{recognizer_forward.5} parent=0 // pred_check_branch
    %133 = sbr.rel (0) target = $region117
  $region116: #{recognizer_forward.5} parent=0 // pred_region
    _
  $region117: #{recognizer_forward.5} parent=0 // pred_fallthru
    _
  // Predicated region
  $region118: #{recognizer_forward.5} parent=0 // pred_check
    _
  $region119: #{recognizer_forward.5} parent=0 // pred_check_branch
    %135 = sbr.rel (0) target = $region121
  $region120: #{recognizer_forward.5} parent=0 // pred_region
    _
  $region121: #{recognizer_forward.5} parent=0 // pred_fallthru
    _
  // Predicated region
  $region122: #{recognizer_forward.5} parent=0 // pred_check
    _
  $region123: #{recognizer_forward.5} parent=0 // pred_check_branch
    %137 = sbr.rel (0) target = $region125
  $region124: #{recognizer_forward.5} parent=0 // pred_region
    _
  $region125: #{recognizer_forward.5} parent=0 // pred_fallthru
    _
  // Predicated region
  $region126: #{recognizer_forward.5} parent=0 // pred_check
    _
  $region127: #{recognizer_forward.5} parent=0 // pred_check_branch
    %139 = sbr.rel (0) target = $region129
  $region128: #{recognizer_forward.5} parent=0 // pred_region
    _
  $region129: #{recognizer_forward.5} parent=0 // pred_fallthru
    _
  // Predicated region
  $region130: #{recognizer_forward.5} parent=0 // pred_check
    _
  $region131: #{recognizer_forward.5} parent=0 // pred_check_branch
    %141 = sbr.rel (0) target = $region133
  $region132: #{recognizer_forward.5} parent=0 // pred_region
    _
  $region133: #{recognizer_forward.5} parent=0 // pred_fallthru
    _
  // Predicated region
  $region134: #{recognizer_forward.5} parent=0 // pred_check
    _
  $region135: #{recognizer_forward.5} parent=0 // pred_check_branch
    %143 = sbr.rel (0) target = $region137
  $region136: #{recognizer_forward.5} parent=0 // pred_region
    _
  $region137: #{recognizer_forward.5} parent=0 // pred_fallthru
    _
  // Predicated region
  $region138: #{recognizer_forward.5} parent=0 // pred_check
    _
  $region139: #{recognizer_forward.5} parent=0 // pred_check_branch
    %145 = sbr.rel (0) target = $region141
  $region140: #{recognizer_forward.5} parent=0 // pred_region
    _
  $region141: #{recognizer_forward.5} parent=0 // pred_fallthru
    _
  %v146 = vld [vmem:[%s3] sm:$0xff]
  %v147 = vld [vmem:[%s3 + $0x8] sm:$0x3f]
  %v148 = vld [vmem:[%s1] sm:$0xff]
  %v149 = vld [vmem:[%s1 + $0x8] sm:$0xff]
  %v150 = vld [vmem:[%s1 + $0x10] sm:$0xff]
  %v151 = vld [vmem:[%s1 + $0x18] sm:$0x3f]
  %v152 = vld [vmem:[%s1 + $0x20] sm:$0x3f]
  %v153 = vld [vmem:[%s1 + $0x28] sm:$0x3f]
  %v154 = vld [vmem:[%s7] sm:$0xff]
  %v155 = vld [vmem:[%s7 + $0x8] sm:$0xff]
  %v156 = vld [vmem:[%s7 + $0x10] sm:$0xff]
  %v157 = vld [vmem:[%s7 + $0x18] sm:$0xff]
  %v158 = vld [vmem:[%s7 + $0x20] sm:$0xff]
  %v159 = vld [vmem:[%s7 + $0x28] sm:$0xff]
  %v160 = vld [vmem:[%s7 + $0x30] sm:$0xff]
  %v161 = vld [vmem:[%s7 + $0x38] sm:$0xff]
  %v162 = vld [vmem:[%s7 + $0x40] sm:$0xff]
  %v163 = vld [vmem:[%s7 + $0x48] sm:$0xff]
  %v164 = vld [vmem:[%s7 + $0x50] sm:$0xff]
  %v165 = vld [vmem:[%s7 + $0x58] sm:$0xff]
  %v166 = vld [vmem:[%s7 + $0x60] sm:$0xff]
  %v167 = vld [vmem:[%s7 + $0x68] sm:$0xff]
  %v168 = vld [vmem:[%s7 + $0x70] sm:$0xff]
  %v169 = vld [vmem:[%s7 + $0x78] sm:$0xff]
  %v170 = vld [vmem:[%s7 + $0x80] sm:$0xff]
  %v171 = vld [vmem:[%s7 + $0x88] sm:$0xff]
  %v172 = vld [vmem:[%s7 + $0x90] sm:$0xff]
  %v173 = vld [vmem:[%s7 + $0x98] sm:$0xff]
  %v174 = vld [vmem:[%s7 + $0xa0] sm:$0xff]
  %v175 = vld [vmem:[%s7 + $0xa8] sm:$0xff]
  %v176 = vld [vmem:[%s7 + $0xb0] sm:$0xff]
  %v177 = vld [vmem:[%s7 + $0xb8] sm:$0xff]
  %v178 = vld [vmem:[%s7 + $0xc0] sm:$0xff]
  %v179 = vld [vmem:[%s7 + $0xc8] sm:$0xff]
  %v180 = vld [vmem:[%s7 + $0xd0] sm:$0xff]
  %v181 = vld [vmem:[%s7 + $0xd8] sm:$0xff]
  %v182 = vld [vmem:[%s7 + $0xe0] sm:$0xff]
  %v183 = vld [vmem:[%s7 + $0xe8] sm:$0xff]
  %v184 = vld [vmem:[%s7 + $0xf0] sm:$0xff]
  %v185 = vld [vmem:[%s7 + $0xf8] sm:$0xff]
  %v186 = vld [vmem:[%s7 + $0x100] sm:$0xff]
  %v187 = vld [vmem:[%s7 + $0x108] sm:$0xff]
  %v188 = vld [vmem:[%s7 + $0x110] sm:$0xff]
  %v189 = vld [vmem:[%s7 + $0x118] sm:$0xff]
  %v190 = vld [vmem:[%s7 + $0x120] sm:$0xff]
  %v191 = vld [vmem:[%s7 + $0x128] sm:$0xff]
  %v192 = vld [vmem:[%s9] sm:$0x1]
  %v194 = vperm.slane %v192, 0
  %vm196 = vcmask 392192
  %v198 = vsel %vm196, %v150, 0
  %v201 = vsel %vm196, %v153, 0
  %203 = vmatpush.msra.mxu0 %v169
  %204 = vmatpush.msra.mxu0 %v168
  %205 = vmatpush.msra.mxu0 %v167
  %206 = vmatpush.msra.mxu0 %v166
  %207 = vmatpush.msra.mxu0 %v165
  %208 = vmatpush.msra.mxu0 %v164
  %209 = vmatpush.msra.mxu0 %v163
  %210 = vmatpush.msra.mxu0 %v162
  %211 = vmatpush.msra.mxu0 %v161
  %212 = vmatpush.msra.mxu0 %v160
  %213 = vmatpush.msra.mxu0 %v159
  %214 = vmatpush.msra.mxu0 %v158
  %215 = vmatpush.msra.mxu0 %v157
  %216 = vmatpush.msra.mxu0 %v156
  %217 = vmatpush.msra.mxu0 %v155
  %218 = vmatpush.msra.mxu0 %v154
  %219 = vmatmul.f32.gmra.mxu0 %v148
  %v220 = vpop.f32.mrf.mxu0
  %v221 = vadd.f32 %v194, %v220
  %222 = vmatmul.f32.gmra.mxu0 %v151
  %v223 = vpop.f32.mrf.mxu0
  %v224 = vadd.f32 %v194, %v223
  %225 = vdwg.mxu0
  %226 = vmatpush.msra.mxu0 %v185
  %227 = vmatpush.msra.mxu0 %v184
  %228 = vmatpush.msra.mxu0 %v183
  %229 = vmatpush.msra.mxu0 %v182
  %230 = vmatpush.msra.mxu0 %v181
  %231 = vmatpush.msra.mxu0 %v180
  %232 = vmatpush.msra.mxu0 %v179
  %233 = vmatpush.msra.mxu0 %v178
  %234 = vmatpush.msra.mxu0 %v177
  %235 = vmatpush.msra.mxu0 %v176
  %236 = vmatpush.msra.mxu0 %v175
  %237 = vmatpush.msra.mxu0 %v174
  %238 = vmatpush.msra.mxu0 %v173
  %239 = vmatpush.msra.mxu0 %v172
  %240 = vmatpush.msra.mxu0 %v171
  %241 = vmatpush.msra.mxu0 %v170
  %242 = vmatmul.f32.gmra.mxu0 %v149
  %v243 = vpop.f32.mrf.mxu0
  %v244 = vadd.f32 %v221, %v243
  %245 = vmatmul.f32.gmra.mxu0 %v152
  %v246 = vpop.f32.mrf.mxu0
  %v247 = vadd.f32 %v224, %v246
  %248 = vdwg.mxu0
  %249 = vmatpush.msra.mxu0 0.0
  %250 = vmatpush.msra.mxu0 0.0
  %251 = vmatpush.msra.mxu0 0.0
  %252 = vmatpush.msra.mxu0 0.0
  %253 = vmatpush.msra.mxu0 0.0
  %254 = vmatpush.msra.mxu0 0.0
  %255 = vmatpush.msra.mxu0 0.0
  %256 = vmatpush.msra.mxu0 0.0
  %257 = vmatpush.msra.mxu0 0.0
  %258 = vmatpush.msra.mxu0 0.0
  %259 = vmatpush.msra.mxu0 %v191
  %260 = vmatpush.msra.mxu0 %v190
  %261 = vmatpush.msra.mxu0 %v189
  %262 = vmatpush.msra.mxu0 %v188
  %263 = vmatpush.msra.mxu0 %v187
  %264 = vmatpush.msra.mxu0 %v186
  %265 = vmatmul.f32.gmra.mxu0 %v198
  %v266 = vpop.f32.mrf.mxu0
  %v267 = vadd.f32 %v244, %v266
  %268 = vmatmul.f32.gmra.mxu0 %v201
  %v269 = vpop.f32.mrf.mxu0
  %v270 = vadd.f32 %v247, %v269
  %271 = vdwg.mxu0
  loop: start=0, step=1, limit=8
  $region142: #{recognizer_forward.5} parent=0 // loop_pre_header
    _
  $region143: #{recognizer_forward.5} parent=0 // loop_header
    %s273 = sphi 0, %s277
    %p274 = scmp.ge.s32.totalorder %s273, 8
    %v278 = vphi %v267, %v2329
    %v279 = vphi %v270, %v2330
  $region144: #{recognizer_forward.5} parent=0 // loop_header_branch
    %276 = sbr.rel (%p274) target = $region148
  $region145: #{recognizer_forward.5} parent=0 // loop_body
    %s280 = scalar_lea.vmem %s15, %s273
    %v281 = vld [vmem:[%s280] sm:$0x1]
    %s282 = scalar_lea.vmem %s17, %s273
    %v283 = vld [vmem:[%s282] sm:$0x1]
    %s284 = smul.u32 %s273, 32
    %s285 = scalar_lea.vmem %s19, %s284
    %v286 = vld [vmem:[%s285] sm:$0xff]
    %v287 = vld [vmem:[%s285 + $0x8] sm:$0xff]
    %v288 = vld [vmem:[%s285 + $0x10] sm:$0xff]
    %v289 = vld [vmem:[%s285 + $0x18] sm:$0xff]
    %s290 = scalar_lea.vmem %s21, %s273
    %v291 = vld [vmem:[%s290] sm:$0x1]
    %s292 = smul.u32 %s273, 128
    %s293 = scalar_lea.vmem %s23, %s292
    %v294 = vld [vmem:[%s293] sm:$0xff]
    %v295 = vld [vmem:[%s293 + $0x8] sm:$0xff]
    %v296 = vld [vmem:[%s293 + $0x10] sm:$0xff]
    %v297 = vld [vmem:[%s293 + $0x18] sm:$0xff]
    %v298 = vld [vmem:[%s293 + $0x20] sm:$0xff]
    %v299 = vld [vmem:[%s293 + $0x28] sm:$0xff]
    %v300 = vld [vmem:[%s293 + $0x30] sm:$0xff]
    %v301 = vld [vmem:[%s293 + $0x38] sm:$0xff]
    %v302 = vld [vmem:[%s293 + $0x40] sm:$0xff]
    %v303 = vld [vmem:[%s293 + $0x48] sm:$0xff]
    %v304 = vld [vmem:[%s293 + $0x50] sm:$0xff]
    %v305 = vld [vmem:[%s293 + $0x58] sm:$0xff]
    %v306 = vld [vmem:[%s293 + $0x60] sm:$0xff]
    %v307 = vld [vmem:[%s293 + $0x68] sm:$0xff]
    %v308 = vld [vmem:[%s293 + $0x70] sm:$0xff]
    %v309 = vld [vmem:[%s293 + $0x78] sm:$0xff]
    %s310 = scalar_lea.vmem %s25, %s273
    %v311 = vld [vmem:[%s310] sm:$0x1]
    %vm312 = vcmask 261120
    %v313 = vsel %vm312, %v278, 0.0
    %314 = vadd.xlane.f32.xlu0 %v313
    %v315 = vpop.xlane.xlu0 %314
    %vm316 = vcmask 259072
    %v317 = vsel %vm316, %v279, 0.0
    %318 = vadd.xlane.f32.xlu0 %v317
    %v319 = vpop.xlane.xlu0 %318
    %v320 = vrcp.pop 32.0
    %v321 = vmul.f32 32.0, %v320
    %v322 = vsub.f32 1.0, %v321
    %v323 = vmul.f32 %v320, %v322
    %v324 = vadd.f32 %v320, %v323
    %vm325 = vweird.f32 %v320
    %v326 = vsel %vm325, %v320, %v324
    %v327 = vmul.f32 %v315, %v326
    %v328 = vmul.f32 %v319, %v326
    %v329 = vsub.f32 %v278, %v327
    %v330 = vsub.f32 %v279, %v328
    %v331 = vmul.f32 %v329, %v329
    %v332 = vmul.f32 %v330, %v330
    %v333 = vsel %vm312, %v331, 0.0
    %334 = vadd.xlane.f32.xlu0 %v333
    %v335 = vpop.xlane.xlu0 %334
    %v336 = vsel %vm316, %v332, 0.0
    %337 = vadd.xlane.f32.xlu0 %v336
    %v338 = vpop.xlane.xlu0 %337
    %v339 = vmul.f32 %v335, %v326
    %v340 = vmul.f32 %v338, %v326
    %v341 = vadd.f32 %v339, 1e-05
    %v342 = vadd.f32 %v340, 1e-05
    %v343 = vrsqrt.pop %v341
    %v344 = vmul.f32 %v343, %v341
    %v345 = vmul.f32 %v344, %v343
    %v346 = vmul.f32 0.5, %v345
    %v347 = vsub.f32 1.5, %v346
    %v348 = vmul.f32 %v343, %v347
    %vm349 = vweird.f32 %v341
    %vm350 = vweird.f32 %v343
    %vm351 = vmor %vm349, %vm350
    %v352 = vsel %vm351, %v343, %v348
    %v353 = vrsqrt.pop %v342
    %v354 = vmul.f32 %v353, %v342
    %v355 = vmul.f32 %v354, %v353
    %v356 = vmul.f32 0.5, %v355
    %v357 = vsub.f32 1.5, %v356
    %v358 = vmul.f32 %v353, %v357
    %vm359 = vweird.f32 %v342
    %vm360 = vweird.f32 %v353
    %vm361 = vmor %vm359, %vm360
    %v362 = vsel %vm361, %v353, %v358
    %v363 = vmul.f32 %v329, %v352
    %v364 = vmul.f32 %v330, %v362
    %v366 = vperm.slane %v281, 0
    %v368 = vmul.f32 %v363, %v366
    %v369 = vmul.f32 %v364, %v366
    %v371 = vperm.slane %v283, 0
    %v373 = vadd.f32 %v368, %v371
    %v374 = vadd.f32 %v369, %v371
    %v376 = vperm.slane %v291, 0
    %v379 = vsel %vm312, %v373, 0
    %v382 = vsel %vm312, %v374, 0
    %384 = vmatpush.msra.mxu0 0.0
    %385 = vmatpush.msra.mxu0 0.0
    %386 = vmatpush.msra.mxu0 0.0
    %387 = vmatpush.msra.mxu0 0.0
    %388 = vmatpush.msra.mxu0 0.0
    %389 = vmatpush.msra.mxu0 0.0
    %390 = vmatpush.msra.mxu0 0.0
    %391 = vmatpush.msra.mxu0 0.0
    %392 = vmatpush.msra.mxu0 0.0
    %393 = vmatpush.msra.mxu0 0.0
    %394 = vmatpush.msra.mxu0 0.0
    %395 = vmatpush.msra.mxu0 0.0
    %396 = vmatpush.msra.mxu0 %v289
    %397 = vmatpush.msra.mxu0 %v288
    %398 = vmatpush.msra.mxu0 %v287
    %399 = vmatpush.msra.mxu0 %v286
    %400 = vmatmul.f32.gmra.mxu0 %v379
    %v401 = vpop.f32.mrf.mxu0
    %v402 = vadd.f32 %v376, %v401
    %403 = vmatmul.f32.gmra.mxu0 %v382
    %v404 = vpop.f32.mrf.mxu0
    %v405 = vadd.f32 %v376, %v404
    %406 = vdwg.mxu0
    %v407 = vsub.f32 0.0, %v402
    %v408 = vsub.f32 0.0, %v405
    %v409 = vmul.f32 %v407, 1.442695
    %v410 = vpow.pop %v409
    %v411 = vmul.f32 %v408, 1.442695
    %v412 = vpow.pop %v411
    %v413 = vadd.f32 %v410, 1.0
    %v414 = vadd.f32 %v412, 1.0
    %v415 = vrcp.pop %v413
    %v416 = vmul.f32 %v413, %v415
    %v417 = vsub.f32 1.0, %v416
    %v418 = vmul.f32 %v415, %v417
    %v419 = vadd.f32 %v415, %v418
    %vm420 = vweird.f32 %v413
    %vm421 = vweird.f32 %v415
    %vm422 = vmor %vm420, %vm421
    %v423 = vsel %vm422, %v415, %v419
    %v424 = vand.u32 2147483647, %v413
    %vm425 = vcmp.eq.f32.partialorder %v424, 8.507059e+37
    %v426 = vand.u32 %v413, 2147483648
    %v427 = vor.u32 1.1754944e-38, %v426
    %v428 = vsel %vm425, %v427, %v423
    %v429 = vmul.f32 1.0, %v428
    %v430 = vrcp.pop %v414
    %v431 = vmul.f32 %v414, %v430
    %v432 = vsub.f32 1.0, %v431
    %v433 = vmul.f32 %v430, %v432
    %v434 = vadd.f32 %v430, %v433
    %vm435 = vweird.f32 %v414
    %vm436 = vweird.f32 %v430
    %vm437 = vmor %vm435, %vm436
    %v438 = vsel %vm437, %v430, %v434
    %v439 = vand.u32 2147483647, %v414
    %vm440 = vcmp.eq.f32.partialorder %v439, 8.507059e+37
    %v441 = vand.u32 %v414, 2147483648
    %v442 = vor.u32 1.1754944e-38, %v441
    %v443 = vsel %vm440, %v442, %v438
    %v444 = vmul.f32 1.0, %v443
    %v445 = vmul.f32 %v402, %v429
    %v446 = vmul.f32 %v405, %v444
    %v448 = vperm.slane %v311, 0
    %450 = vmatpush.msra.mxu0 %v309
    %451 = vmatpush.msra.mxu0 %v308
    %452 = vmatpush.msra.mxu0 %v307
    %453 = vmatpush.msra.mxu0 %v306
    %454 = vmatpush.msra.mxu0 %v305
    %455 = vmatpush.msra.mxu0 %v304
    %456 = vmatpush.msra.mxu0 %v303
    %457 = vmatpush.msra.mxu0 %v302
    %458 = vmatpush.msra.mxu0 %v301
    %459 = vmatpush.msra.mxu0 %v300
    %460 = vmatpush.msra.mxu0 %v299
    %461 = vmatpush.msra.mxu0 %v298
    %462 = vmatpush.msra.mxu0 %v297
    %463 = vmatpush.msra.mxu0 %v296
    %464 = vmatpush.msra.mxu0 %v295
    %465 = vmatpush.msra.mxu0 %v294
    %466 = vmatmul.f32.gmra.mxu0 %v445
    %v467 = vpop.f32.mrf.mxu0
    %v468 = vadd.f32 %v448, %v467
    %469 = vmatmul.f32.gmra.mxu0 %v446
    %v470 = vpop.f32.mrf.mxu0
    %v471 = vadd.f32 %v448, %v470
    %472 = vdwg.mxu0
    %v473 = vmul.f32 %v468, 0.5
    %v474 = vmul.f32 %v471, 0.5
    %v475 = vadd.f32 %v278, %v473
    %v476 = vadd.f32 %v279, %v474
    %s477 = scalar_lea.vmem %s27, %s273
    %v478 = vld [vmem:[%s477] sm:$0x1]
    %s479 = scalar_lea.vmem %s29, %s273
    %v480 = vld [vmem:[%s479] sm:$0x1]
    %v481 = vsel %vm312, %v475, 0.0
    %482 = vadd.xlane.f32.xlu0 %v481
    %v483 = vpop.xlane.xlu0 %482
    %v484 = vsel %vm316, %v476, 0.0
    %485 = vadd.xlane.f32.xlu0 %v484
    %v486 = vpop.xlane.xlu0 %485
    %v487 = vmul.f32 %v483, %v326
    %v488 = vmul.f32 %v486, %v326
    %v489 = vsub.f32 %v475, %v487
    %v490 = vsub.f32 %v476, %v488
    %v491 = vmul.f32 %v489, %v489
    %v492 = vmul.f32 %v490, %v490
    %v493 = vsel %vm312, %v491, 0.0
    %494 = vadd.xlane.f32.xlu0 %v493
    %v495 = vpop.xlane.xlu0 %494
    %v496 = vsel %vm316, %v492, 0.0
    %497 = vadd.xlane.f32.xlu0 %v496
    %v498 = vpop.xlane.xlu0 %497
    %v499 = vmul.f32 %v495, %v326
    %v500 = vmul.f32 %v498, %v326
    %v501 = vadd.f32 %v499, 1e-05
    %v502 = vadd.f32 %v500, 1e-05
    %v503 = vrsqrt.pop %v501
    %v504 = vmul.f32 %v503, %v501
    %v505 = vmul.f32 %v504, %v503
    %v506 = vmul.f32 0.5, %v505
    %v507 = vsub.f32 1.5, %v506
    %v508 = vmul.f32 %v503, %v507
    %vm509 = vweird.f32 %v501
    %vm510 = vweird.f32 %v503
    %vm511 = vmor %vm509, %vm510
    %v512 = vsel %vm511, %v503, %v508
    %v513 = vrsqrt.pop %v502
    %v514 = vmul.f32 %v513, %v502
    %v515 = vmul.f32 %v514, %v513
    %v516 = vmul.f32 0.5, %v515
    %v517 = vsub.f32 1.5, %v516
    %v518 = vmul.f32 %v513, %v517
    %vm519 = vweird.f32 %v502
    %vm520 = vweird.f32 %v513
    %vm521 = vmor %vm519, %vm520
    %v522 = vsel %vm521, %v513, %v518
    %v523 = vmul.f32 %v489, %v512
    %v524 = vmul.f32 %v490, %v522
    %v526 = vperm.slane %v478, 0
    %v528 = vmul.f32 %v523, %v526
    %v529 = vmul.f32 %v524, %v526
    %v531 = vperm.slane %v480, 0
    %v533 = vadd.f32 %v528, %v531
    %v534 = vadd.f32 %v529, %v531
    %s535 = scalar_lea.vmem %s31, %s284
    %v536 = vld [vmem:[%s535] sm:$0xff]
    %v537 = vld [vmem:[%s535 + $0x8] sm:$0xff]
    %v538 = vld [vmem:[%s535 + $0x10] sm:$0xff]
    %v539 = vld [vmem:[%s535 + $0x18] sm:$0xff]
    %s540 = scalar_lea.vmem %s33, %s273
    %v541 = vld [vmem:[%s540] sm:$0x1]
    %v543 = vperm.slane %v541, 0
    %v546 = vsel %vm312, %v533, 0
    %v549 = vsel %vm312, %v534, 0
    %551 = vmatpush.msra.mxu0 0.0
    %552 = vmatpush.msra.mxu0 0.0
    %553 = vmatpush.msra.mxu0 0.0
    %554 = vmatpush.msra.mxu0 0.0
    %555 = vmatpush.msra.mxu0 0.0
    %556 = vmatpush.msra.mxu0 0.0
    %557 = vmatpush.msra.mxu0 0.0
    %558 = vmatpush.msra.mxu0 0.0
    %559 = vmatpush.msra.mxu0 0.0
    %560 = vmatpush.msra.mxu0 0.0
    %561 = vmatpush.msra.mxu0 0.0
    %562 = vmatpush.msra.mxu0 0.0
    %563 = vmatpush.msra.mxu0 %v539
    %564 = vmatpush.msra.mxu0 %v538
    %565 = vmatpush.msra.mxu0 %v537
    %566 = vmatpush.msra.mxu0 %v536
    %567 = vmatmul.f32.gmra.mxu0 %v546
    %v568 = vpop.f32.mrf.mxu0
    %v569 = vadd.f32 %v543, %v568
    %570 = vmatmul.f32.gmra.mxu0 %v549
    %v571 = vpop.f32.mrf.mxu0
    %v572 = vadd.f32 %v543, %v571
    %573 = vdwg.mxu0
    %s574 = scalar_lea.vmem %s35, %s284
    %v575 = vld [vmem:[%s574] sm:$0xff]
    %v576 = vld [vmem:[%s574 + $0x8] sm:$0xff]
    %v577 = vld [vmem:[%s574 + $0x10] sm:$0xff]
    %v578 = vld [vmem:[%s574 + $0x18] sm:$0xff]
    %581 = vrot.lane.b32.xlu0 %v569, 96
    %v582 = vpop.permute.xlu0 %581
    %583 = vrot.lane.b32.xlu0 %v572, 96
    %v584 = vpop.permute.xlu0 %583
    %vm585 = vcmask 64512
    %v586 = vsel %vm585, %v569, 0
    %v588 = vsel %vm585, %v572, 0
    %v590 = vsel %vm585, %v582, 0
    %v592 = vsel %vm585, %v584, 0
    %594 = vmatpush.xpose.msra.mxu0 0.0
    %595 = vmatpush.xpose.msra.mxu0 0.0
    %596 = vmatpush.xpose.msra.mxu0 0.0
    %597 = vmatpush.xpose.msra.mxu0 0.0
    %598 = vmatpush.xpose.msra.mxu0 0.0
    %599 = vmatpush.xpose.msra.mxu0 0.0
    %600 = vmatpush.xpose.msra.mxu0 0.0
    %601 = vmatpush.xpose.msra.mxu0 0.0
    %602 = vmatpush.xpose.msra.mxu0 0.0
    %603 = vmatpush.xpose.msra.mxu0 0.0
    %604 = vmatpush.xpose.msra.mxu0 0.0
    %605 = vmatpush.xpose.msra.mxu0 0.0
    %606 = vmatpush.xpose.msra.mxu0 0.0
    %607 = vmatpush.xpose.msra.mxu0 0.0
    %608 = vmatpush.xpose.msra.mxu0 %v592
    %609 = vmatpush.xpose.msra.mxu0 %v590
    %610 = vmatmul.f32.gmra.mxu0 %v586
    %v611 = vpop.f32.mrf.mxu0
    %v612 = vadd.f32 0.0, %v611
    %613 = vmatmul.f32.gmra.mxu0 %v588
    %v614 = vpop.f32.mrf.mxu0
    %v615 = vadd.f32 0.0, %v614
    %616 = vdwg.mxu0
    %v617 = vmul.f32 %v612, 0.35355338
    %v618 = vmul.f32 %v615, 0.35355338
    %v619 = vadd.f32 %v617, %v146
    %v620 = vadd.f32 %v618, %v147
    %vm621 = vcmask 113664
    %v622 = vsel %vm621, %v619, -inf
    %623 = vmax.xlane.f32.xlu0 %v622
    %v624 = vpop.xlane.xlu0 %623
    %vm625 = vcmask 111616
    %v626 = vsel %vm625, %v620, -inf
    %627 = vmax.xlane.f32.xlu0 %v626
    %v628 = vpop.xlane.xlu0 %627
    %v629 = vsub.f32 %v619, %v624
    %v630 = vsub.f32 %v620, %v628
    %v631 = vmul.f32 %v629, 1.442695
    %v632 = vpow.pop %v631
    %v633 = vmul.f32 %v630, 1.442695
    %v634 = vpow.pop %v633
    %v635 = vsel %vm621, %v632, 0.0
    %636 = vadd.xlane.f32.xlu0 %v635
    %v637 = vpop.xlane.xlu0 %636
    %v638 = vsel %vm625, %v634, 0.0
    %639 = vadd.xlane.f32.xlu0 %v638
    %v640 = vpop.xlane.xlu0 %639
    %v641 = vrcp.pop %v637
    %v642 = vmul.f32 %v637, %v641
    %v643 = vsub.f32 1.0, %v642
    %v644 = vmul.f32 %v641, %v643
    %v645 = vadd.f32 %v641, %v644
    %vm646 = vweird.f32 %v637
    %vm647 = vweird.f32 %v641
    %vm648 = vmor %vm646, %vm647
    %v649 = vsel %vm648, %v641, %v645
    %v650 = vand.u32 2147483647, %v637
    %vm651 = vcmp.eq.f32.partialorder %v650, 8.507059e+37
    %v652 = vand.u32 %v637, 2147483648
    %v653 = vor.u32 1.1754944e-38, %v652
    %v654 = vsel %vm651, %v653, %v649
    %v655 = vmul.f32 %v632, %v654
    %v656 = vrcp.pop %v640
    %v657 = vmul.f32 %v640, %v656
    %v658 = vsub.f32 1.0, %v657
    %v659 = vmul.f32 %v656, %v658
    %v660 = vadd.f32 %v656, %v659
    %vm661 = vweird.f32 %v640
    %vm662 = vweird.f32 %v656
    %vm663 = vmor %vm661, %vm662
    %v664 = vsel %vm663, %v656, %v660
    %v665 = vand.u32 2147483647, %v640
    %vm666 = vcmp.eq.f32.partialorder %v665, 8.507059e+37
    %v667 = vand.u32 %v640, 2147483648
    %v668 = vor.u32 1.1754944e-38, %v667
    %v669 = vsel %vm666, %v668, %v664
    %v670 = vmul.f32 %v634, %v669
    %671 = vrot.lane.b32.xlu0 %v569, 64
    %v672 = vpop.permute.xlu0 %671
    %673 = vrot.lane.b32.xlu0 %v572, 64
    %v674 = vpop.permute.xlu0 %673
    %v677 = vsel %vm621, %v655, 0
    %v680 = vsel %vm621, %v670, 0
    %vm682 = vcmask 1045504
    %v683 = vsel %vm682, %v674, 0
    %685 = vmatpush.msra.mxu0 0.0
    %686 = vmatpush.msra.mxu0 0.0
    %687 = vmatpush.msra.mxu0 0.0
    %688 = vmatpush.msra.mxu0 0.0
    %689 = vmatpush.msra.mxu0 0.0
    %690 = vmatpush.msra.mxu0 0.0
    %691 = vmatpush.msra.mxu0 0.0
    %692 = vmatpush.msra.mxu0 0.0
    %693 = vmatpush.msra.mxu0 0.0
    %694 = vmatpush.msra.mxu0 0.0
    %695 = vmatpush.msra.mxu0 0.0
    %696 = vmatpush.msra.mxu0 0.0
    %697 = vmatpush.msra.mxu0 0.0
    %698 = vmatpush.msra.mxu0 0.0
    %699 = vmatpush.msra.mxu0 %v683
    %700 = vmatpush.msra.mxu0 %v672
    %701 = vmatmul.f32.gmra.mxu0 %v677
    %v702 = vpop.f32.mrf.mxu0
    %v703 = vadd.f32 0.0, %v702
    %704 = vmatmul.f32.gmra.mxu0 %v680
    %v705 = vpop.f32.mrf.mxu0
    %v706 = vadd.f32 0.0, %v705
    %707 = vdwg.mxu0
    %708 = vrot.lane.b32.xlu0 %v569, 120
    %v709 = vpop.permute.xlu0 %708
    %710 = vrot.lane.b32.xlu0 %v572, 120
    %v711 = vpop.permute.xlu0 %710
    %712 = vrot.lane.b32.xlu0 %v569, 88
    %v713 = vpop.permute.xlu0 %712
    %714 = vrot.lane.b32.xlu0 %v572, 88
    %v715 = vpop.permute.xlu0 %714
    %v716 = vsel %vm585, %v709, 0
    %v718 = vsel %vm585, %v711, 0
    %v720 = vsel %vm585, %v713, 0
    %v722 = vsel %vm585, %v715, 0
    %724 = vmatpush.xpose.msra.mxu0 0.0
    %725 = vmatpush.xpose.msra.mxu0 0.0
    %726 = vmatpush.xpose.msra.mxu0 0.0
    %727 = vmatpush.xpose.msra.mxu0 0.0
    %728 = vmatpush.xpose.msra.mxu0 0.0
    %729 = vmatpush.xpose.msra.mxu0 0.0
    %730 = vmatpush.xpose.msra.mxu0 0.0
    %731 = vmatpush.xpose.msra.mxu0 0.0
    %732 = vmatpush.xpose.msra.mxu0 0.0
    %733 = vmatpush.xpose.msra.mxu0 0.0
    %734 = vmatpush.xpose.msra.mxu0 0.0
    %735 = vmatpush.xpose.msra.mxu0 0.0
    %736 = vmatpush.xpose.msra.mxu0 0.0
    %737 = vmatpush.xpose.msra.mxu0 0.0
    %738 = vmatpush.xpose.msra.mxu0 %v722
    %739 = vmatpush.xpose.msra.mxu0 %v720
    %740 = vmatmul.f32.gmra.mxu0 %v716
    %v741 = vpop.f32.mrf.mxu0
    %v742 = vadd.f32 0.0, %v741
    %743 = vmatmul.f32.gmra.mxu0 %v718
    %v744 = vpop.f32.mrf.mxu0
    %v745 = vadd.f32 0.0, %v744
    %746 = vdwg.mxu0
    %v747 = vmul.f32 %v742, 0.35355338
    %v748 = vmul.f32 %v745, 0.35355338
    %v749 = vadd.f32 %v747, %v146
    %v750 = vadd.f32 %v748, %v147
    %v751 = vsel %vm621, %v749, -inf
    %752 = vmax.xlane.f32.xlu0 %v751
    %v753 = vpop.xlane.xlu0 %752
    %v754 = vsel %vm625, %v750, -inf
    %755 = vmax.xlane.f32.xlu0 %v754
    %v756 = vpop.xlane.xlu0 %755
    %v757 = vsub.f32 %v749, %v753
    %v758 = vsub.f32 %v750, %v756
    %v759 = vmul.f32 %v757, 1.442695
    %v760 = vpow.pop %v759
    %v761 = vmul.f32 %v758, 1.442695
    %v762 = vpow.pop %v761
    %v763 = vsel %vm621, %v760, 0.0
    %764 = vadd.xlane.f32.xlu0 %v763
    %v765 = vpop.xlane.xlu0 %764
    %v766 = vsel %vm625, %v762, 0.0
    %767 = vadd.xlane.f32.xlu0 %v766
    %v768 = vpop.xlane.xlu0 %767
    %v769 = vrcp.pop %v765
    %v770 = vmul.f32 %v765, %v769
    %v771 = vsub.f32 1.0, %v770
    %v772 = vmul.f32 %v769, %v771
    %v773 = vadd.f32 %v769, %v772
    %vm774 = vweird.f32 %v765
    %vm775 = vweird.f32 %v769
    %vm776 = vmor %vm774, %vm775
    %v777 = vsel %vm776, %v769, %v773
    %v778 = vand.u32 2147483647, %v765
    %vm779 = vcmp.eq.f32.partialorder %v778, 8.507059e+37
    %v780 = vand.u32 %v765, 2147483648
    %v781 = vor.u32 1.1754944e-38, %v780
    %v782 = vsel %vm779, %v781, %v777
    %v783 = vmul.f32 %v760, %v782
    %v784 = vrcp.pop %v768
    %v785 = vmul.f32 %v768, %v784
    %v786 = vsub.f32 1.0, %v785
    %v787 = vmul.f32 %v784, %v786
    %v788 = vadd.f32 %v784, %v787
    %vm789 = vweird.f32 %v768
    %vm790 = vweird.f32 %v784
    %vm791 = vmor %vm789, %vm790
    %v792 = vsel %vm791, %v784, %v788
    %v793 = vand.u32 2147483647, %v768
    %vm794 = vcmp.eq.f32.partialorder %v793, 8.507059e+37
    %v795 = vand.u32 %v768, 2147483648
    %v796 = vor.u32 1.1754944e-38, %v795
    %v797 = vsel %vm794, %v796, %v792
    %v798 = vmul.f32 %v762, %v797
    %799 = vrot.lane.b32.xlu0 %v569, 56
    %v800 = vpop.permute.xlu0 %799
    %801 = vrot.lane.b32.xlu0 %v572, 56
    %v802 = vpop.permute.xlu0 %801
    %v805 = vsel %vm621, %v783, 0
    %v808 = vsel %vm621, %v798, 0
    %v810 = vsel %vm682, %v802, 0
    %812 = vmatpush.msra.mxu0 0.0
    %813 = vmatpush.msra.mxu0 0.0
    %814 = vmatpush.msra.mxu0 0.0
    %815 = vmatpush.msra.mxu0 0.0
    %816 = vmatpush.msra.mxu0 0.0
    %817 = vmatpush.msra.mxu0 0.0
    %818 = vmatpush.msra.mxu0 0.0
    %819 = vmatpush.msra.mxu0 0.0
    %820 = vmatpush.msra.mxu0 0.0
    %821 = vmatpush.msra.mxu0 0.0
    %822 = vmatpush.msra.mxu0 0.0
    %823 = vmatpush.msra.mxu0 0.0
    %824 = vmatpush.msra.mxu0 0.0
    %825 = vmatpush.msra.mxu0 0.0
    %826 = vmatpush.msra.mxu0 %v810
    %827 = vmatpush.msra.mxu0 %v800
    %828 = vmatmul.f32.gmra.mxu0 %v805
    %v829 = vpop.f32.mrf.mxu0
    %v830 = vadd.f32 0.0, %v829
    %831 = vmatmul.f32.gmra.mxu0 %v808
    %v832 = vpop.f32.mrf.mxu0
    %v833 = vadd.f32 0.0, %v832
    %834 = vdwg.mxu0
    %v836 = vsel %vm585, %v830, 0
    %v839 = vsel %vm585, %v833, 0
    %841 = vmatpush.msra.mxu0 0.0
    %842 = vmatpush.msra.mxu0 0.0
    %843 = vmatpush.msra.mxu0 0.0
    %844 = vmatpush.msra.mxu0 0.0
    %845 = vmatpush.msra.mxu0 0.0
    %846 = vmatpush.msra.mxu0 0.0
    %847 = vmatpush.msra.mxu0 0.0
    %848 = vmatpush.msra.mxu0 0.0
    %849 = vmatpush.msra.mxu0 0.0
    %850 = vmatpush.msra.mxu0 0.0
    %851 = vmatpush.msra.mxu0 0.0
    %852 = vmatpush.msra.mxu0 0.0
    %853 = vmatpush.msra.mxu0 0.0
    %854 = vmatpush.msra.mxu0 0.0
    %855 = vmatpush.msra.mxu0 0.0
    %856 = vmatpush.msra.mxu0 %v576
    %857 = vmatmul.f32.gmra.mxu0 %v836
    %v858 = vpop.f32.mrf.mxu0
    %v859 = vadd.f32 0.0, %v858
    %860 = vmatmul.f32.gmra.mxu0 %v839
    %v861 = vpop.f32.mrf.mxu0
    %v862 = vadd.f32 0.0, %v861
    %863 = vdwg.mxu0
    %v865 = vsel %vm585, %v703, 0
    %v868 = vsel %vm585, %v706, 0
    %870 = vmatpush.msra.mxu0 0.0
    %871 = vmatpush.msra.mxu0 0.0
    %872 = vmatpush.msra.mxu0 0.0
    %873 = vmatpush.msra.mxu0 0.0
    %874 = vmatpush.msra.mxu0 0.0
    %875 = vmatpush.msra.mxu0 0.0
    %876 = vmatpush.msra.mxu0 0.0
    %877 = vmatpush.msra.mxu0 0.0
    %878 = vmatpush.msra.mxu0 0.0
    %879 = vmatpush.msra.mxu0 0.0
    %880 = vmatpush.msra.mxu0 0.0
    %881 = vmatpush.msra.mxu0 0.0
    %882 = vmatpush.msra.mxu0 0.0
    %883 = vmatpush.msra.mxu0 0.0
    %884 = vmatpush.msra.mxu0 0.0
    %885 = vmatpush.msra.mxu0 %v575
    %886 = vmatmul.f32.gmra.mxu0 %v865
    %v887 = vpop.f32.mrf.mxu0
    %v888 = vadd.f32 %v859, %v887
    %889 = vmatmul.f32.gmra.mxu0 %v868
    %v890 = vpop.f32.mrf.mxu0
    %v891 = vadd.f32 %v862, %v890
    %892 = vdwg.mxu0
    %893 = vrot.lane.b32.xlu0 %v569, 112
    %v894 = vpop.permute.xlu0 %893
    %895 = vrot.lane.b32.xlu0 %v572, 112
    %v896 = vpop.permute.xlu0 %895
    %897 = vrot.lane.b32.xlu0 %v569, 80
    %v898 = vpop.permute.xlu0 %897
    %899 = vrot.lane.b32.xlu0 %v572, 80
    %v900 = vpop.permute.xlu0 %899
    %v901 = vsel %vm585, %v894, 0
    %v903 = vsel %vm585, %v896, 0
    %v905 = vsel %vm585, %v898, 0
    %v907 = vsel %vm585, %v900, 0
    %909 = vmatpush.xpose.msra.mxu0 0.0
    %910 = vmatpush.xpose.msra.mxu0 0.0
    %911 = vmatpush.xpose.msra.mxu0 0.0
    %912 = vmatpush.xpose.msra.mxu0 0.0
    %913 = vmatpush.xpose.msra.mxu0 0.0
    %914 = vmatpush.xpose.msra.mxu0 0.0
    %915 = vmatpush.xpose.msra.mxu0 0.0
    %916 = vmatpush.xpose.msra.mxu0 0.0
    %917 = vmatpush.xpose.msra.mxu0 0.0
    %918 = vmatpush.xpose.msra.mxu0 0.0
    %919 = vmatpush.xpose.msra.mxu0 0.0
    %920 = vmatpush.xpose.msra.mxu0 0.0
    %921 = vmatpush.xpose.msra.mxu0 0.0
    %922 = vmatpush.xpose.msra.mxu0 0.0
    %923 = vmatpush.xpose.msra.mxu0 %v907
    %924 = vmatpush.xpose.msra.mxu0 %v905
    %925 = vmatmul.f32.gmra.mxu0 %v901
    %v926 = vpop.f32.mrf.mxu0
    %v927 = vadd.f32 0.0, %v926
    %928 = vmatmul.f32.gmra.mxu0 %v903
    %v929 = vpop.f32.mrf.mxu0
    %v930 = vadd.f32 0.0, %v929
    %931 = vdwg.mxu0
    %v932 = vmul.f32 %v927, 0.35355338
    %v933 = vmul.f32 %v930, 0.35355338
    %v934 = vadd.f32 %v932, %v146
    %v935 = vadd.f32 %v933, %v147
    %v936 = vsel %vm621, %v934, -inf
    %937 = vmax.xlane.f32.xlu0 %v936
    %v938 = vpop.xlane.xlu0 %937
    %v939 = vsel %vm625, %v935, -inf
    %940 = vmax.xlane.f32.xlu0 %v939
    %v941 = vpop.xlane.xlu0 %940
    %v942 = vsub.f32 %v934, %v938
    %v943 = vsub.f32 %v935, %v941
    %v944 = vmul.f32 %v942, 1.442695
    %v945 = vpow.pop %v944
    %v946 = vmul.f32 %v943, 1.442695
    %v947 = vpow.pop %v946
    %v948 = vsel %vm621, %v945, 0.0
    %949 = vadd.xlane.f32.xlu0 %v948
    %v950 = vpop.xlane.xlu0 %949
    %v951 = vsel %vm625, %v947, 0.0
    %952 = vadd.xlane.f32.xlu0 %v951
    %v953 = vpop.xlane.xlu0 %952
    %v954 = vrcp.pop %v950
    %v955 = vmul.f32 %v950, %v954
    %v956 = vsub.f32 1.0, %v955
    %v957 = vmul.f32 %v954, %v956
    %v958 = vadd.f32 %v954, %v957
    %vm959 = vweird.f32 %v950
    %vm960 = vweird.f32 %v954
    %vm961 = vmor %vm959, %vm960
    %v962 = vsel %vm961, %v954, %v958
    %v963 = vand.u32 2147483647, %v950
    %vm964 = vcmp.eq.f32.partialorder %v963, 8.507059e+37
    %v965 = vand.u32 %v950, 2147483648
    %v966 = vor.u32 1.1754944e-38, %v965
    %v967 = vsel %vm964, %v966, %v962
    %v968 = vmul.f32 %v945, %v967
    %v969 = vrcp.pop %v953
    %v970 = vmul.f32 %v953, %v969
    %v971 = vsub.f32 1.0, %v970
    %v972 = vmul.f32 %v969, %v971
    %v973 = vadd.f32 %v969, %v972
    %vm974 = vweird.f32 %v953
    %vm975 = vweird.f32 %v969
    %vm976 = vmor %vm974, %vm975
    %v977 = vsel %vm976, %v969, %v973
    %v978 = vand.u32 2147483647, %v953
    %vm979 = vcmp.eq.f32.partialorder %v978, 8.507059e+37
    %v980 = vand.u32 %v953, 2147483648
    %v981 = vor.u32 1.1754944e-38, %v980
    %v982 = vsel %vm979, %v981, %v977
    %v983 = vmul.f32 %v947, %v982
    %984 = vrot.lane.b32.xlu0 %v569, 48
    %v985 = vpop.permute.xlu0 %984
    %986 = vrot.lane.b32.xlu0 %v572, 48
    %v987 = vpop.permute.xlu0 %986
    %v990 = vsel %vm621, %v968, 0
    %v993 = vsel %vm621, %v983, 0
    %v995 = vsel %vm682, %v987, 0
    %997 = vmatpush.msra.mxu0 0.0
    %998 = vmatpush.msra.mxu0 0.0
    %999 = vmatpush.msra.mxu0 0.0
    %1000 = vmatpush.msra.mxu0 0.0
    %1001 = vmatpush.msra.mxu0 0.0
    %1002 = vmatpush.msra.mxu0 0.0
    %1003 = vmatpush.msra.mxu0 0.0
    %1004 = vmatpush.msra.mxu0 0.0
    %1005 = vmatpush.msra.mxu0 0.0
    %1006 = vmatpush.msra.mxu0 0.0
    %1007 = vmatpush.msra.mxu0 0.0
    %1008 = vmatpush.msra.mxu0 0.0
    %1009 = vmatpush.msra.mxu0 0.0
    %1010 = vmatpush.msra.mxu0 0.0
    %1011 = vmatpush.msra.mxu0 %v995
    %1012 = vmatpush.msra.mxu0 %v985
    %1013 = vmatmul.f32.gmra.mxu0 %v990
    %v1014 = vpop.f32.mrf.mxu0
    %v1015 = vadd.f32 0.0, %v1014
    %1016 = vmatmul.f32.gmra.mxu0 %v993
    %v1017 = vpop.f32.mrf.mxu0
    %v1018 = vadd.f32 0.0, %v1017
    %1019 = vdwg.mxu0
    %v1021 = vsel %vm585, %v1015, 0
    %v1024 = vsel %vm585, %v1018, 0
    %1026 = vmatpush.msra.mxu0 0.0
    %1027 = vmatpush.msra.mxu0 0.0
    %1028 = vmatpush.msra.mxu0 0.0
    %1029 = vmatpush.msra.mxu0 0.0
    %1030 = vmatpush.msra.mxu0 0.0
    %1031 = vmatpush.msra.mxu0 0.0
    %1032 = vmatpush.msra.mxu0 0.0
    %1033 = vmatpush.msra.mxu0 0.0
    %1034 = vmatpush.msra.mxu0 0.0
    %1035 = vmatpush.msra.mxu0 0.0
    %1036 = vmatpush.msra.mxu0 0.0
    %1037 = vmatpush.msra.mxu0 0.0
    %1038 = vmatpush.msra.mxu0 0.0
    %1039 = vmatpush.msra.mxu0 0.0
    %1040 = vmatpush.msra.mxu0 0.0
    %1041 = vmatpush.msra.mxu0 %v577
    %1042 = vmatmul.f32.gmra.mxu0 %v1021
    %v1043 = vpop.f32.mrf.mxu0
    %v1044 = vadd.f32 0.0, %v1043
    %1045 = vmatmul.f32.gmra.mxu0 %v1024
    %v1046 = vpop.f32.mrf.mxu0
    %v1047 = vadd.f32 0.0, %v1046
    %1048 = vdwg.mxu0
    %v1049 = vadd.f32 %v888, %v1044
    %v1050 = vadd.f32 %v891, %v1047
    %1051 = vrot.lane.b32.xlu0 %v569, 104
    %v1052 = vpop.permute.xlu0 %1051
    %1053 = vrot.lane.b32.xlu0 %v572, 104
    %v1054 = vpop.permute.xlu0 %1053
    %1055 = vrot.lane.b32.xlu0 %v569, 72
    %v1056 = vpop.permute.xlu0 %1055
    %1057 = vrot.lane.b32.xlu0 %v572, 72
    %v1058 = vpop.permute.xlu0 %1057
    %v1059 = vsel %vm585, %v1052, 0
    %v1061 = vsel %vm585, %v1054, 0
    %v1063 = vsel %vm585, %v1056, 0
    %v1065 = vsel %vm585, %v1058, 0
    %1067 = vmatpush.xpose.msra.mxu0 0.0
    %1068 = vmatpush.xpose.msra.mxu0 0.0
    %1069 = vmatpush.xpose.msra.mxu0 0.0
    %1070 = vmatpush.xpose.msra.mxu0 0.0
    %1071 = vmatpush.xpose.msra.mxu0 0.0
    %1072 = vmatpush.xpose.msra.mxu0 0.0
    %1073 = vmatpush.xpose.msra.mxu0 0.0
    %1074 = vmatpush.xpose.msra.mxu0 0.0
    %1075 = vmatpush.xpose.msra.mxu0 0.0
    %1076 = vmatpush.xpose.msra.mxu0 0.0
    %1077 = vmatpush.xpose.msra.mxu0 0.0
    %1078 = vmatpush.xpose.msra.mxu0 0.0
    %1079 = vmatpush.xpose.msra.mxu0 0.0
    %1080 = vmatpush.xpose.msra.mxu0 0.0
    %1081 = vmatpush.xpose.msra.mxu0 %v1065
    %1082 = vmatpush.xpose.msra.mxu0 %v1063
    %1083 = vmatmul.f32.gmra.mxu0 %v1059
    %v1084 = vpop.f32.mrf.mxu0
    %v1085 = vadd.f32 0.0, %v1084
    %1086 = vmatmul.f32.gmra.mxu0 %v1061
    %v1087 = vpop.f32.mrf.mxu0
    %v1088 = vadd.f32 0.0, %v1087
    %1089 = vdwg.mxu0
    %v1090 = vmul.f32 %v1085, 0.35355338
    %v1091 = vmul.f32 %v1088, 0.35355338
    %v1092 = vadd.f32 %v1090, %v146
    %v1093 = vadd.f32 %v1091, %v147
    %v1094 = vsel %vm621, %v1092, -inf
    %1095 = vmax.xlane.f32.xlu0 %v1094
    %v1096 = vpop.xlane.xlu0 %1095
    %v1097 = vsel %vm625, %v1093, -inf
    %1098 = vmax.xlane.f32.xlu0 %v1097
    %v1099 = vpop.xlane.xlu0 %1098
    %v1100 = vsub.f32 %v1092, %v1096
    %v1101 = vsub.f32 %v1093, %v1099
    %v1102 = vmul.f32 %v1100, 1.442695
    %v1103 = vpow.pop %v1102
    %v1104 = vmul.f32 %v1101, 1.442695
    %v1105 = vpow.pop %v1104
    %v1106 = vsel %vm621, %v1103, 0.0
    %1107 = vadd.xlane.f32.xlu0 %v1106
    %v1108 = vpop.xlane.xlu0 %1107
    %v1109 = vsel %vm625, %v1105, 0.0
    %1110 = vadd.xlane.f32.xlu0 %v1109
    %v1111 = vpop.xlane.xlu0 %1110
    %v1112 = vrcp.pop %v1108
    %v1113 = vmul.f32 %v1108, %v1112
    %v1114 = vsub.f32 1.0, %v1113
    %v1115 = vmul.f32 %v1112, %v1114
    %v1116 = vadd.f32 %v1112, %v1115
    %vm1117 = vweird.f32 %v1108
    %vm1118 = vweird.f32 %v1112
    %vm1119 = vmor %vm1117, %vm1118
    %v1120 = vsel %vm1119, %v1112, %v1116
    %v1121 = vand.u32 2147483647, %v1108
    %vm1122 = vcmp.eq.f32.partialorder %v1121, 8.507059e+37
    %v1123 = vand.u32 %v1108, 2147483648
    %v1124 = vor.u32 1.1754944e-38, %v1123
    %v1125 = vsel %vm1122, %v1124, %v1120
    %v1126 = vmul.f32 %v1103, %v1125
    %v1127 = vrcp.pop %v1111
    %v1128 = vmul.f32 %v1111, %v1127
    %v1129 = vsub.f32 1.0, %v1128
    %v1130 = vmul.f32 %v1127, %v1129
    %v1131 = vadd.f32 %v1127, %v1130
    %vm1132 = vweird.f32 %v1111
    %vm1133 = vweird.f32 %v1127
    %vm1134 = vmor %vm1132, %vm1133
    %v1135 = vsel %vm1134, %v1127, %v1131
    %v1136 = vand.u32 2147483647, %v1111
    %vm1137 = vcmp.eq.f32.partialorder %v1136, 8.507059e+37
    %v1138 = vand.u32 %v1111, 2147483648
    %v1139 = vor.u32 1.1754944e-38, %v1138
    %v1140 = vsel %vm1137, %v1139, %v1135
    %v1141 = vmul.f32 %v1105, %v1140
    %1142 = vrot.lane.b32.xlu0 %v569, 40
    %v1143 = vpop.permute.xlu0 %1142
    %1144 = vrot.lane.b32.xlu0 %v572, 40
    %v1145 = vpop.permute.xlu0 %1144
    %v1148 = vsel %vm621, %v1126, 0
    %v1151 = vsel %vm621, %v1141, 0
    %v1153 = vsel %vm682, %v1145, 0
    %1155 = vmatpush.msra.mxu0 0.0
    %1156 = vmatpush.msra.mxu0 0.0
    %1157 = vmatpush.msra.mxu0 0.0
    %1158 = vmatpush.msra.mxu0 0.0
    %1159 = vmatpush.msra.mxu0 0.0
    %1160 = vmatpush.msra.mxu0 0.0
    %1161 = vmatpush.msra.mxu0 0.0
    %1162 = vmatpush.msra.mxu0 0.0
    %1163 = vmatpush.msra.mxu0 0.0
    %1164 = vmatpush.msra.mxu0 0.0
    %1165 = vmatpush.msra.mxu0 0.0
    %1166 = vmatpush.msra.mxu0 0.0
    %1167 = vmatpush.msra.mxu0 0.0
    %1168 = vmatpush.msra.mxu0 0.0
    %1169 = vmatpush.msra.mxu0 %v1153
    %1170 = vmatpush.msra.mxu0 %v1143
    %1171 = vmatmul.f32.gmra.mxu0 %v1148
    %v1172 = vpop.f32.mrf.mxu0
    %v1173 = vadd.f32 0.0, %v1172
    %1174 = vmatmul.f32.gmra.mxu0 %v1151
    %v1175 = vpop.f32.mrf.mxu0
    %v1176 = vadd.f32 0.0, %v1175
    %1177 = vdwg.mxu0
    %v1179 = vsel %vm585, %v1173, 0
    %v1182 = vsel %vm585, %v1176, 0
    %1184 = vmatpush.msra.mxu0 0.0
    %1185 = vmatpush.msra.mxu0 0.0
    %1186 = vmatpush.msra.mxu0 0.0
    %1187 = vmatpush.msra.mxu0 0.0
    %1188 = vmatpush.msra.mxu0 0.0
    %1189 = vmatpush.msra.mxu0 0.0
    %1190 = vmatpush.msra.mxu0 0.0
    %1191 = vmatpush.msra.mxu0 0.0
    %1192 = vmatpush.msra.mxu0 0.0
    %1193 = vmatpush.msra.mxu0 0.0
    %1194 = vmatpush.msra.mxu0 0.0
    %1195 = vmatpush.msra.mxu0 0.0
    %1196 = vmatpush.msra.mxu0 0.0
    %1197 = vmatpush.msra.mxu0 0.0
    %1198 = vmatpush.msra.mxu0 0.0
    %1199 = vmatpush.msra.mxu0 %v578
    %1200 = vmatmul.f32.gmra.mxu0 %v1179
    %v1201 = vpop.f32.mrf.mxu0
    %v1202 = vadd.f32 0.0, %v1201
    %1203 = vmatmul.f32.gmra.mxu0 %v1182
    %v1204 = vpop.f32.mrf.mxu0
    %v1205 = vadd.f32 0.0, %v1204
    %1206 = vdwg.mxu0
    %v1207 = vadd.f32 %v1049, %v1202
    %v1208 = vadd.f32 %v1050, %v1205
    %v1209 = vadd.f32 %v475, %v1207
    %v1210 = vadd.f32 %v476, %v1208
    %s1211 = scalar_lea.vmem %s37, %s273
    %v1212 = vld [vmem:[%s1211] sm:$0x1]
    %v1214 = vperm.slane %v1212, 0
    %v1216 = vadd.f32 %v1209, %v1214
    %v1217 = vadd.f32 %v1210, %v1214
    %s1218 = scalar_lea.vmem %s39, %s273
    %v1219 = vld [vmem:[%s1218] sm:$0x1]
    %s1220 = scalar_lea.vmem %s41, %s273
    %v1221 = vld [vmem:[%s1220] sm:$0x1]
    %v1222 = vsel %vm312, %v1216, 0.0
    %1223 = vadd.xlane.f32.xlu0 %v1222
    %v1224 = vpop.xlane.xlu0 %1223
    %v1225 = vsel %vm316, %v1217, 0.0
    %1226 = vadd.xlane.f32.xlu0 %v1225
    %v1227 = vpop.xlane.xlu0 %1226
    %v1228 = vmul.f32 %v1224, %v326
    %v1229 = vmul.f32 %v1227, %v326
    %v1230 = vsub.f32 %v1216, %v1228
    %v1231 = vsub.f32 %v1217, %v1229
    %v1232 = vmul.f32 %v1230, %v1230
    %v1233 = vmul.f32 %v1231, %v1231
    %v1234 = vsel %vm312, %v1232, 0.0
    %1235 = vadd.xlane.f32.xlu0 %v1234
    %v1236 = vpop.xlane.xlu0 %1235
    %v1237 = vsel %vm316, %v1233, 0.0
    %1238 = vadd.xlane.f32.xlu0 %v1237
    %v1239 = vpop.xlane.xlu0 %1238
    %v1240 = vmul.f32 %v1236, %v326
    %v1241 = vmul.f32 %v1239, %v326
    %v1242 = vadd.f32 %v1240, 1e-05
    %v1243 = vadd.f32 %v1241, 1e-05
    %v1244 = vrsqrt.pop %v1242
    %v1245 = vmul.f32 %v1244, %v1242
    %v1246 = vmul.f32 %v1245, %v1244
    %v1247 = vmul.f32 0.5, %v1246
    %v1248 = vsub.f32 1.5, %v1247
    %v1249 = vmul.f32 %v1244, %v1248
    %vm1250 = vweird.f32 %v1242
    %vm1251 = vweird.f32 %v1244
    %vm1252 = vmor %vm1250, %vm1251
    %v1253 = vsel %vm1252, %v1244, %v1249
    %v1254 = vrsqrt.pop %v1243
    %v1255 = vmul.f32 %v1254, %v1243
    %v1256 = vmul.f32 %v1255, %v1254
    %v1257 = vmul.f32 0.5, %v1256
    %v1258 = vsub.f32 1.5, %v1257
    %v1259 = vmul.f32 %v1254, %v1258
    %vm1260 = vweird.f32 %v1243
    %vm1261 = vweird.f32 %v1254
    %vm1262 = vmor %vm1260, %vm1261
    %v1263 = vsel %vm1262, %v1254, %v1259
    %v1264 = vmul.f32 %v1230, %v1253
    %v1265 = vmul.f32 %v1231, %v1263
    %v1267 = vperm.slane %v1219, 0
    %v1269 = vmul.f32 %v1264, %v1267
    %v1270 = vmul.f32 %v1265, %v1267
    %v1272 = vperm.slane %v1221, 0
    %v1274 = vadd.f32 %v1269, %v1272
    %v1275 = vadd.f32 %v1270, %v1272
    %s1276 = scalar_lea.vmem %s43, %s284
    %v1277 = vld [vmem:[%s1276] sm:$0xff]
    %v1278 = vld [vmem:[%s1276 + $0x8] sm:$0xff]
    %v1279 = vld [vmem:[%s1276 + $0x10] sm:$0xff]
    %v1280 = vld [vmem:[%s1276 + $0x18] sm:$0xff]
    %s1281 = scalar_lea.vmem %s45, %s273
    %v1282 = vld [vmem:[%s1281] sm:$0x1]
    %v1284 = vperm.slane %v1282, 0
    %v1287 = vsel %vm312, %v1274, 0
    %v1290 = vsel %vm312, %v1275, 0
    %1292 = vmatpush.msra.mxu0 0.0
    %1293 = vmatpush.msra.mxu0 0.0
    %1294 = vmatpush.msra.mxu0 0.0
    %1295 = vmatpush.msra.mxu0 0.0
    %1296 = vmatpush.msra.mxu0 0.0
    %1297 = vmatpush.msra.mxu0 0.0
    %1298 = vmatpush.msra.mxu0 0.0
    %1299 = vmatpush.msra.mxu0 0.0
    %1300 = vmatpush.msra.mxu0 0.0
    %1301 = vmatpush.msra.mxu0 0.0
    %1302 = vmatpush.msra.mxu0 0.0
    %1303 = vmatpush.msra.mxu0 0.0
    %1304 = vmatpush.msra.mxu0 %v1280
    %1305 = vmatpush.msra.mxu0 %v1279
    %1306 = vmatpush.msra.mxu0 %v1278
    %1307 = vmatpush.msra.mxu0 %v1277
    %1308 = vmatmul.f32.gmra.mxu0 %v1287
    %v1309 = vpop.f32.mrf.mxu0
    %v1310 = vadd.f32 %v1284, %v1309
    %1311 = vmatmul.f32.gmra.mxu0 %v1290
    %v1312 = vpop.f32.mrf.mxu0
    %v1313 = vadd.f32 %v1284, %v1312
    %1314 = vdwg.mxu0
    %v1315 = vsub.f32 0.0, %v1310
    %v1316 = vsub.f32 0.0, %v1313
    %v1317 = vmul.f32 %v1315, 1.442695
    %v1318 = vpow.pop %v1317
    %v1319 = vmul.f32 %v1316, 1.442695
    %v1320 = vpow.pop %v1319
    %v1321 = vadd.f32 %v1318, 1.0
    %v1322 = vadd.f32 %v1320, 1.0
    %v1323 = vrcp.pop %v1321
    %v1324 = vmul.f32 %v1321, %v1323
    %v1325 = vsub.f32 1.0, %v1324
    %v1326 = vmul.f32 %v1323, %v1325
    %v1327 = vadd.f32 %v1323, %v1326
    %vm1328 = vweird.f32 %v1321
    %vm1329 = vweird.f32 %v1323
    %vm1330 = vmor %vm1328, %vm1329
    %v1331 = vsel %vm1330, %v1323, %v1327
    %v1332 = vand.u32 2147483647, %v1321
    %vm1333 = vcmp.eq.f32.partialorder %v1332, 8.507059e+37
    %v1334 = vand.u32 %v1321, 2147483648
    %v1335 = vor.u32 1.1754944e-38, %v1334
    %v1336 = vsel %vm1333, %v1335, %v1331
    %v1337 = vmul.f32 1.0, %v1336
    %v1338 = vrcp.pop %v1322
    %v1339 = vmul.f32 %v1322, %v1338
    %v1340 = vsub.f32 1.0, %v1339
    %v1341 = vmul.f32 %v1338, %v1340
    %v1342 = vadd.f32 %v1338, %v1341
    %vm1343 = vweird.f32 %v1322
    %vm1344 = vweird.f32 %v1338
    %vm1345 = vmor %vm1343, %vm1344
    %v1346 = vsel %vm1345, %v1338, %v1342
    %v1347 = vand.u32 2147483647, %v1322
    %vm1348 = vcmp.eq.f32.partialorder %v1347, 8.507059e+37
    %v1349 = vand.u32 %v1322, 2147483648
    %v1350 = vor.u32 1.1754944e-38, %v1349
    %v1351 = vsel %vm1348, %v1350, %v1346
    %v1352 = vmul.f32 1.0, %v1351
    %1355 = vrot.lane.b32.xlu0 %v1337, 96
    %v1356 = vpop.permute.xlu0 %1355
    %1357 = vrot.lane.b32.xlu0 %v1352, 96
    %v1358 = vpop.permute.xlu0 %1357
    %v1361 = vmul.f32 %v1310, %v1356
    %v1362 = vmul.f32 %v1313, %v1358
    %s1363 = smul.u32 %s273, 24
    %s1364 = scalar_lea.vmem %s47, %s1363
    %v1365 = vld [vmem:[%s1364] sm:$0xff]
    %v1366 = vld [vmem:[%s1364 + $0x8] sm:$0xff]
    %v1367 = vld [vmem:[%s1364 + $0x10] sm:$0x1]
    %v1368 = vld [vmem:[%s5] sm:$0xff]
    %v1369 = vld [vmem:[%s5 + $0x8] sm:$0x3f]
    %v1371 = vsel %vm621, %v1368, 0
    %v1374 = vsel %vm621, %v1369, 0
    %v1377 = vsel %vm682, %v1362, 0
    %1379 = vmatpush.msra.mxu0 0.0
    %1380 = vmatpush.msra.mxu0 0.0
    %1381 = vmatpush.msra.mxu0 0.0
    %1382 = vmatpush.msra.mxu0 0.0
    %1383 = vmatpush.msra.mxu0 0.0
    %1384 = vmatpush.msra.mxu0 0.0
    %1385 = vmatpush.msra.mxu0 0.0
    %1386 = vmatpush.msra.mxu0 0.0
    %1387 = vmatpush.msra.mxu0 0.0
    %1388 = vmatpush.msra.mxu0 0.0
    %1389 = vmatpush.msra.mxu0 0.0
    %1390 = vmatpush.msra.mxu0 0.0
    %1391 = vmatpush.msra.mxu0 0.0
    %1392 = vmatpush.msra.mxu0 0.0
    %1393 = vmatpush.msra.mxu0 %v1377
    %1394 = vmatpush.msra.mxu0 %v1361
    %1395 = vmatmul.f32.gmra.mxu0 %v1371
    %v1396 = vpop.f32.mrf.mxu0
    %v1397 = vadd.f32 0.0, %v1396
    %1398 = vmatmul.f32.gmra.mxu0 %v1374
    %v1399 = vpop.f32.mrf.mxu0
    %v1400 = vadd.f32 0.0, %v1399
    %1401 = vdwg.mxu0
    %v1402 = vperm.slane %v1365, 0
    %v1403 = vmul.f32 %v1397, %v1402
    %v1404 = vmul.f32 %v1400, %v1402
    %v1405 = vadd.f32 %v1403, 0.0
    %v1406 = vadd.f32 %v1404, 0.0
    %s1407 = scalar_lea.vmem %s5, 16
    %v1408 = vld [vmem:[%s1407] sm:$0xff]
    %v1409 = vld [vmem:[%s1407 + $0x8] sm:$0x3f]
    %v1411 = vsel %vm621, %v1408, 0
    %v1414 = vsel %vm621, %v1409, 0
    %1416 = vmatpush.msra.mxu0 0.0
    %1417 = vmatpush.msra.mxu0 0.0
    %1418 = vmatpush.msra.mxu0 0.0
    %1419 = vmatpush.msra.mxu0 0.0
    %1420 = vmatpush.msra.mxu0 0.0
    %1421 = vmatpush.msra.mxu0 0.0
    %1422 = vmatpush.msra.mxu0 0.0
    %1423 = vmatpush.msra.mxu0 0.0
    %1424 = vmatpush.msra.mxu0 0.0
    %1425 = vmatpush.msra.mxu0 0.0
    %1426 = vmatpush.msra.mxu0 0.0
    %1427 = vmatpush.msra.mxu0 0.0
    %1428 = vmatpush.msra.mxu0 0.0
    %1429 = vmatpush.msra.mxu0 0.0
    %1430 = vmatpush.msra.mxu0 %v1377
    %1431 = vmatpush.msra.mxu0 %v1361
    %1432 = vmatmul.f32.gmra.mxu0 %v1411
    %v1433 = vpop.f32.mrf.mxu0
    %v1434 = vadd.f32 0.0, %v1433
    %1435 = vmatmul.f32.gmra.mxu0 %v1414
    %v1436 = vpop.f32.mrf.mxu0
    %v1437 = vadd.f32 0.0, %v1436
    %1438 = vdwg.mxu0
    %v1439 = vperm.slane %v1365, 1
    %v1440 = vmul.f32 %v1434, %v1439
    %v1441 = vmul.f32 %v1437, %v1439
    %v1442 = vadd.f32 %v1405, %v1440
    %v1443 = vadd.f32 %v1406, %v1441
    %s1444 = scalar_lea.vmem %s5, 32
    %v1445 = vld [vmem:[%s1444] sm:$0xff]
    %v1446 = vld [vmem:[%s1444 + $0x8] sm:$0x3f]
    %v1448 = vsel %vm621, %v1445, 0
    %v1451 = vsel %vm621, %v1446, 0
    %1453 = vmatpush.msra.mxu0 0.0
    %1454 = vmatpush.msra.mxu0 0.0
    %1455 = vmatpush.msra.mxu0 0.0
    %1456 = vmatpush.msra.mxu0 0.0
    %1457 = vmatpush.msra.mxu0 0.0
    %1458 = vmatpush.msra.mxu0 0.0
    %1459 = vmatpush.msra.mxu0 0.0
    %1460 = vmatpush.msra.mxu0 0.0
    %1461 = vmatpush.msra.mxu0 0.0
    %1462 = vmatpush.msra.mxu0 0.0
    %1463 = vmatpush.msra.mxu0 0.0
    %1464 = vmatpush.msra.mxu0 0.0
    %1465 = vmatpush.msra.mxu0 0.0
    %1466 = vmatpush.msra.mxu0 0.0
    %1467 = vmatpush.msra.mxu0 %v1377
    %1468 = vmatpush.msra.mxu0 %v1361
    %1469 = vmatmul.f32.gmra.mxu0 %v1448
    %v1470 = vpop.f32.mrf.mxu0
    %v1471 = vadd.f32 0.0, %v1470
    %1472 = vmatmul.f32.gmra.mxu0 %v1451
    %v1473 = vpop.f32.mrf.mxu0
    %v1474 = vadd.f32 0.0, %v1473
    %1475 = vdwg.mxu0
    %v1476 = vperm.slane %v1365, 2
    %v1477 = vmul.f32 %v1471, %v1476
    %v1478 = vmul.f32 %v1474, %v1476
    %v1479 = vadd.f32 %v1442, %v1477
    %v1480 = vadd.f32 %v1443, %v1478
    %s1481 = scalar_lea.vmem %s5, 48
    %v1482 = vld [vmem:[%s1481] sm:$0xff]
    %v1483 = vld [vmem:[%s1481 + $0x8] sm:$0x3f]
    %v1485 = vsel %vm621, %v1482, 0
    %v1488 = vsel %vm621, %v1483, 0
    %1490 = vmatpush.msra.mxu0 0.0
    %1491 = vmatpush.msra.mxu0 0.0
    %1492 = vmatpush.msra.mxu0 0.0
    %1493 = vmatpush.msra.mxu0 0.0
    %1494 = vmatpush.msra.mxu0 0.0
    %1495 = vmatpush.msra.mxu0 0.0
    %1496 = vmatpush.msra.mxu0 0.0
    %1497 = vmatpush.msra.mxu0 0.0
    %1498 = vmatpush.msra.mxu0 0.0
    %1499 = vmatpush.msra.mxu0 0.0
    %1500 = vmatpush.msra.mxu0 0.0
    %1501 = vmatpush.msra.mxu0 0.0
    %1502 = vmatpush.msra.mxu0 0.0
    %1503 = vmatpush.msra.mxu0 0.0
    %1504 = vmatpush.msra.mxu0 %v1377
    %1505 = vmatpush.msra.mxu0 %v1361
    %1506 = vmatmul.f32.gmra.mxu0 %v1485
    %v1507 = vpop.f32.mrf.mxu0
    %v1508 = vadd.f32 0.0, %v1507
    %1509 = vmatmul.f32.gmra.mxu0 %v1488
    %v1510 = vpop.f32.mrf.mxu0
    %v1511 = vadd.f32 0.0, %v1510
    %1512 = vdwg.mxu0
    %v1513 = vperm.slane %v1365, 3
    %v1514 = vmul.f32 %v1508, %v1513
    %v1515 = vmul.f32 %v1511, %v1513
    %v1516 = vadd.f32 %v1479, %v1514
    %v1517 = vadd.f32 %v1480, %v1515
    %s1518 = scalar_lea.vmem %s5, 64
    %v1519 = vld [vmem:[%s1518] sm:$0xff]
    %v1520 = vld [vmem:[%s1518 + $0x8] sm:$0x3f]
    %v1522 = vsel %vm621, %v1519, 0
    %v1525 = vsel %vm621, %v1520, 0
    %1527 = vmatpush.msra.mxu0 0.0
    %1528 = vmatpush.msra.mxu0 0.0
    %1529 = vmatpush.msra.mxu0 0.0
    %1530 = vmatpush.msra.mxu0 0.0
    %1531 = vmatpush.msra.mxu0 0.0
    %1532 = vmatpush.msra.mxu0 0.0
    %1533 = vmatpush.msra.mxu0 0.0
    %1534 = vmatpush.msra.mxu0 0.0
    %1535 = vmatpush.msra.mxu0 0.0
    %1536 = vmatpush.msra.mxu0 0.0
    %1537 = vmatpush.msra.mxu0 0.0
    %1538 = vmatpush.msra.mxu0 0.0
    %1539 = vmatpush.msra.mxu0 0.0
    %1540 = vmatpush.msra.mxu0 0.0
    %1541 = vmatpush.msra.mxu0 %v1377
    %1542 = vmatpush.msra.mxu0 %v1361
    %1543 = vmatmul.f32.gmra.mxu0 %v1522
    %v1544 = vpop.f32.mrf.mxu0
    %v1545 = vadd.f32 0.0, %v1544
    %1546 = vmatmul.f32.gmra.mxu0 %v1525
    %v1547 = vpop.f32.mrf.mxu0
    %v1548 = vadd.f32 0.0, %v1547
    %1549 = vdwg.mxu0
    %v1550 = vperm.slane %v1365, 4
    %v1551 = vmul.f32 %v1545, %v1550
    %v1552 = vmul.f32 %v1548, %v1550
    %v1553 = vadd.f32 %v1516, %v1551
    %v1554 = vadd.f32 %v1517, %v1552
    %s1555 = scalar_lea.vmem %s5, 80
    %v1556 = vld [vmem:[%s1555] sm:$0xff]
    %v1557 = vld [vmem:[%s1555 + $0x8] sm:$0x3f]
    %v1559 = vsel %vm621, %v1556, 0
    %v1562 = vsel %vm621, %v1557, 0
    %1564 = vmatpush.msra.mxu0 0.0
    %1565 = vmatpush.msra.mxu0 0.0
    %1566 = vmatpush.msra.mxu0 0.0
    %1567 = vmatpush.msra.mxu0 0.0
    %1568 = vmatpush.msra.mxu0 0.0
    %1569 = vmatpush.msra.mxu0 0.0
    %1570 = vmatpush.msra.mxu0 0.0
    %1571 = vmatpush.msra.mxu0 0.0
    %1572 = vmatpush.msra.mxu0 0.0
    %1573 = vmatpush.msra.mxu0 0.0
    %1574 = vmatpush.msra.mxu0 0.0
    %1575 = vmatpush.msra.mxu0 0.0
    %1576 = vmatpush.msra.mxu0 0.0
    %1577 = vmatpush.msra.mxu0 0.0
    %1578 = vmatpush.msra.mxu0 %v1377
    %1579 = vmatpush.msra.mxu0 %v1361
    %1580 = vmatmul.f32.gmra.mxu0 %v1559
    %v1581 = vpop.f32.mrf.mxu0
    %v1582 = vadd.f32 0.0, %v1581
    %1583 = vmatmul.f32.gmra.mxu0 %v1562
    %v1584 = vpop.f32.mrf.mxu0
    %v1585 = vadd.f32 0.0, %v1584
    %1586 = vdwg.mxu0
    %v1587 = vperm.slane %v1365, 5
    %v1588 = vmul.f32 %v1582, %v1587
    %v1589 = vmul.f32 %v1585, %v1587
    %v1590 = vadd.f32 %v1553, %v1588
    %v1591 = vadd.f32 %v1554, %v1589
    %s1592 = scalar_lea.vmem %s5, 96
    %v1593 = vld [vmem:[%s1592] sm:$0xff]
    %v1594 = vld [vmem:[%s1592 + $0x8] sm:$0x3f]
    %v1596 = vsel %vm621, %v1593, 0
    %v1599 = vsel %vm621, %v1594, 0
    %1601 = vmatpush.msra.mxu0 0.0
    %1602 = vmatpush.msra.mxu0 0.0
    %1603 = vmatpush.msra.mxu0 0.0
    %1604 = vmatpush.msra.mxu0 0.0
    %1605 = vmatpush.msra.mxu0 0.0
    %1606 = vmatpush.msra.mxu0 0.0
    %1607 = vmatpush.msra.mxu0 0.0
    %1608 = vmatpush.msra.mxu0 0.0
    %1609 = vmatpush.msra.mxu0 0.0
    %1610 = vmatpush.msra.mxu0 0.0
    %1611 = vmatpush.msra.mxu0 0.0
    %1612 = vmatpush.msra.mxu0 0.0
    %1613 = vmatpush.msra.mxu0 0.0
    %1614 = vmatpush.msra.mxu0 0.0
    %1615 = vmatpush.msra.mxu0 %v1377
    %1616 = vmatpush.msra.mxu0 %v1361
    %1617 = vmatmul.f32.gmra.mxu0 %v1596
    %v1618 = vpop.f32.mrf.mxu0
    %v1619 = vadd.f32 0.0, %v1618
    %1620 = vmatmul.f32.gmra.mxu0 %v1599
    %v1621 = vpop.f32.mrf.mxu0
    %v1622 = vadd.f32 0.0, %v1621
    %1623 = vdwg.mxu0
    %v1624 = vperm.slane %v1365, 6
    %v1625 = vmul.f32 %v1619, %v1624
    %v1626 = vmul.f32 %v1622, %v1624
    %v1627 = vadd.f32 %v1590, %v1625
    %v1628 = vadd.f32 %v1591, %v1626
    %s1629 = scalar_lea.vmem %s5, 112
    %v1630 = vld [vmem:[%s1629] sm:$0xff]
    %v1631 = vld [vmem:[%s1629 + $0x8] sm:$0x3f]
    %v1633 = vsel %vm621, %v1630, 0
    %v1636 = vsel %vm621, %v1631, 0
    %1638 = vmatpush.msra.mxu0 0.0
    %1639 = vmatpush.msra.mxu0 0.0
    %1640 = vmatpush.msra.mxu0 0.0
    %1641 = vmatpush.msra.mxu0 0.0
    %1642 = vmatpush.msra.mxu0 0.0
    %1643 = vmatpush.msra.mxu0 0.0
    %1644 = vmatpush.msra.mxu0 0.0
    %1645 = vmatpush.msra.mxu0 0.0
    %1646 = vmatpush.msra.mxu0 0.0
    %1647 = vmatpush.msra.mxu0 0.0
    %1648 = vmatpush.msra.mxu0 0.0
    %1649 = vmatpush.msra.mxu0 0.0
    %1650 = vmatpush.msra.mxu0 0.0
    %1651 = vmatpush.msra.mxu0 0.0
    %1652 = vmatpush.msra.mxu0 %v1377
    %1653 = vmatpush.msra.mxu0 %v1361
    %1654 = vmatmul.f32.gmra.mxu0 %v1633
    %v1655 = vpop.f32.mrf.mxu0
    %v1656 = vadd.f32 0.0, %v1655
    %1657 = vmatmul.f32.gmra.mxu0 %v1636
    %v1658 = vpop.f32.mrf.mxu0
    %v1659 = vadd.f32 0.0, %v1658
    %1660 = vdwg.mxu0
    %v1661 = vperm.slane %v1365, 7
    %v1662 = vmul.f32 %v1656, %v1661
    %v1663 = vmul.f32 %v1659, %v1661
    %v1664 = vadd.f32 %v1627, %v1662
    %v1665 = vadd.f32 %v1628, %v1663
    %s1666 = scalar_lea.vmem %s5, 128
    %v1667 = vld [vmem:[%s1666] sm:$0xff]
    %v1668 = vld [vmem:[%s1666 + $0x8] sm:$0x3f]
    %v1670 = vsel %vm621, %v1667, 0
    %v1673 = vsel %vm621, %v1668, 0
    %1675 = vmatpush.msra.mxu0 0.0
    %1676 = vmatpush.msra.mxu0 0.0
    %1677 = vmatpush.msra.mxu0 0.0
    %1678 = vmatpush.msra.mxu0 0.0
    %1679 = vmatpush.msra.mxu0 0.0
    %1680 = vmatpush.msra.mxu0 0.0
    %1681 = vmatpush.msra.mxu0 0.0
    %1682 = vmatpush.msra.mxu0 0.0
    %1683 = vmatpush.msra.mxu0 0.0
    %1684 = vmatpush.msra.mxu0 0.0
    %1685 = vmatpush.msra.mxu0 0.0
    %1686 = vmatpush.msra.mxu0 0.0
    %1687 = vmatpush.msra.mxu0 0.0
    %1688 = vmatpush.msra.mxu0 0.0
    %1689 = vmatpush.msra.mxu0 %v1377
    %1690 = vmatpush.msra.mxu0 %v1361
    %1691 = vmatmul.f32.gmra.mxu0 %v1670
    %v1692 = vpop.f32.mrf.mxu0
    %v1693 = vadd.f32 0.0, %v1692
    %1694 = vmatmul.f32.gmra.mxu0 %v1673
    %v1695 = vpop.f32.mrf.mxu0
    %v1696 = vadd.f32 0.0, %v1695
    %1697 = vdwg.mxu0
    %v1698 = vperm.slane %v1366, 0
    %v1699 = vmul.f32 %v1693, %v1698
    %v1700 = vmul.f32 %v1696, %v1698
    %v1701 = vadd.f32 %v1664, %v1699
    %v1702 = vadd.f32 %v1665, %v1700
    %s1703 = scalar_lea.vmem %s5, 144
    %v1704 = vld [vmem:[%s1703] sm:$0xff]
    %v1705 = vld [vmem:[%s1703 + $0x8] sm:$0x3f]
    %v1707 = vsel %vm621, %v1704, 0
    %v1710 = vsel %vm621, %v1705, 0
    %1712 = vmatpush.msra.mxu0 0.0
    %1713 = vmatpush.msra.mxu0 0.0
    %1714 = vmatpush.msra.mxu0 0.0
    %1715 = vmatpush.msra.mxu0 0.0
    %1716 = vmatpush.msra.mxu0 0.0
    %1717 = vmatpush.msra.mxu0 0.0
    %1718 = vmatpush.msra.mxu0 0.0
    %1719 = vmatpush.msra.mxu0 0.0
    %1720 = vmatpush.msra.mxu0 0.0
    %1721 = vmatpush.msra.mxu0 0.0
    %1722 = vmatpush.msra.mxu0 0.0
    %1723 = vmatpush.msra.mxu0 0.0
    %1724 = vmatpush.msra.mxu0 0.0
    %1725 = vmatpush.msra.mxu0 0.0
    %1726 = vmatpush.msra.mxu0 %v1377
    %1727 = vmatpush.msra.mxu0 %v1361
    %1728 = vmatmul.f32.gmra.mxu0 %v1707
    %v1729 = vpop.f32.mrf.mxu0
    %v1730 = vadd.f32 0.0, %v1729
    %1731 = vmatmul.f32.gmra.mxu0 %v1710
    %v1732 = vpop.f32.mrf.mxu0
    %v1733 = vadd.f32 0.0, %v1732
    %1734 = vdwg.mxu0
    %v1735 = vperm.slane %v1366, 1
    %v1736 = vmul.f32 %v1730, %v1735
    %v1737 = vmul.f32 %v1733, %v1735
    %v1738 = vadd.f32 %v1701, %v1736
    %v1739 = vadd.f32 %v1702, %v1737
    %s1740 = scalar_lea.vmem %s5, 160
    %v1741 = vld [vmem:[%s1740] sm:$0xff]
    %v1742 = vld [vmem:[%s1740 + $0x8] sm:$0x3f]
    %v1744 = vsel %vm621, %v1741, 0
    %v1747 = vsel %vm621, %v1742, 0
    %1749 = vmatpush.msra.mxu0 0.0
    %1750 = vmatpush.msra.mxu0 0.0
    %1751 = vmatpush.msra.mxu0 0.0
    %1752 = vmatpush.msra.mxu0 0.0
    %1753 = vmatpush.msra.mxu0 0.0
    %1754 = vmatpush.msra.mxu0 0.0
    %1755 = vmatpush.msra.mxu0 0.0
    %1756 = vmatpush.msra.mxu0 0.0
    %1757 = vmatpush.msra.mxu0 0.0
    %1758 = vmatpush.msra.mxu0 0.0
    %1759 = vmatpush.msra.mxu0 0.0
    %1760 = vmatpush.msra.mxu0 0.0
    %1761 = vmatpush.msra.mxu0 0.0
    %1762 = vmatpush.msra.mxu0 0.0
    %1763 = vmatpush.msra.mxu0 %v1377
    %1764 = vmatpush.msra.mxu0 %v1361
    %1765 = vmatmul.f32.gmra.mxu0 %v1744
    %v1766 = vpop.f32.mrf.mxu0
    %v1767 = vadd.f32 0.0, %v1766
    %1768 = vmatmul.f32.gmra.mxu0 %v1747
    %v1769 = vpop.f32.mrf.mxu0
    %v1770 = vadd.f32 0.0, %v1769
    %1771 = vdwg.mxu0
    %v1772 = vperm.slane %v1366, 2
    %v1773 = vmul.f32 %v1767, %v1772
    %v1774 = vmul.f32 %v1770, %v1772
    %v1775 = vadd.f32 %v1738, %v1773
    %v1776 = vadd.f32 %v1739, %v1774
    %s1777 = scalar_lea.vmem %s5, 176
    %v1778 = vld [vmem:[%s1777] sm:$0xff]
    %v1779 = vld [vmem:[%s1777 + $0x8] sm:$0x3f]
    %v1781 = vsel %vm621, %v1778, 0
    %v1784 = vsel %vm621, %v1779, 0
    %1786 = vmatpush.msra.mxu0 0.0
    %1787 = vmatpush.msra.mxu0 0.0
    %1788 = vmatpush.msra.mxu0 0.0
    %1789 = vmatpush.msra.mxu0 0.0
    %1790 = vmatpush.msra.mxu0 0.0
    %1791 = vmatpush.msra.mxu0 0.0
    %1792 = vmatpush.msra.mxu0 0.0
    %1793 = vmatpush.msra.mxu0 0.0
    %1794 = vmatpush.msra.mxu0 0.0
    %1795 = vmatpush.msra.mxu0 0.0
    %1796 = vmatpush.msra.mxu0 0.0
    %1797 = vmatpush.msra.mxu0 0.0
    %1798 = vmatpush.msra.mxu0 0.0
    %1799 = vmatpush.msra.mxu0 0.0
    %1800 = vmatpush.msra.mxu0 %v1377
    %1801 = vmatpush.msra.mxu0 %v1361
    %1802 = vmatmul.f32.gmra.mxu0 %v1781
    %v1803 = vpop.f32.mrf.mxu0
    %v1804 = vadd.f32 0.0, %v1803
    %1805 = vmatmul.f32.gmra.mxu0 %v1784
    %v1806 = vpop.f32.mrf.mxu0
    %v1807 = vadd.f32 0.0, %v1806
    %1808 = vdwg.mxu0
    %v1809 = vperm.slane %v1366, 3
    %v1810 = vmul.f32 %v1804, %v1809
    %v1811 = vmul.f32 %v1807, %v1809
    %v1812 = vadd.f32 %v1775, %v1810
    %v1813 = vadd.f32 %v1776, %v1811
    %s1814 = scalar_lea.vmem %s5, 192
    %v1815 = vld [vmem:[%s1814] sm:$0xff]
    %v1816 = vld [vmem:[%s1814 + $0x8] sm:$0x3f]
    %v1818 = vsel %vm621, %v1815, 0
    %v1821 = vsel %vm621, %v1816, 0
    %1823 = vmatpush.msra.mxu0 0.0
    %1824 = vmatpush.msra.mxu0 0.0
    %1825 = vmatpush.msra.mxu0 0.0
    %1826 = vmatpush.msra.mxu0 0.0
    %1827 = vmatpush.msra.mxu0 0.0
    %1828 = vmatpush.msra.mxu0 0.0
    %1829 = vmatpush.msra.mxu0 0.0
    %1830 = vmatpush.msra.mxu0 0.0
    %1831 = vmatpush.msra.mxu0 0.0
    %1832 = vmatpush.msra.mxu0 0.0
    %1833 = vmatpush.msra.mxu0 0.0
    %1834 = vmatpush.msra.mxu0 0.0
    %1835 = vmatpush.msra.mxu0 0.0
    %1836 = vmatpush.msra.mxu0 0.0
    %1837 = vmatpush.msra.mxu0 %v1377
    %1838 = vmatpush.msra.mxu0 %v1361
    %1839 = vmatmul.f32.gmra.mxu0 %v1818
    %v1840 = vpop.f32.mrf.mxu0
    %v1841 = vadd.f32 0.0, %v1840
    %1842 = vmatmul.f32.gmra.mxu0 %v1821
    %v1843 = vpop.f32.mrf.mxu0
    %v1844 = vadd.f32 0.0, %v1843
    %1845 = vdwg.mxu0
    %v1846 = vperm.slane %v1366, 4
    %v1847 = vmul.f32 %v1841, %v1846
    %v1848 = vmul.f32 %v1844, %v1846
    %v1849 = vadd.f32 %v1812, %v1847
    %v1850 = vadd.f32 %v1813, %v1848
    %s1851 = scalar_lea.vmem %s5, 208
    %v1852 = vld [vmem:[%s1851] sm:$0xff]
    %v1853 = vld [vmem:[%s1851 + $0x8] sm:$0x3f]
    %v1855 = vsel %vm621, %v1852, 0
    %v1858 = vsel %vm621, %v1853, 0
    %1860 = vmatpush.msra.mxu0 0.0
    %1861 = vmatpush.msra.mxu0 0.0
    %1862 = vmatpush.msra.mxu0 0.0
    %1863 = vmatpush.msra.mxu0 0.0
    %1864 = vmatpush.msra.mxu0 0.0
    %1865 = vmatpush.msra.mxu0 0.0
    %1866 = vmatpush.msra.mxu0 0.0
    %1867 = vmatpush.msra.mxu0 0.0
    %1868 = vmatpush.msra.mxu0 0.0
    %1869 = vmatpush.msra.mxu0 0.0
    %1870 = vmatpush.msra.mxu0 0.0
    %1871 = vmatpush.msra.mxu0 0.0
    %1872 = vmatpush.msra.mxu0 0.0
    %1873 = vmatpush.msra.mxu0 0.0
    %1874 = vmatpush.msra.mxu0 %v1377
    %1875 = vmatpush.msra.mxu0 %v1361
    %1876 = vmatmul.f32.gmra.mxu0 %v1855
    %v1877 = vpop.f32.mrf.mxu0
    %v1878 = vadd.f32 0.0, %v1877
    %1879 = vmatmul.f32.gmra.mxu0 %v1858
    %v1880 = vpop.f32.mrf.mxu0
    %v1881 = vadd.f32 0.0, %v1880
    %1882 = vdwg.mxu0
    %v1883 = vperm.slane %v1366, 5
    %v1884 = vmul.f32 %v1878, %v1883
    %v1885 = vmul.f32 %v1881, %v1883
    %v1886 = vadd.f32 %v1849, %v1884
    %v1887 = vadd.f32 %v1850, %v1885
    %s1888 = scalar_lea.vmem %s5, 224
    %v1889 = vld [vmem:[%s1888] sm:$0xff]
    %v1890 = vld [vmem:[%s1888 + $0x8] sm:$0x3f]
    %v1892 = vsel %vm621, %v1889, 0
    %v1895 = vsel %vm621, %v1890, 0
    %1897 = vmatpush.msra.mxu0 0.0
    %1898 = vmatpush.msra.mxu0 0.0
    %1899 = vmatpush.msra.mxu0 0.0
    %1900 = vmatpush.msra.mxu0 0.0
    %1901 = vmatpush.msra.mxu0 0.0
    %1902 = vmatpush.msra.mxu0 0.0
    %1903 = vmatpush.msra.mxu0 0.0
    %1904 = vmatpush.msra.mxu0 0.0
    %1905 = vmatpush.msra.mxu0 0.0
    %1906 = vmatpush.msra.mxu0 0.0
    %1907 = vmatpush.msra.mxu0 0.0
    %1908 = vmatpush.msra.mxu0 0.0
    %1909 = vmatpush.msra.mxu0 0.0
    %1910 = vmatpush.msra.mxu0 0.0
    %1911 = vmatpush.msra.mxu0 %v1377
    %1912 = vmatpush.msra.mxu0 %v1361
    %1913 = vmatmul.f32.gmra.mxu0 %v1892
    %v1914 = vpop.f32.mrf.mxu0
    %v1915 = vadd.f32 0.0, %v1914
    %1916 = vmatmul.f32.gmra.mxu0 %v1895
    %v1917 = vpop.f32.mrf.mxu0
    %v1918 = vadd.f32 0.0, %v1917
    %1919 = vdwg.mxu0
    %v1920 = vperm.slane %v1366, 6
    %v1921 = vmul.f32 %v1915, %v1920
    %v1922 = vmul.f32 %v1918, %v1920
    %v1923 = vadd.f32 %v1886, %v1921
    %v1924 = vadd.f32 %v1887, %v1922
    %s1925 = scalar_lea.vmem %s5, 240
    %v1926 = vld [vmem:[%s1925] sm:$0xff]
    %v1927 = vld [vmem:[%s1925 + $0x8] sm:$0x3f]
    %v1929 = vsel %vm621, %v1926, 0
    %v1932 = vsel %vm621, %v1927, 0
    %1934 = vmatpush.msra.mxu0 0.0
    %1935 = vmatpush.msra.mxu0 0.0
    %1936 = vmatpush.msra.mxu0 0.0
    %1937 = vmatpush.msra.mxu0 0.0
    %1938 = vmatpush.msra.mxu0 0.0
    %1939 = vmatpush.msra.mxu0 0.0
    %1940 = vmatpush.msra.mxu0 0.0
    %1941 = vmatpush.msra.mxu0 0.0
    %1942 = vmatpush.msra.mxu0 0.0
    %1943 = vmatpush.msra.mxu0 0.0
    %1944 = vmatpush.msra.mxu0 0.0
    %1945 = vmatpush.msra.mxu0 0.0
    %1946 = vmatpush.msra.mxu0 0.0
    %1947 = vmatpush.msra.mxu0 0.0
    %1948 = vmatpush.msra.mxu0 %v1377
    %1949 = vmatpush.msra.mxu0 %v1361
    %1950 = vmatmul.f32.gmra.mxu0 %v1929
    %v1951 = vpop.f32.mrf.mxu0
    %v1952 = vadd.f32 0.0, %v1951
    %1953 = vmatmul.f32.gmra.mxu0 %v1932
    %v1954 = vpop.f32.mrf.mxu0
    %v1955 = vadd.f32 0.0, %v1954
    %1956 = vdwg.mxu0
    %v1957 = vperm.slane %v1366, 7
    %v1958 = vmul.f32 %v1952, %v1957
    %v1959 = vmul.f32 %v1955, %v1957
    %v1960 = vadd.f32 %v1923, %v1958
    %v1961 = vadd.f32 %v1924, %v1959
    %s1962 = scalar_lea.vmem %s5, 256
    %v1963 = vld [vmem:[%s1962] sm:$0xff]
    %v1964 = vld [vmem:[%s1962 + $0x8] sm:$0x3f]
    %v1966 = vsel %vm621, %v1963, 0
    %v1969 = vsel %vm621, %v1964, 0
    %1971 = vmatpush.msra.mxu0 0.0
    %1972 = vmatpush.msra.mxu0 0.0
    %1973 = vmatpush.msra.mxu0 0.0
    %1974 = vmatpush.msra.mxu0 0.0
    %1975 = vmatpush.msra.mxu0 0.0
    %1976 = vmatpush.msra.mxu0 0.0
    %1977 = vmatpush.msra.mxu0 0.0
    %1978 = vmatpush.msra.mxu0 0.0
    %1979 = vmatpush.msra.mxu0 0.0
    %1980 = vmatpush.msra.mxu0 0.0
    %1981 = vmatpush.msra.mxu0 0.0
    %1982 = vmatpush.msra.mxu0 0.0
    %1983 = vmatpush.msra.mxu0 0.0
    %1984 = vmatpush.msra.mxu0 0.0
    %1985 = vmatpush.msra.mxu0 %v1377
    %1986 = vmatpush.msra.mxu0 %v1361
    %1987 = vmatmul.f32.gmra.mxu0 %v1966
    %v1988 = vpop.f32.mrf.mxu0
    %v1989 = vadd.f32 0.0, %v1988
    %1990 = vmatmul.f32.gmra.mxu0 %v1969
    %v1991 = vpop.f32.mrf.mxu0
    %v1992 = vadd.f32 0.0, %v1991
    %1993 = vdwg.mxu0
    %v1994 = vperm.slane %v1367, 0
    %v1995 = vmul.f32 %v1989, %v1994
    %v1996 = vmul.f32 %v1992, %v1994
    %v1997 = vadd.f32 %v1960, %v1995
    %v1998 = vadd.f32 %v1961, %v1996
    %s1999 = scalar_lea.vmem %s49, %s273
    %v2000 = vld [vmem:[%s1999] sm:$0x1]
    %v2002 = vperm.slane %v2000, 0
    %v2004 = vadd.f32 %v1997, %v2002
    %v2005 = vadd.f32 %v1998, %v2002
    %v2006 = vsub.f32 0.0, %v2004
    %v2007 = vsub.f32 0.0, %v2005
    %v2008 = vmul.f32 %v2006, 1.442695
    %v2009 = vpow.pop %v2008
    %v2010 = vmul.f32 %v2007, 1.442695
    %v2011 = vpow.pop %v2010
    %v2012 = vadd.f32 %v2009, 1.0
    %v2013 = vadd.f32 %v2011, 1.0
    %v2014 = vrcp.pop %v2012
    %v2015 = vmul.f32 %v2012, %v2014
    %v2016 = vsub.f32 1.0, %v2015
    %v2017 = vmul.f32 %v2014, %v2016
    %v2018 = vadd.f32 %v2014, %v2017
    %vm2019 = vweird.f32 %v2012
    %vm2020 = vweird.f32 %v2014
    %vm2021 = vmor %vm2019, %vm2020
    %v2022 = vsel %vm2021, %v2014, %v2018
    %v2023 = vand.u32 2147483647, %v2012
    %vm2024 = vcmp.eq.f32.partialorder %v2023, 8.507059e+37
    %v2025 = vand.u32 %v2012, 2147483648
    %v2026 = vor.u32 1.1754944e-38, %v2025
    %v2027 = vsel %vm2024, %v2026, %v2022
    %v2028 = vmul.f32 1.0, %v2027
    %v2029 = vrcp.pop %v2013
    %v2030 = vmul.f32 %v2013, %v2029
    %v2031 = vsub.f32 1.0, %v2030
    %v2032 = vmul.f32 %v2029, %v2031
    %v2033 = vadd.f32 %v2029, %v2032
    %vm2034 = vweird.f32 %v2013
    %vm2035 = vweird.f32 %v2029
    %vm2036 = vmor %vm2034, %vm2035
    %v2037 = vsel %vm2036, %v2029, %v2033
    %v2038 = vand.u32 2147483647, %v2013
    %vm2039 = vcmp.eq.f32.partialorder %v2038, 8.507059e+37
    %v2040 = vand.u32 %v2013, 2147483648
    %v2041 = vor.u32 1.1754944e-38, %v2040
    %v2042 = vsel %vm2039, %v2041, %v2037
    %v2043 = vmul.f32 1.0, %v2042
    %v2044 = vmul.f32 %v2004, %v2028
    %v2045 = vmul.f32 %v2005, %v2043
    %s2046 = scalar_lea.vmem %s51, %s284
    %v2047 = vld [vmem:[%s2046] sm:$0xff]
    %v2048 = vld [vmem:[%s2046 + $0x8] sm:$0xff]
    %v2049 = vld [vmem:[%s2046 + $0x10] sm:$0xff]
    %v2050 = vld [vmem:[%s2046 + $0x18] sm:$0xff]
    %s2051 = scalar_lea.vmem %s53, %s273
    %v2052 = vld [vmem:[%s2051] sm:$0x1]
    %v2054 = vperm.slane %v2052, 0
    %v2057 = vsel %vm312, %v2044, 0
    %v2060 = vsel %vm312, %v2045, 0
    %2062 = vmatpush.msra.mxu0 0.0
    %2063 = vmatpush.msra.mxu0 0.0
    %2064 = vmatpush.msra.mxu0 0.0
    %2065 = vmatpush.msra.mxu0 0.0
    %2066 = vmatpush.msra.mxu0 0.0
    %2067 = vmatpush.msra.mxu0 0.0
    %2068 = vmatpush.msra.mxu0 0.0
    %2069 = vmatpush.msra.mxu0 0.0
    %2070 = vmatpush.msra.mxu0 0.0
    %2071 = vmatpush.msra.mxu0 0.0
    %2072 = vmatpush.msra.mxu0 0.0
    %2073 = vmatpush.msra.mxu0 0.0
    %2074 = vmatpush.msra.mxu0 %v2050
    %2075 = vmatpush.msra.mxu0 %v2049
    %2076 = vmatpush.msra.mxu0 %v2048
    %2077 = vmatpush.msra.mxu0 %v2047
    %2078 = vmatmul.f32.gmra.mxu0 %v2057
    %v2079 = vpop.f32.mrf.mxu0
    %v2080 = vadd.f32 %v2054, %v2079
    %2081 = vmatmul.f32.gmra.mxu0 %v2060
    %v2082 = vpop.f32.mrf.mxu0
    %v2083 = vadd.f32 %v2054, %v2082
    %2084 = vdwg.mxu0
    %v2085 = vadd.f32 %v1216, %v2080
    %v2086 = vadd.f32 %v1217, %v2083
    %s2087 = scalar_lea.vmem %s55, %s273
    %v2088 = vld [vmem:[%s2087] sm:$0x1]
    %s2089 = scalar_lea.vmem %s57, %s273
    %v2090 = vld [vmem:[%s2089] sm:$0x1]
    %s2091 = scalar_lea.vmem %s59, %s284
    %v2092 = vld [vmem:[%s2091] sm:$0xff]
    %v2093 = vld [vmem:[%s2091 + $0x8] sm:$0xff]
    %v2094 = vld [vmem:[%s2091 + $0x10] sm:$0xff]
    %v2095 = vld [vmem:[%s2091 + $0x18] sm:$0xff]
    %s2096 = scalar_lea.vmem %s61, %s273
    %v2097 = vld [vmem:[%s2096] sm:$0x1]
    %s2098 = scalar_lea.vmem %s63, %s292
    %v2099 = vld [vmem:[%s2098] sm:$0xff]
    %v2100 = vld [vmem:[%s2098 + $0x8] sm:$0xff]
    %v2101 = vld [vmem:[%s2098 + $0x10] sm:$0xff]
    %v2102 = vld [vmem:[%s2098 + $0x18] sm:$0xff]
    %v2103 = vld [vmem:[%s2098 + $0x20] sm:$0xff]
    %v2104 = vld [vmem:[%s2098 + $0x28] sm:$0xff]
    %v2105 = vld [vmem:[%s2098 + $0x30] sm:$0xff]
    %v2106 = vld [vmem:[%s2098 + $0x38] sm:$0xff]
    %v2107 = vld [vmem:[%s2098 + $0x40] sm:$0xff]
    %v2108 = vld [vmem:[%s2098 + $0x48] sm:$0xff]
    %v2109 = vld [vmem:[%s2098 + $0x50] sm:$0xff]
    %v2110 = vld [vmem:[%s2098 + $0x58] sm:$0xff]
    %v2111 = vld [vmem:[%s2098 + $0x60] sm:$0xff]
    %v2112 = vld [vmem:[%s2098 + $0x68] sm:$0xff]
    %v2113 = vld [vmem:[%s2098 + $0x70] sm:$0xff]
    %v2114 = vld [vmem:[%s2098 + $0x78] sm:$0xff]
    %s2115 = scalar_lea.vmem %s65, %s273
    %v2116 = vld [vmem:[%s2115] sm:$0x1]
    %v2117 = vsel %vm312, %v2085, 0.0
    %2118 = vadd.xlane.f32.xlu0 %v2117
    %v2119 = vpop.xlane.xlu0 %2118
    %v2120 = vsel %vm316, %v2086, 0.0
    %2121 = vadd.xlane.f32.xlu0 %v2120
    %v2122 = vpop.xlane.xlu0 %2121
    %v2123 = vmul.f32 %v2119, %v326
    %v2124 = vmul.f32 %v2122, %v326
    %v2125 = vsub.f32 %v2085, %v2123
    %v2126 = vsub.f32 %v2086, %v2124
    %v2127 = vmul.f32 %v2125, %v2125
    %v2128 = vmul.f32 %v2126, %v2126
    %v2129 = vsel %vm312, %v2127, 0.0
    %2130 = vadd.xlane.f32.xlu0 %v2129
    %v2131 = vpop.xlane.xlu0 %2130
    %v2132 = vsel %vm316, %v2128, 0.0
    %2133 = vadd.xlane.f32.xlu0 %v2132
    %v2134 = vpop.xlane.xlu0 %2133
    %v2135 = vmul.f32 %v2131, %v326
    %v2136 = vmul.f32 %v2134, %v326
    %v2137 = vadd.f32 %v2135, 1e-05
    %v2138 = vadd.f32 %v2136, 1e-05
    %v2139 = vrsqrt.pop %v2137
    %v2140 = vmul.f32 %v2139, %v2137
    %v2141 = vmul.f32 %v2140, %v2139
    %v2142 = vmul.f32 0.5, %v2141
    %v2143 = vsub.f32 1.5, %v2142
    %v2144 = vmul.f32 %v2139, %v2143
    %vm2145 = vweird.f32 %v2137
    %vm2146 = vweird.f32 %v2139
    %vm2147 = vmor %vm2145, %vm2146
    %v2148 = vsel %vm2147, %v2139, %v2144
    %v2149 = vrsqrt.pop %v2138
    %v2150 = vmul.f32 %v2149, %v2138
    %v2151 = vmul.f32 %v2150, %v2149
    %v2152 = vmul.f32 0.5, %v2151
    %v2153 = vsub.f32 1.5, %v2152
    %v2154 = vmul.f32 %v2149, %v2153
    %vm2155 = vweird.f32 %v2138
    %vm2156 = vweird.f32 %v2149
    %vm2157 = vmor %vm2155, %vm2156
    %v2158 = vsel %vm2157, %v2149, %v2154
    %v2159 = vmul.f32 %v2125, %v2148
    %v2160 = vmul.f32 %v2126, %v2158
    %v2162 = vperm.slane %v2088, 0
    %v2164 = vmul.f32 %v2159, %v2162
    %v2165 = vmul.f32 %v2160, %v2162
    %v2167 = vperm.slane %v2090, 0
    %v2169 = vadd.f32 %v2164, %v2167
    %v2170 = vadd.f32 %v2165, %v2167
    %v2172 = vperm.slane %v2097, 0
    %v2175 = vsel %vm312, %v2169, 0
    %v2178 = vsel %vm312, %v2170, 0
    %2180 = vmatpush.msra.mxu0 0.0
    %2181 = vmatpush.msra.mxu0 0.0
    %2182 = vmatpush.msra.mxu0 0.0
    %2183 = vmatpush.msra.mxu0 0.0
    %2184 = vmatpush.msra.mxu0 0.0
    %2185 = vmatpush.msra.mxu0 0.0
    %2186 = vmatpush.msra.mxu0 0.0
    %2187 = vmatpush.msra.mxu0 0.0
    %2188 = vmatpush.msra.mxu0 0.0
    %2189 = vmatpush.msra.mxu0 0.0
    %2190 = vmatpush.msra.mxu0 0.0
    %2191 = vmatpush.msra.mxu0 0.0
    %2192 = vmatpush.msra.mxu0 %v2095
    %2193 = vmatpush.msra.mxu0 %v2094
    %2194 = vmatpush.msra.mxu0 %v2093
    %2195 = vmatpush.msra.mxu0 %v2092
    %2196 = vmatmul.f32.gmra.mxu0 %v2175
    %v2197 = vpop.f32.mrf.mxu0
    %v2198 = vadd.f32 %v2172, %v2197
    %2199 = vmatmul.f32.gmra.mxu0 %v2178
    %v2200 = vpop.f32.mrf.mxu0
    %v2201 = vadd.f32 %v2172, %v2200
    %2202 = vdwg.mxu0
    %v2203 = vsub.f32 0.0, %v2198
    %v2204 = vsub.f32 0.0, %v2201
    %v2205 = vmul.f32 %v2203, 1.442695
    %v2206 = vpow.pop %v2205
    %v2207 = vmul.f32 %v2204, 1.442695
    %v2208 = vpow.pop %v2207
    %v2209 = vadd.f32 %v2206, 1.0
    %v2210 = vadd.f32 %v2208, 1.0
    %v2211 = vrcp.pop %v2209
    %v2212 = vmul.f32 %v2209, %v2211
    %v2213 = vsub.f32 1.0, %v2212
    %v2214 = vmul.f32 %v2211, %v2213
    %v2215 = vadd.f32 %v2211, %v2214
    %vm2216 = vweird.f32 %v2209
    %vm2217 = vweird.f32 %v2211
    %vm2218 = vmor %vm2216, %vm2217
    %v2219 = vsel %vm2218, %v2211, %v2215
    %v2220 = vand.u32 2147483647, %v2209
    %vm2221 = vcmp.eq.f32.partialorder %v2220, 8.507059e+37
    %v2222 = vand.u32 %v2209, 2147483648
    %v2223 = vor.u32 1.1754944e-38, %v2222
    %v2224 = vsel %vm2221, %v2223, %v2219
    %v2225 = vmul.f32 1.0, %v2224
    %v2226 = vrcp.pop %v2210
    %v2227 = vmul.f32 %v2210, %v2226
    %v2228 = vsub.f32 1.0, %v2227
    %v2229 = vmul.f32 %v2226, %v2228
    %v2230 = vadd.f32 %v2226, %v2229
    %vm2231 = vweird.f32 %v2210
    %vm2232 = vweird.f32 %v2226
    %vm2233 = vmor %vm2231, %vm2232
    %v2234 = vsel %vm2233, %v2226, %v2230
    %v2235 = vand.u32 2147483647, %v2210
    %vm2236 = vcmp.eq.f32.partialorder %v2235, 8.507059e+37
    %v2237 = vand.u32 %v2210, 2147483648
    %v2238 = vor.u32 1.1754944e-38, %v2237
    %v2239 = vsel %vm2236, %v2238, %v2234
    %v2240 = vmul.f32 1.0, %v2239
    %v2241 = vmul.f32 %v2198, %v2225
    %v2242 = vmul.f32 %v2201, %v2240
    %v2244 = vperm.slane %v2116, 0
    %2246 = vmatpush.msra.mxu0 %v2114
    %2247 = vmatpush.msra.mxu0 %v2113
    %2248 = vmatpush.msra.mxu0 %v2112
    %2249 = vmatpush.msra.mxu0 %v2111
    %2250 = vmatpush.msra.mxu0 %v2110
    %2251 = vmatpush.msra.mxu0 %v2109
    %2252 = vmatpush.msra.mxu0 %v2108
    %2253 = vmatpush.msra.mxu0 %v2107
    %2254 = vmatpush.msra.mxu0 %v2106
    %2255 = vmatpush.msra.mxu0 %v2105
    %2256 = vmatpush.msra.mxu0 %v2104
    %2257 = vmatpush.msra.mxu0 %v2103
    %2258 = vmatpush.msra.mxu0 %v2102
    %2259 = vmatpush.msra.mxu0 %v2101
    %2260 = vmatpush.msra.mxu0 %v2100
    %2261 = vmatpush.msra.mxu0 %v2099
    %2262 = vmatmul.f32.gmra.mxu0 %v2241
    %v2263 = vpop.f32.mrf.mxu0
    %v2264 = vadd.f32 %v2244, %v2263
    %2265 = vmatmul.f32.gmra.mxu0 %v2242
    %v2266 = vpop.f32.mrf.mxu0
    %v2267 = vadd.f32 %v2244, %v2266
    %2268 = vdwg.mxu0
    %v2269 = vmul.f32 %v2264, 0.5
    %v2270 = vmul.f32 %v2267, 0.5
    %v2271 = vadd.f32 %v2085, %v2269
    %v2272 = vadd.f32 %v2086, %v2270
    %s2273 = scalar_lea.vmem %s67, %s273
    %v2274 = vld [vmem:[%s2273] sm:$0x1]
    %s2275 = scalar_lea.vmem %s69, %s273
    %v2276 = vld [vmem:[%s2275] sm:$0x1]
    %v2277 = vsel %vm312, %v2271, 0.0
    %2278 = vadd.xlane.f32.xlu0 %v2277
    %v2279 = vpop.xlane.xlu0 %2278
    %v2280 = vsel %vm316, %v2272, 0.0
    %2281 = vadd.xlane.f32.xlu0 %v2280
    %v2282 = vpop.xlane.xlu0 %2281
    %v2283 = vmul.f32 %v2279, %v326
    %v2284 = vmul.f32 %v2282, %v326
    %v2285 = vsub.f32 %v2271, %v2283
    %v2286 = vsub.f32 %v2272, %v2284
    %v2287 = vmul.f32 %v2285, %v2285
    %v2288 = vmul.f32 %v2286, %v2286
    %v2289 = vsel %vm312, %v2287, 0.0
    %2290 = vadd.xlane.f32.xlu0 %v2289
    %v2291 = vpop.xlane.xlu0 %2290
    %v2292 = vsel %vm316, %v2288, 0.0
    %2293 = vadd.xlane.f32.xlu0 %v2292
    %v2294 = vpop.xlane.xlu0 %2293
    %v2295 = vmul.f32 %v2291, %v326
    %v2296 = vmul.f32 %v2294, %v326
    %v2297 = vadd.f32 %v2295, 1e-05
    %v2298 = vadd.f32 %v2296, 1e-05
    %v2299 = vrsqrt.pop %v2297
    %v2300 = vmul.f32 %v2299, %v2297
    %v2301 = vmul.f32 %v2300, %v2299
    %v2302 = vmul.f32 0.5, %v2301
    %v2303 = vsub.f32 1.5, %v2302
    %v2304 = vmul.f32 %v2299, %v2303
    %vm2305 = vweird.f32 %v2297
    %vm2306 = vweird.f32 %v2299
    %vm2307 = vmor %vm2305, %vm2306
    %v2308 = vsel %vm2307, %v2299, %v2304
    %v2309 = vrsqrt.pop %v2298
    %v2310 = vmul.f32 %v2309, %v2298
    %v2311 = vmul.f32 %v2310, %v2309
    %v2312 = vmul.f32 0.5, %v2311
    %v2313 = vsub.f32 1.5, %v2312
    %v2314 = vmul.f32 %v2309, %v2313
    %vm2315 = vweird.f32 %v2298
    %vm2316 = vweird.f32 %v2309
    %vm2317 = vmor %vm2315, %vm2316
    %v2318 = vsel %vm2317, %v2309, %v2314
    %v2319 = vmul.f32 %v2285, %v2308
    %v2320 = vmul.f32 %v2286, %v2318
    %v2322 = vperm.slane %v2274, 0
    %v2324 = vmul.f32 %v2319, %v2322
    %v2325 = vmul.f32 %v2320, %v2322
    %v2327 = vperm.slane %v2276, 0
    %v2329 = vadd.f32 %v2324, %v2327
    %v2330 = vadd.f32 %v2325, %v2327
  $region146: #{recognizer_forward.5} parent=0 // loop_footer
    %s277 = sadd.s32 1, %s273
  $region147: #{recognizer_forward.5} parent=0 // loop_footer_branch
    %272 = sbr.rel target = $region143
  $region148: #{recognizer_forward.5} parent=0 // loop_exit
    _
  %v2331 = vld [vmem:[%s11] sm:$0xff]
  %v2332 = vld [vmem:[%s11 + $0x8] sm:$0xff]
  %v2333 = vld [vmem:[%s11 + $0x10] sm:$0xff]
  %v2334 = vld [vmem:[%s11 + $0x18] sm:$0xff]
  %v2335 = vld [vmem:[%s13] sm:$0x1]
  %v2337 = vperm.slane %v2335, 0
  %vm2339 = vcmask 261120
  %v2341 = vsel %vm2339, %v278, 0
  %v2344 = vsel %vm2339, %v279, 0
  %2346 = vmatpush.msra.mxu0 0.0
  %2347 = vmatpush.msra.mxu0 0.0
  %2348 = vmatpush.msra.mxu0 0.0
  %2349 = vmatpush.msra.mxu0 0.0
  %2350 = vmatpush.msra.mxu0 0.0
  %2351 = vmatpush.msra.mxu0 0.0
  %2352 = vmatpush.msra.mxu0 0.0
  %2353 = vmatpush.msra.mxu0 0.0
  %2354 = vmatpush.msra.mxu0 0.0
  %2355 = vmatpush.msra.mxu0 0.0
  %2356 = vmatpush.msra.mxu0 0.0
  %2357 = vmatpush.msra.mxu0 0.0
  %2358 = vmatpush.msra.mxu0 %v2334
  %2359 = vmatpush.msra.mxu0 %v2333
  %2360 = vmatpush.msra.mxu0 %v2332
  %2361 = vmatpush.msra.mxu0 %v2331
  %2362 = vmatmul.f32.gmra.mxu0 %v2341
  %v2363 = vpop.f32.mrf.mxu0
  %v2364 = vadd.f32 %v2337, %v2363
  %2365 = vmatmul.f32.gmra.mxu0 %v2344
  %v2366 = vpop.f32.mrf.mxu0
  %v2367 = vadd.f32 %v2337, %v2366
  %2368 = vdwg.mxu0
  %2369 = vmax.xlane.f32.xlu0 %v2364
  %v2370 = vpop.xlane.xlu0 %2369
  %vm2371 = vcmask 1045504
  %v2372 = vsel %vm2371, %v2367, -inf
  %2373 = vmax.xlane.f32.xlu0 %v2372
  %v2374 = vpop.xlane.xlu0 %2373
  %v2375 = vsub.f32 %v2364, %v2370
  %v2376 = vsub.f32 %v2367, %v2374
  %v2377 = vmul.f32 %v2375, 1.442695
  %v2378 = vpow.pop %v2377
  %v2379 = vmul.f32 %v2376, 1.442695
  %v2380 = vpow.pop %v2379
  %2381 = vadd.xlane.f32.xlu0 %v2378
  %v2382 = vpop.xlane.xlu0 %2381
  %v2383 = vsel %vm2371, %v2380, 0.0
  %2384 = vadd.xlane.f32.xlu0 %v2383
  %v2385 = vpop.xlane.xlu0 %2384
  %v2386 = vrcp.pop %v2382
  %v2387 = vmul.f32 %v2382, %v2386
  %v2388 = vsub.f32 1.0, %v2387
  %v2389 = vmul.f32 %v2386, %v2388
  %v2390 = vadd.f32 %v2386, %v2389
  %vm2391 = vweird.f32 %v2382
  %vm2392 = vweird.f32 %v2386
  %vm2393 = vmor %vm2391, %vm2392
  %v2394 = vsel %vm2393, %v2386, %v2390
  %v2395 = vand.u32 2147483647, %v2382
  %vm2396 = vcmp.eq.f32.partialorder %v2395, 8.507059e+37
  %v2397 = vand.u32 %v2382, 2147483648
  %v2398 = vor.u32 1.1754944e-38, %v2397
  %v2399 = vsel %vm2396, %v2398, %v2394
  %v2400 = vmul.f32 %v2378, %v2399
  %v2401 = vrcp.pop %v2385
  %v2402 = vmul.f32 %v2385, %v2401
  %v2403 = vsub.f32 1.0, %v2402
  %v2404 = vmul.f32 %v2401, %v2403
  %v2405 = vadd.f32 %v2401, %v2404
  %vm2406 = vweird.f32 %v2385
  %vm2407 = vweird.f32 %v2401
  %vm2408 = vmor %vm2406, %vm2407
  %v2409 = vsel %vm2408, %v2401, %v2405
  %v2410 = vand.u32 2147483647, %v2385
  %vm2411 = vcmp.eq.f32.partialorder %v2410, 8.507059e+37
  %v2412 = vand.u32 %v2385, 2147483648
  %v2413 = vor.u32 1.1754944e-38, %v2412
  %v2414 = vsel %vm2411, %v2413, %v2409
  %v2415 = vmul.f32 %v2380, %v2414
  %2416 = vst [vmem:[%s71] sm:$0xff] %v2400
  %2417 = vst [vmem:[%s71 + $0x8] sm:$0x3f] %v2415
  // Predicated region
  $region149: #{recognizer_forward.5} parent=0 // pred_check
    _
  $region150: #{recognizer_forward.5} parent=0 // pred_check_branch
    %2419 = sbr.rel (0) target = $region152
  $region151: #{recognizer_forward.5} parent=0 // pred_region
    _
  $region152: #{recognizer_forward.5} parent=0 // pred_fallthru
    _
  // Predicated region
  $region153: #{recognizer_forward.5} parent=0 // pred_check
    _
  $region154: #{recognizer_forward.5} parent=0 // pred_check_branch
    %2421 = sbr.rel (0) target = $region156
  $region155: #{recognizer_forward.5} parent=0 // pred_region
    _
  $region156: #{recognizer_forward.5} parent=0 // pred_fallthru
    _

</llo_original>
